<compile_context>
chip_gen: v7x
topology: tpu7x:2x2x1
jax: 0.10.0
libtpu: 0.0.40
codegen_flags: <defaults>
</compile_context>

<pallas_src>
import functools

import jax
import jax.numpy as jnp
from jax.experimental import pallas as pl
from jax.experimental.pallas import tpu as pltpu


def attention_kernel(xq_ref, xkv_ref, wq_ref, wk_ref, wv_ref, wp_ref, bp_ref,
                     o_ref, q_scr, ctx_scr, m_scr, l_scr, acc_scr,
                     *, d_head, num_heads, kv_len, kv_tile, mask_tail):
    # Grid: (batch, q_tile, kv_tile).  The output block index depends only on
    # (batch, q_tile), so the online-softmax scratch accumulates across the
    # kv axis and the output is written once at the last kv step.
    ki = pl.program_id(2)
    n_kv = pl.num_programs(2)

    # First kv tile of this (batch, q tile): project Q for all heads at once
    # (scale already folded into Wq) and reset the softmax statistics.
    @pl.when(ki == 0)
    def _():
        q_scr[...] = jnp.dot(xq_ref[...], wq_ref[...],
                             preferred_element_type=jnp.float32
                             ).astype(jnp.bfloat16)              # (tq, C)
        m_scr[...] = jnp.full_like(m_scr, -jnp.inf)
        l_scr[...] = jnp.zeros_like(l_scr)
        acc_scr[...] = jnp.zeros_like(acc_scr)

    # Project this KV tile for ALL heads with two full-width matmuls
    # (contraction C, output width C) -- done once per kv tile, not per head.
    k_all = jnp.dot(xkv_ref[...], wk_ref[...],
                    preferred_element_type=jnp.float32).astype(jnp.bfloat16)
    v_all = jnp.dot(xkv_ref[...], wv_ref[...],
                    preferred_element_type=jnp.float32).astype(jnp.bfloat16)

    if mask_tail:
        key_pos = ki * kv_tile + jax.lax.broadcasted_iota(
            jnp.int32, (1, kv_tile), 1)                          # (1, tk)
        key_valid = key_pos < kv_len

    # Per-head flash update (static unroll over heads; all stats in f32).
    for h in range(num_heads):
        lo = h * d_head
        hi = lo + d_head
        q_h = q_scr[:, lo:hi]                                    # (tq, d) bf16
        k_h = k_all[:, lo:hi]                                    # (tk, d) bf16
        v_h = v_all[:, lo:hi]                                    # (tk, d) bf16

        s = jax.lax.dot_general(q_h, k_h, (((1,), (1,)), ((), ())),
                                preferred_element_type=jnp.float32)  # (tq, tk)
        if mask_tail:
            s = jnp.where(key_valid, s, jnp.float32(-1e30))

        m_prev = m_scr[h]                                        # (tq, 1)
        m_new = jnp.maximum(m_prev, jnp.max(s, axis=-1, keepdims=True))
        alpha = jnp.exp(m_prev - m_new)
        p = jnp.exp(s - m_new)
        l_scr[h] = alpha * l_scr[h] + jnp.sum(p, axis=-1, keepdims=True)
        acc_scr[h] = alpha * acc_scr[h] + jnp.dot(
            p.astype(jnp.bfloat16), v_h, preferred_element_type=jnp.float32)
        m_scr[h] = m_new

    # Last kv tile: normalize each head, concatenate head outputs into a
    # (tq, C) bf16 context buffer, and run ONE full-width output projection.
    @pl.when(ki == n_kv - 1)
    def _():
        for h in range(num_heads):
            lo = h * d_head
            o_h = acc_scr[h] * pl.reciprocal(l_scr[h], approx=False)
            ctx_scr[:, lo:lo + d_head] = o_h.astype(jnp.bfloat16)
        o_ref[...] = (jnp.dot(ctx_scr[...], wp_ref[...],
                              preferred_element_type=jnp.float32)
                      + bp_ref[...]).astype(o_ref.dtype)


def _vmem_bytes_estimate(tq, tk, C, H, d, out_itemsize):
    bf, f32, lane = 2, 4, 128
    stream = 2 * (tq * C * bf + tk * C * bf) + 2 * tq * C * out_itemsize
    weights = 4 * C * C * bf + max(C, lane) * f32            # resident
    stats = 2 * H * tq * lane * f32                          # m, l (lane-padded)
    acc = H * tq * max(d, lane) * f32
    scratch = 2 * tq * C * bf + stats + acc                  # q_scr + ctx_scr
    return 2 * (stream + weights + scratch)                  # headroom


_VMEM_CAP = 48 * 1024 * 1024   # stay well below v7x's 64 MiB physical VMEM


def attention_forward(x, wq, wk, wv, wp, bp, *, num_heads, context=None,
                      q_tile=256, kv_tile=512):
    """x: (B, N, C). Weights are (C_in, C_out) (i.e. torch Linear W^T), bp: (C,)."""
    B, N, C = x.shape
    H = num_heads
    assert C % H == 0
    d = C // H
    scale = d ** (-0.5)
    itemsize = jnp.dtype(x.dtype).itemsize

    kv_in = x if context is None else context
    M = kv_in.shape[1]

    # Tile sizes: big by default, shrunk (never below 128) if the VMEM
    # estimate exceeds the cap.  Ragged N / M handled by padding + masking.
    tq = min(q_tile, N)
    tk = min(kv_tile, M)
    while _vmem_bytes_estimate(tq, tk, C, H, d, itemsize) > _VMEM_CAP and tk > 128:
        tk //= 2
    while _vmem_bytes_estimate(tq, tk, C, H, d, itemsize) > _VMEM_CAP and tq > 128:
        tq //= 2

    n_q = pl.cdiv(N, tq)
    n_kv = pl.cdiv(M, tk)
    N_pad = n_q * tq
    M_pad = n_kv * tk

    xq = x.astype(jnp.bfloat16)
    xkv = kv_in.astype(jnp.bfloat16)
    if N_pad != N:
        xq = jnp.pad(xq, ((0, 0), (0, N_pad - N), (0, 0)))
    if M_pad != M:
        xkv = jnp.pad(xkv, ((0, 0), (0, M_pad - M), (0, 0)))

    # Fold the qk scale into Wq in f32, then cast to bf16 (MXU input dtype).
    wq_s = (wq * scale).astype(jnp.bfloat16)
    wk_b = wk.astype(jnp.bfloat16)
    wv_b = wv.astype(jnp.bfloat16)
    wp_b = wp.astype(jnp.bfloat16)
    bp2 = bp.reshape(1, C).astype(jnp.float32)

    kernel = functools.partial(attention_kernel, d_head=d, num_heads=H,
                               kv_len=M, kv_tile=tk, mask_tail=(M_pad != M))

    vmem_limit = int(min(max(_vmem_bytes_estimate(tq, tk, C, H, d, itemsize),
                             32 * 1024 * 1024), _VMEM_CAP))

    out = pl.pallas_call(
        kernel,
        out_shape=jax.ShapeDtypeStruct((B, N_pad, C), x.dtype),
        grid_spec=pltpu.PrefetchScalarGridSpec(
            num_scalar_prefetch=0,
            grid=(B, n_q, n_kv),
            in_specs=[
                pl.BlockSpec((None, tq, C), lambda b, q, k: (b, q, 0)),  # queries
                pl.BlockSpec((None, tk, C), lambda b, q, k: (b, k, 0)),  # kv input tile
                pl.BlockSpec((C, C), lambda b, q, k: (0, 0)),            # Wq (scaled) - resident
                pl.BlockSpec((C, C), lambda b, q, k: (0, 0)),            # Wk - resident
                pl.BlockSpec((C, C), lambda b, q, k: (0, 0)),            # Wv - resident
                pl.BlockSpec((C, C), lambda b, q, k: (0, 0)),            # Wproj - resident
                pl.BlockSpec((1, C), lambda b, q, k: (0, 0)),            # proj bias
            ],
            out_specs=pl.BlockSpec((None, tq, C), lambda b, q, k: (b, q, 0)),
            scratch_shapes=[
                pltpu.VMEM((tq, C), jnp.bfloat16),    # Q (all heads, scaled)
                pltpu.VMEM((tq, C), jnp.bfloat16),    # concatenated head outputs
                pltpu.VMEM((H, tq, 1), jnp.float32),  # running max per head
                pltpu.VMEM((H, tq, 1), jnp.float32),  # running sum per head
                pltpu.VMEM((H, tq, d), jnp.float32),  # attention accumulator per head
            ],
        ),
        compiler_params=pltpu.CompilerParams(
            dimension_semantics=("parallel", "parallel", "arbitrary"),
            vmem_limit_bytes=vmem_limit,
        ),
    )(xq, xkv, wq_s, wk_b, wv_b, wp_b, bp2)

    if N_pad != N:
        out = out[:, :N, :]
    return out


def reference_forward(x, wq, wk, wv, wp, bp, *, num_heads):
    """Pure-JAX f32 reference matching the PyTorch forward exactly."""
    B, N, C = x.shape
    d = C // num_heads
    scale = d ** (-0.5)
    q = x @ wq
    k = x @ wk
    v = x @ wv
    qh = q.reshape(B, N, num_heads, d).transpose(0, 2, 1, 3)
    kh = k.reshape(B, N, num_heads, d).transpose(0, 2, 1, 3)
    vh = v.reshape(B, N, num_heads, d).transpose(0, 2, 1, 3)
    attn = jnp.einsum('bhnd,bhmd->bhnm', qh, kh) * scale
    attn = jax.nn.softmax(attn, axis=-1)
    o = jnp.einsum('bhnm,bhmd->bhnd', attn, vh)
    o = o.transpose(0, 2, 1, 3).reshape(B, N, C)
    return o @ wp + bp


if __name__ == "__main__":
    B, N, C, H = 2, 8, 32, 8   # batch=2, seq=8, dim=32, num_heads=8 (head_dim=4)

    key = jax.random.PRNGKey(0)
    kx, kq, kk, kv, kp, kb = jax.random.split(key, 6)

    x = jax.random.normal(kx, (B, N, C), dtype=jnp.float32)
    # torch.nn.Linear weights are (out, in); we store the transposed (in, out).
    init_scale = 1.0 / jnp.sqrt(C)
    wq = jax.random.uniform(kq, (C, C), jnp.float32, -init_scale, init_scale)
    wk = jax.random.uniform(kk, (C, C), jnp.float32, -init_scale, init_scale)
    wv = jax.random.uniform(kv, (C, C), jnp.float32, -init_scale, init_scale)
    wp = jax.random.uniform(kp, (C, C), jnp.float32, -init_scale, init_scale)
    bp = jax.random.uniform(kb, (C,), jnp.float32, -init_scale, init_scale)

    out = attention_forward(x, wq, wk, wv, wp, bp, num_heads=H)
    out = jax.block_until_ready(out)

    ref = reference_forward(x, wq, wk, wv, wp, bp, num_heads=H)
    assert out.shape == (B, N, C)
    # bf16 MXU inputs -> compare against the f32 reference with a
    # correspondingly loose (but still meaningful) tolerance.
    assert jnp.allclose(out, ref, atol=5e-2, rtol=5e-2), "mismatch vs reference"

    print("KERNEL_OK")
</pallas_src>

<mosaic_0001>
module attributes {stable_mosaic.version = 11 : i64} {
  func.func @attention_kernel(%arg0: i32, %arg1: i32, %arg2: i32, %arg3: memref<1x8x32xbf16, #tpu.memory_space<vmem>>, %arg4: memref<1x8x32xbf16, #tpu.memory_space<vmem>>, %arg5: memref<32x32xbf16, #tpu.memory_space<vmem>>, %arg6: memref<32x32xbf16, #tpu.memory_space<vmem>>, %arg7: memref<32x32xbf16, #tpu.memory_space<vmem>>, %arg8: memref<32x32xbf16, #tpu.memory_space<vmem>>, %arg9: memref<1x32xf32, #tpu.memory_space<vmem>>, %arg10: memref<1x8x32xf32, #tpu.memory_space<vmem>>, %arg11: memref<8x32xbf16, #tpu.memory_space<vmem>>, %arg12: memref<8x32xbf16, #tpu.memory_space<vmem>>, %arg13: memref<8x8x1xf32, #tpu.memory_space<vmem>>, %arg14: memref<8x8x1xf32, #tpu.memory_space<vmem>>, %arg15: memref<8x8x4xf32, #tpu.memory_space<vmem>>) attributes {dimension_semantics = [#tpu.dimension_semantics<parallel>, #tpu.dimension_semantics<parallel>, #tpu.dimension_semantics<arbitrary>], iteration_bounds = array<i64: 2, 1, 1>, scalar_prefetch = 0 : i64, scratch_operands = 5 : i64, tpu.core_type = #tpu.core_type<tc>, window_params = [{transform_indices = @transform_0, window_bounds = array<i64: 1, 8, 32>}, {transform_indices = @transform_1, window_bounds = array<i64: 1, 8, 32>}, {pipeline_mode = #tpu.pipeline_mode<synchronous>, transform_indices = @transform_2, window_bounds = array<i64: 32, 32>}, {pipeline_mode = #tpu.pipeline_mode<synchronous>, transform_indices = @transform_3, window_bounds = array<i64: 32, 32>}, {pipeline_mode = #tpu.pipeline_mode<synchronous>, transform_indices = @transform_4, window_bounds = array<i64: 32, 32>}, {pipeline_mode = #tpu.pipeline_mode<synchronous>, transform_indices = @transform_5, window_bounds = array<i64: 32, 32>}, {pipeline_mode = #tpu.pipeline_mode<synchronous>, transform_indices = @transform_6, window_bounds = array<i64: 1, 32>}, {transform_indices = @transform_7, window_bounds = array<i64: 1, 8, 32>}]} {
    %c0_i32 = arith.constant 0 : i32
    %0 = arith.cmpi eq, %arg2, %c0_i32 : i32
    %1 = arith.extui %0 : i1 to i32
    %c0_i32_0 = arith.constant 0 : i32
    %2 = arith.cmpi ne, %1, %c0_i32_0 : i32
    scf.if %2 {
      %c0_192 = arith.constant 0 : index
      %c0_193 = arith.constant 0 : index
      %c0_194 = arith.constant 0 : index
      %304 = vector.load %arg3[%c0_192, %c0_193, %c0_194] : memref<1x8x32xbf16, #tpu.memory_space<vmem>>, vector<1x8x32xbf16>
      %305 = vector.shape_cast %304 : vector<1x8x32xbf16> to vector<8x32xbf16>
      %c0_195 = arith.constant 0 : index
      %c0_196 = arith.constant 0 : index
      %306 = vector.load %arg5[%c0_195, %c0_196] : memref<32x32xbf16, #tpu.memory_space<vmem>>, vector<32x32xbf16>
      %cst_197 = arith.constant dense<0.000000e+00> : vector<8x32xf32>
      %307 = tpu.matmul %305, %306, %cst_197 {dimension_numbers = #tpu.dot_dimension_numbers<[1], [0], [0], [1], [0, 0, 1, 1], [], []>} : vector<8x32xbf16>, vector<32x32xbf16>, vector<8x32xf32> -> vector<8x32xf32>
      %308 = arith.truncf %307 : vector<8x32xf32> to vector<8x32xbf16>
      %c0_198 = arith.constant 0 : index
      %c0_199 = arith.constant 0 : index
      %309 = vector.load %arg11[%c0_198, %c0_199] : memref<8x32xbf16, #tpu.memory_space<vmem>>, vector<8x32xbf16>
      tpu.vector_store %arg11[%c0_198, %c0_199], %308 {strides = array<i32>} : memref<8x32xbf16, #tpu.memory_space<vmem>>, vector<8x32xbf16>,
      %cst_200 = arith.constant 0xFF800000 : f32
      %310 = vector.broadcast %cst_200 : f32 to vector<8x8x1xf32>
      %c0_201 = arith.constant 0 : index
      %c0_202 = arith.constant 0 : index
      %c0_203 = arith.constant 0 : index
      %311 = vector.load %arg13[%c0_201, %c0_202, %c0_203] : memref<8x8x1xf32, #tpu.memory_space<vmem>>, vector<8x8x1xf32>
      tpu.vector_store %arg13[%c0_201, %c0_202, %c0_203], %310 {strides = array<i32>} : memref<8x8x1xf32, #tpu.memory_space<vmem>>, vector<8x8x1xf32>,
      %cst_204 = arith.constant 0.000000e+00 : f32
      %312 = vector.broadcast %cst_204 : f32 to vector<8x8x1xf32>
      %c0_205 = arith.constant 0 : index
      %c0_206 = arith.constant 0 : index
      %c0_207 = arith.constant 0 : index
      %313 = vector.load %arg14[%c0_205, %c0_206, %c0_207] : memref<8x8x1xf32, #tpu.memory_space<vmem>>, vector<8x8x1xf32>
      tpu.vector_store %arg14[%c0_205, %c0_206, %c0_207], %312 {strides = array<i32>} : memref<8x8x1xf32, #tpu.memory_space<vmem>>, vector<8x8x1xf32>,
      %cst_208 = arith.constant 0.000000e+00 : f32
      %314 = vector.broadcast %cst_208 : f32 to vector<8x8x4xf32>
      %c0_209 = arith.constant 0 : index
      %c0_210 = arith.constant 0 : index
      %c0_211 = arith.constant 0 : index
      %315 = vector.load %arg15[%c0_209, %c0_210, %c0_211] : memref<8x8x4xf32, #tpu.memory_space<vmem>>, vector<8x8x4xf32>
      tpu.vector_store %arg15[%c0_209, %c0_210, %c0_211], %314 {strides = array<i32>} : memref<8x8x4xf32, #tpu.memory_space<vmem>>, vector<8x8x4xf32>,
    } else {
    }
    %c0 = arith.constant 0 : index
    %c0_1 = arith.constant 0 : index
    %c0_2 = arith.constant 0 : index
    %3 = vector.load %arg4[%c0, %c0_1, %c0_2] : memref<1x8x32xbf16, #tpu.memory_space<vmem>>, vector<1x8x32xbf16>
    %4 = vector.shape_cast %3 : vector<1x8x32xbf16> to vector<8x32xbf16>
    %c0_3 = arith.constant 0 : index
    %c0_4 = arith.constant 0 : index
    %5 = vector.load %arg6[%c0_3, %c0_4] : memref<32x32xbf16, #tpu.memory_space<vmem>>, vector<32x32xbf16>
    %cst = arith.constant dense<0.000000e+00> : vector<8x32xf32>
    %6 = tpu.matmul %4, %5, %cst {dimension_numbers = #tpu.dot_dimension_numbers<[1], [0], [0], [1], [0, 0, 1, 1], [], []>} : vector<8x32xbf16>, vector<32x32xbf16>, vector<8x32xf32> -> vector<8x32xf32>
    %7 = arith.truncf %6 : vector<8x32xf32> to vector<8x32xbf16>
    %c0_5 = arith.constant 0 : index
    %c0_6 = arith.constant 0 : index
    %c0_7 = arith.constant 0 : index
    %8 = vector.load %arg4[%c0_5, %c0_6, %c0_7] : memref<1x8x32xbf16, #tpu.memory_space<vmem>>, vector<1x8x32xbf16>
    %9 = vector.shape_cast %8 : vector<1x8x32xbf16> to vector<8x32xbf16>
    %c0_8 = arith.constant 0 : index
    %c0_9 = arith.constant 0 : index
    %10 = vector.load %arg7[%c0_8, %c0_9] : memref<32x32xbf16, #tpu.memory_space<vmem>>, vector<32x32xbf16>
    %cst_10 = arith.constant dense<0.000000e+00> : vector<8x32xf32>
    %11 = tpu.matmul %9, %10, %cst_10 {dimension_numbers = #tpu.dot_dimension_numbers<[1], [0], [0], [1], [0, 0, 1, 1], [], []>} : vector<8x32xbf16>, vector<32x32xbf16>, vector<8x32xf32> -> vector<8x32xf32>
    %12 = arith.truncf %11 : vector<8x32xf32> to vector<8x32xbf16>
    %c0_11 = arith.constant 0 : index
    %c0_12 = arith.constant 0 : index
    %13 = vector.load %arg11[%c0_11, %c0_12] : memref<8x32xbf16, #tpu.memory_space<vmem>>, vector<8x4xbf16>
    %14 = vector.extract_strided_slice %7 {offsets = [0, 0], sizes = [8, 4], strides = [1, 1]} : vector<8x32xbf16> to vector<8x4xbf16>
    %15 = vector.extract_strided_slice %12 {offsets = [0, 0], sizes = [8, 4], strides = [1, 1]} : vector<8x32xbf16> to vector<8x4xbf16>
    %cst_13 = arith.constant dense<0.000000e+00> : vector<8x8xf32>
    %16 = tpu.matmul %13, %14, %cst_13 {dimension_numbers = #tpu.dot_dimension_numbers<[1], [1], [0], [0], [0, 0, 1, 0], [], []>} : vector<8x4xbf16>, vector<8x4xbf16>, vector<8x8xf32> -> vector<8x8xf32>
    %c0_14 = arith.constant 0 : index
    %c0_15 = arith.constant 0 : index
    %c0_16 = arith.constant 0 : index
    %17 = vector.load %arg13[%c0_14, %c0_15, %c0_16] : memref<8x8x1xf32, #tpu.memory_space<vmem>>, vector<1x8x1xf32>
    %18 = vector.shape_cast %17 : vector<1x8x1xf32> to vector<8x1xf32>
    %cst_17 = arith.constant dense<0xFF800000> : vector<8xf32>
    %19 = vector.multi_reduction <maximumf>, %16, %cst_17 [1] : vector<8x8xf32> to vector<8xf32>
    %20 = vector.shape_cast %19 : vector<8xf32> to vector<8x1xf32>
    %21 = arith.maximumf %18, %20 : vector<8x1xf32>
    %22 = arith.subf %18, %21 : vector<8x1xf32>
    %23 = math.exp %22 : vector<8x1xf32>
    %24 = vector.broadcast %21 : vector<8x1xf32> to vector<8x8xf32>
    %25 = arith.subf %16, %24 : vector<8x8xf32>
    %26 = math.exp %25 : vector<8x8xf32>
    %c0_18 = arith.constant 0 : index
    %c0_19 = arith.constant 0 : index
    %c0_20 = arith.constant 0 : index
    %27 = vector.load %arg14[%c0_18, %c0_19, %c0_20] : memref<8x8x1xf32, #tpu.memory_space<vmem>>, vector<1x8x1xf32>
    %28 = vector.shape_cast %27 : vector<1x8x1xf32> to vector<8x1xf32>
    %29 = arith.mulf %23, %28 : vector<8x1xf32>
    %cst_21 = arith.constant dense<0.000000e+00> : vector<8xf32>
    %30 = vector.multi_reduction <add>, %26, %cst_21 [1] : vector<8x8xf32> to vector<8xf32>
    %31 = vector.shape_cast %30 : vector<8xf32> to vector<8x1xf32>
    %32 = arith.addf %29, %31 : vector<8x1xf32>
    %c0_22 = arith.constant 0 : index
    %c0_23 = arith.constant 0 : index
    %c0_24 = arith.constant 0 : index
    %33 = vector.load %arg14[%c0_22, %c0_23, %c0_24] : memref<8x8x1xf32, #tpu.memory_space<vmem>>, vector<1x8x1xf32>
    %34 = vector.shape_cast %33 : vector<1x8x1xf32> to vector<8x1xf32>
    %35 = vector.shape_cast %32 : vector<8x1xf32> to vector<1x8x1xf32>
    tpu.vector_store %arg14[%c0_22, %c0_23, %c0_24], %35 {strides = array<i32>} : memref<8x8x1xf32, #tpu.memory_space<vmem>>, vector<1x8x1xf32>,
    %c0_25 = arith.constant 0 : index
    %c0_26 = arith.constant 0 : index
    %c0_27 = arith.constant 0 : index
    %36 = vector.load %arg15[%c0_25, %c0_26, %c0_27] : memref<8x8x4xf32, #tpu.memory_space<vmem>>, vector<1x8x4xf32>
    %37 = vector.shape_cast %36 : vector<1x8x4xf32> to vector<8x4xf32>
    %38 = vector.broadcast %23 : vector<8x1xf32> to vector<8x4xf32>
    %39 = arith.mulf %38, %37 : vector<8x4xf32>
    %40 = arith.truncf %26 : vector<8x8xf32> to vector<8x8xbf16>
    %cst_28 = arith.constant dense<0.000000e+00> : vector<8x4xf32>
    %41 = tpu.matmul %40, %15, %cst_28 {dimension_numbers = #tpu.dot_dimension_numbers<[1], [0], [0], [1], [0, 0, 1, 1], [], []>} : vector<8x8xbf16>, vector<8x4xbf16>, vector<8x4xf32> -> vector<8x4xf32>
    %42 = arith.addf %39, %41 : vector<8x4xf32>
    %c0_29 = arith.constant 0 : index
    %c0_30 = arith.constant 0 : index
    %c0_31 = arith.constant 0 : index
    %43 = vector.load %arg15[%c0_29, %c0_30, %c0_31] : memref<8x8x4xf32, #tpu.memory_space<vmem>>, vector<1x8x4xf32>
    %44 = vector.shape_cast %43 : vector<1x8x4xf32> to vector<8x4xf32>
    %45 = vector.shape_cast %42 : vector<8x4xf32> to vector<1x8x4xf32>
    tpu.vector_store %arg15[%c0_29, %c0_30, %c0_31], %45 {strides = array<i32>} : memref<8x8x4xf32, #tpu.memory_space<vmem>>, vector<1x8x4xf32>,
    %c0_32 = arith.constant 0 : index
    %c0_33 = arith.constant 0 : index
    %c0_34 = arith.constant 0 : index
    %46 = vector.load %arg13[%c0_32, %c0_33, %c0_34] : memref<8x8x1xf32, #tpu.memory_space<vmem>>, vector<1x8x1xf32>
    %47 = vector.shape_cast %46 : vector<1x8x1xf32> to vector<8x1xf32>
    %48 = vector.shape_cast %21 : vector<8x1xf32> to vector<1x8x1xf32>
    tpu.vector_store %arg13[%c0_32, %c0_33, %c0_34], %48 {strides = array<i32>} : memref<8x8x1xf32, #tpu.memory_space<vmem>>, vector<1x8x1xf32>,
    %c0_35 = arith.constant 0 : index
    %c4 = arith.constant 4 : index
    %49 = vector.load %arg11[%c0_35, %c4] : memref<8x32xbf16, #tpu.memory_space<vmem>>, vector<8x4xbf16>
    %50 = vector.extract_strided_slice %7 {offsets = [0, 4], sizes = [8, 4], strides = [1, 1]} : vector<8x32xbf16> to vector<8x4xbf16>
    %51 = vector.extract_strided_slice %12 {offsets = [0, 4], sizes = [8, 4], strides = [1, 1]} : vector<8x32xbf16> to vector<8x4xbf16>
    %cst_36 = arith.constant dense<0.000000e+00> : vector<8x8xf32>
    %52 = tpu.matmul %49, %50, %cst_36 {dimension_numbers = #tpu.dot_dimension_numbers<[1], [1], [0], [0], [0, 0, 1, 0], [], []>} : vector<8x4xbf16>, vector<8x4xbf16>, vector<8x8xf32> -> vector<8x8xf32>
    %c1 = arith.constant 1 : index
    %c0_37 = arith.constant 0 : index
    %c0_38 = arith.constant 0 : index
    %53 = vector.load %arg13[%c1, %c0_37, %c0_38] : memref<8x8x1xf32, #tpu.memory_space<vmem>>, vector<1x8x1xf32>
    %54 = vector.shape_cast %53 : vector<1x8x1xf32> to vector<8x1xf32>
    %cst_39 = arith.constant dense<0xFF800000> : vector<8xf32>
    %55 = vector.multi_reduction <maximumf>, %52, %cst_39 [1] : vector<8x8xf32> to vector<8xf32>
    %56 = vector.shape_cast %55 : vector<8xf32> to vector<8x1xf32>
    %57 = arith.maximumf %54, %56 : vector<8x1xf32>
    %58 = arith.subf %54, %57 : vector<8x1xf32>
    %59 = math.exp %58 : vector<8x1xf32>
    %60 = vector.broadcast %57 : vector<8x1xf32> to vector<8x8xf32>
    %61 = arith.subf %52, %60 : vector<8x8xf32>
    %62 = math.exp %61 : vector<8x8xf32>
    %c1_40 = arith.constant 1 : index
    %c0_41 = arith.constant 0 : index
    %c0_42 = arith.constant 0 : index
    %63 = vector.load %arg14[%c1_40, %c0_41, %c0_42] : memref<8x8x1xf32, #tpu.memory_space<vmem>>, vector<1x8x1xf32>
    %64 = vector.shape_cast %63 : vector<1x8x1xf32> to vector<8x1xf32>
    %65 = arith.mulf %59, %64 : vector<8x1xf32>
    %cst_43 = arith.constant dense<0.000000e+00> : vector<8xf32>
    %66 = vector.multi_reduction <add>, %62, %cst_43 [1] : vector<8x8xf32> to vector<8xf32>
    %67 = vector.shape_cast %66 : vector<8xf32> to vector<8x1xf32>
    %68 = arith.addf %65, %67 : vector<8x1xf32>
    %c1_44 = arith.constant 1 : index
    %c0_45 = arith.constant 0 : index
    %c0_46 = arith.constant 0 : index
    %69 = vector.load %arg14[%c1_44, %c0_45, %c0_46] : memref<8x8x1xf32, #tpu.memory_space<vmem>>, vector<1x8x1xf32>
    %70 = vector.shape_cast %69 : vector<1x8x1xf32> to vector<8x1xf32>
    %71 = vector.shape_cast %68 : vector<8x1xf32> to vector<1x8x1xf32>
    tpu.vector_store %arg14[%c1_44, %c0_45, %c0_46], %71 {strides = array<i32>} : memref<8x8x1xf32, #tpu.memory_space<vmem>>, vector<1x8x1xf32>,
    %c1_47 = arith.constant 1 : index
    %c0_48 = arith.constant 0 : index
    %c0_49 = arith.constant 0 : index
    %72 = vector.load %arg15[%c1_47, %c0_48, %c0_49] : memref<8x8x4xf32, #tpu.memory_space<vmem>>, vector<1x8x4xf32>
    %73 = vector.shape_cast %72 : vector<1x8x4xf32> to vector<8x4xf32>
    %74 = vector.broadcast %59 : vector<8x1xf32> to vector<8x4xf32>
    %75 = arith.mulf %74, %73 : vector<8x4xf32>
    %76 = arith.truncf %62 : vector<8x8xf32> to vector<8x8xbf16>
    %cst_50 = arith.constant dense<0.000000e+00> : vector<8x4xf32>
    %77 = tpu.matmul %76, %51, %cst_50 {dimension_numbers = #tpu.dot_dimension_numbers<[1], [0], [0], [1], [0, 0, 1, 1], [], []>} : vector<8x8xbf16>, vector<8x4xbf16>, vector<8x4xf32> -> vector<8x4xf32>
    %78 = arith.addf %75, %77 : vector<8x4xf32>
    %c1_51 = arith.constant 1 : index
    %c0_52 = arith.constant 0 : index
    %c0_53 = arith.constant 0 : index
    %79 = vector.load %arg15[%c1_51, %c0_52, %c0_53] : memref<8x8x4xf32, #tpu.memory_space<vmem>>, vector<1x8x4xf32>
    %80 = vector.shape_cast %79 : vector<1x8x4xf32> to vector<8x4xf32>
    %81 = vector.shape_cast %78 : vector<8x4xf32> to vector<1x8x4xf32>
    tpu.vector_store %arg15[%c1_51, %c0_52, %c0_53], %81 {strides = array<i32>} : memref<8x8x4xf32, #tpu.memory_space<vmem>>, vector<1x8x4xf32>,
    %c1_54 = arith.constant 1 : index
    %c0_55 = arith.constant 0 : index
    %c0_56 = arith.constant 0 : index
    %82 = vector.load %arg13[%c1_54, %c0_55, %c0_56] : memref<8x8x1xf32, #tpu.memory_space<vmem>>, vector<1x8x1xf32>
    %83 = vector.shape_cast %82 : vector<1x8x1xf32> to vector<8x1xf32>
    %84 = vector.shape_cast %57 : vector<8x1xf32> to vector<1x8x1xf32>
    tpu.vector_store %arg13[%c1_54, %c0_55, %c0_56], %84 {strides = array<i32>} : memref<8x8x1xf32, #tpu.memory_space<vmem>>, vector<1x8x1xf32>,
    %c0_57 = arith.constant 0 : index
    %c8 = arith.constant 8 : index
    %85 = vector.load %arg11[%c0_57, %c8] : memref<8x32xbf16, #tpu.memory_space<vmem>>, vector<8x4xbf16>
    %86 = vector.extract_strided_slice %7 {offsets = [0, 8], sizes = [8, 4], strides = [1, 1]} : vector<8x32xbf16> to vector<8x4xbf16>
    %87 = vector.extract_strided_slice %12 {offsets = [0, 8], sizes = [8, 4], strides = [1, 1]} : vector<8x32xbf16> to vector<8x4xbf16>
    %cst_58 = arith.constant dense<0.000000e+00> : vector<8x8xf32>
    %88 = tpu.matmul %85, %86, %cst_58 {dimension_numbers = #tpu.dot_dimension_numbers<[1], [1], [0], [0], [0, 0, 1, 0], [], []>} : vector<8x4xbf16>, vector<8x4xbf16>, vector<8x8xf32> -> vector<8x8xf32>
    %c2 = arith.constant 2 : index
    %c0_59 = arith.constant 0 : index
    %c0_60 = arith.constant 0 : index
    %89 = vector.load %arg13[%c2, %c0_59, %c0_60] : memref<8x8x1xf32, #tpu.memory_space<vmem>>, vector<1x8x1xf32>
    %90 = vector.shape_cast %89 : vector<1x8x1xf32> to vector<8x1xf32>
    %cst_61 = arith.constant dense<0xFF800000> : vector<8xf32>
    %91 = vector.multi_reduction <maximumf>, %88, %cst_61 [1] : vector<8x8xf32> to vector<8xf32>
    %92 = vector.shape_cast %91 : vector<8xf32> to vector<8x1xf32>
    %93 = arith.maximumf %90, %92 : vector<8x1xf32>
    %94 = arith.subf %90, %93 : vector<8x1xf32>
    %95 = math.exp %94 : vector<8x1xf32>
    %96 = vector.broadcast %93 : vector<8x1xf32> to vector<8x8xf32>
    %97 = arith.subf %88, %96 : vector<8x8xf32>
    %98 = math.exp %97 : vector<8x8xf32>
    %c2_62 = arith.constant 2 : index
    %c0_63 = arith.constant 0 : index
    %c0_64 = arith.constant 0 : index
    %99 = vector.load %arg14[%c2_62, %c0_63, %c0_64] : memref<8x8x1xf32, #tpu.memory_space<vmem>>, vector<1x8x1xf32>
    %100 = vector.shape_cast %99 : vector<1x8x1xf32> to vector<8x1xf32>
    %101 = arith.mulf %95, %100 : vector<8x1xf32>
    %cst_65 = arith.constant dense<0.000000e+00> : vector<8xf32>
    %102 = vector.multi_reduction <add>, %98, %cst_65 [1] : vector<8x8xf32> to vector<8xf32>
    %103 = vector.shape_cast %102 : vector<8xf32> to vector<8x1xf32>
    %104 = arith.addf %101, %103 : vector<8x1xf32>
    %c2_66 = arith.constant 2 : index
    %c0_67 = arith.constant 0 : index
    %c0_68 = arith.constant 0 : index
    %105 = vector.load %arg14[%c2_66, %c0_67, %c0_68] : memref<8x8x1xf32, #tpu.memory_space<vmem>>, vector<1x8x1xf32>
    %106 = vector.shape_cast %105 : vector<1x8x1xf32> to vector<8x1xf32>
    %107 = vector.shape_cast %104 : vector<8x1xf32> to vector<1x8x1xf32>
    tpu.vector_store %arg14[%c2_66, %c0_67, %c0_68], %107 {strides = array<i32>} : memref<8x8x1xf32, #tpu.memory_space<vmem>>, vector<1x8x1xf32>,
    %c2_69 = arith.constant 2 : index
    %c0_70 = arith.constant 0 : index
    %c0_71 = arith.constant 0 : index
    %108 = vector.load %arg15[%c2_69, %c0_70, %c0_71] : memref<8x8x4xf32, #tpu.memory_space<vmem>>, vector<1x8x4xf32>
    %109 = vector.shape_cast %108 : vector<1x8x4xf32> to vector<8x4xf32>
    %110 = vector.broadcast %95 : vector<8x1xf32> to vector<8x4xf32>
    %111 = arith.mulf %110, %109 : vector<8x4xf32>
    %112 = arith.truncf %98 : vector<8x8xf32> to vector<8x8xbf16>
    %cst_72 = arith.constant dense<0.000000e+00> : vector<8x4xf32>
    %113 = tpu.matmul %112, %87, %cst_72 {dimension_numbers = #tpu.dot_dimension_numbers<[1], [0], [0], [1], [0, 0, 1, 1], [], []>} : vector<8x8xbf16>, vector<8x4xbf16>, vector<8x4xf32> -> vector<8x4xf32>
    %114 = arith.addf %111, %113 : vector<8x4xf32>
    %c2_73 = arith.constant 2 : index
    %c0_74 = arith.constant 0 : index
    %c0_75 = arith.constant 0 : index
    %115 = vector.load %arg15[%c2_73, %c0_74, %c0_75] : memref<8x8x4xf32, #tpu.memory_space<vmem>>, vector<1x8x4xf32>
    %116 = vector.shape_cast %115 : vector<1x8x4xf32> to vector<8x4xf32>
    %117 = vector.shape_cast %114 : vector<8x4xf32> to vector<1x8x4xf32>
    tpu.vector_store %arg15[%c2_73, %c0_74, %c0_75], %117 {strides = array<i32>} : memref<8x8x4xf32, #tpu.memory_space<vmem>>, vector<1x8x4xf32>,
    %c2_76 = arith.constant 2 : index
    %c0_77 = arith.constant 0 : index
    %c0_78 = arith.constant 0 : index
    %118 = vector.load %arg13[%c2_76, %c0_77, %c0_78] : memref<8x8x1xf32, #tpu.memory_space<vmem>>, vector<1x8x1xf32>
    %119 = vector.shape_cast %118 : vector<1x8x1xf32> to vector<8x1xf32>
    %120 = vector.shape_cast %93 : vector<8x1xf32> to vector<1x8x1xf32>
    tpu.vector_store %arg13[%c2_76, %c0_77, %c0_78], %120 {strides = array<i32>} : memref<8x8x1xf32, #tpu.memory_space<vmem>>, vector<1x8x1xf32>,
    %c0_79 = arith.constant 0 : index
    %c12 = arith.constant 12 : index
    %121 = vector.load %arg11[%c0_79, %c12] : memref<8x32xbf16, #tpu.memory_space<vmem>>, vector<8x4xbf16>
    %122 = vector.extract_strided_slice %7 {offsets = [0, 12], sizes = [8, 4], strides = [1, 1]} : vector<8x32xbf16> to vector<8x4xbf16>
    %123 = vector.extract_strided_slice %12 {offsets = [0, 12], sizes = [8, 4], strides = [1, 1]} : vector<8x32xbf16> to vector<8x4xbf16>
    %cst_80 = arith.constant dense<0.000000e+00> : vector<8x8xf32>
    %124 = tpu.matmul %121, %122, %cst_80 {dimension_numbers = #tpu.dot_dimension_numbers<[1], [1], [0], [0], [0, 0, 1, 0], [], []>} : vector<8x4xbf16>, vector<8x4xbf16>, vector<8x8xf32> -> vector<8x8xf32>
    %c3 = arith.constant 3 : index
    %c0_81 = arith.constant 0 : index
    %c0_82 = arith.constant 0 : index
    %125 = vector.load %arg13[%c3, %c0_81, %c0_82] : memref<8x8x1xf32, #tpu.memory_space<vmem>>, vector<1x8x1xf32>
    %126 = vector.shape_cast %125 : vector<1x8x1xf32> to vector<8x1xf32>
    %cst_83 = arith.constant dense<0xFF800000> : vector<8xf32>
    %127 = vector.multi_reduction <maximumf>, %124, %cst_83 [1] : vector<8x8xf32> to vector<8xf32>
    %128 = vector.shape_cast %127 : vector<8xf32> to vector<8x1xf32>
    %129 = arith.maximumf %126, %128 : vector<8x1xf32>
    %130 = arith.subf %126, %129 : vector<8x1xf32>
    %131 = math.exp %130 : vector<8x1xf32>
    %132 = vector.broadcast %129 : vector<8x1xf32> to vector<8x8xf32>
    %133 = arith.subf %124, %132 : vector<8x8xf32>
    %134 = math.exp %133 : vector<8x8xf32>
    %c3_84 = arith.constant 3 : index
    %c0_85 = arith.constant 0 : index
    %c0_86 = arith.constant 0 : index
    %135 = vector.load %arg14[%c3_84, %c0_85, %c0_86] : memref<8x8x1xf32, #tpu.memory_space<vmem>>, vector<1x8x1xf32>
    %136 = vector.shape_cast %135 : vector<1x8x1xf32> to vector<8x1xf32>
    %137 = arith.mulf %131, %136 : vector<8x1xf32>
    %cst_87 = arith.constant dense<0.000000e+00> : vector<8xf32>
    %138 = vector.multi_reduction <add>, %134, %cst_87 [1] : vector<8x8xf32> to vector<8xf32>
    %139 = vector.shape_cast %138 : vector<8xf32> to vector<8x1xf32>
    %140 = arith.addf %137, %139 : vector<8x1xf32>
    %c3_88 = arith.constant 3 : index
    %c0_89 = arith.constant 0 : index
    %c0_90 = arith.constant 0 : index
    %141 = vector.load %arg14[%c3_88, %c0_89, %c0_90] : memref<8x8x1xf32, #tpu.memory_space<vmem>>, vector<1x8x1xf32>
    %142 = vector.shape_cast %141 : vector<1x8x1xf32> to vector<8x1xf32>
    %143 = vector.shape_cast %140 : vector<8x1xf32> to vector<1x8x1xf32>
    tpu.vector_store %arg14[%c3_88, %c0_89, %c0_90], %143 {strides = array<i32>} : memref<8x8x1xf32, #tpu.memory_space<vmem>>, vector<1x8x1xf32>,
    %c3_91 = arith.constant 3 : index
    %c0_92 = arith.constant 0 : index
    %c0_93 = arith.constant 0 : index
    %144 = vector.load %arg15[%c3_91, %c0_92, %c0_93] : memref<8x8x4xf32, #tpu.memory_space<vmem>>, vector<1x8x4xf32>
    %145 = vector.shape_cast %144 : vector<1x8x4xf32> to vector<8x4xf32>
    %146 = vector.broadcast %131 : vector<8x1xf32> to vector<8x4xf32>
    %147 = arith.mulf %146, %145 : vector<8x4xf32>
    %148 = arith.truncf %134 : vector<8x8xf32> to vector<8x8xbf16>
    %cst_94 = arith.constant dense<0.000000e+00> : vector<8x4xf32>
    %149 = tpu.matmul %148, %123, %cst_94 {dimension_numbers = #tpu.dot_dimension_numbers<[1], [0], [0], [1], [0, 0, 1, 1], [], []>} : vector<8x8xbf16>, vector<8x4xbf16>, vector<8x4xf32> -> vector<8x4xf32>
    %150 = arith.addf %147, %149 : vector<8x4xf32>
    %c3_95 = arith.constant 3 : index
    %c0_96 = arith.constant 0 : index
    %c0_97 = arith.constant 0 : index
    %151 = vector.load %arg15[%c3_95, %c0_96, %c0_97] : memref<8x8x4xf32, #tpu.memory_space<vmem>>, vector<1x8x4xf32>
    %152 = vector.shape_cast %151 : vector<1x8x4xf32> to vector<8x4xf32>
    %153 = vector.shape_cast %150 : vector<8x4xf32> to vector<1x8x4xf32>
    tpu.vector_store %arg15[%c3_95, %c0_96, %c0_97], %153 {strides = array<i32>} : memref<8x8x4xf32, #tpu.memory_space<vmem>>, vector<1x8x4xf32>,
    %c3_98 = arith.constant 3 : index
    %c0_99 = arith.constant 0 : index
    %c0_100 = arith.constant 0 : index
    %154 = vector.load %arg13[%c3_98, %c0_99, %c0_100] : memref<8x8x1xf32, #tpu.memory_space<vmem>>, vector<1x8x1xf32>
    %155 = vector.shape_cast %154 : vector<1x8x1xf32> to vector<8x1xf32>
    %156 = vector.shape_cast %129 : vector<8x1xf32> to vector<1x8x1xf32>
    tpu.vector_store %arg13[%c3_98, %c0_99, %c0_100], %156 {strides = array<i32>} : memref<8x8x1xf32, #tpu.memory_space<vmem>>, vector<1x8x1xf32>,
    %c0_101 = arith.constant 0 : index
    %c16 = arith.constant 16 : index
    %157 = vector.load %arg11[%c0_101, %c16] : memref<8x32xbf16, #tpu.memory_space<vmem>>, vector<8x4xbf16>
    %158 = vector.extract_strided_slice %7 {offsets = [0, 16], sizes = [8, 4], strides = [1, 1]} : vector<8x32xbf16> to vector<8x4xbf16>
    %159 = vector.extract_strided_slice %12 {offsets = [0, 16], sizes = [8, 4], strides = [1, 1]} : vector<8x32xbf16> to vector<8x4xbf16>
    %cst_102 = arith.constant dense<0.000000e+00> : vector<8x8xf32>
    %160 = tpu.matmul %157, %158, %cst_102 {dimension_numbers = #tpu.dot_dimension_numbers<[1], [1], [0], [0], [0, 0, 1, 0], [], []>} : vector<8x4xbf16>, vector<8x4xbf16>, vector<8x8xf32> -> vector<8x8xf32>
    %c4_103 = arith.constant 4 : index
    %c0_104 = arith.constant 0 : index
    %c0_105 = arith.constant 0 : index
    %161 = vector.load %arg13[%c4_103, %c0_104, %c0_105] : memref<8x8x1xf32, #tpu.memory_space<vmem>>, vector<1x8x1xf32>
    %162 = vector.shape_cast %161 : vector<1x8x1xf32> to vector<8x1xf32>
    %cst_106 = arith.constant dense<0xFF800000> : vector<8xf32>
    %163 = vector.multi_reduction <maximumf>, %160, %cst_106 [1] : vector<8x8xf32> to vector<8xf32>
    %164 = vector.shape_cast %163 : vector<8xf32> to vector<8x1xf32>
    %165 = arith.maximumf %162, %164 : vector<8x1xf32>
    %166 = arith.subf %162, %165 : vector<8x1xf32>
    %167 = math.exp %166 : vector<8x1xf32>
    %168 = vector.broadcast %165 : vector<8x1xf32> to vector<8x8xf32>
    %169 = arith.subf %160, %168 : vector<8x8xf32>
    %170 = math.exp %169 : vector<8x8xf32>
    %c4_107 = arith.constant 4 : index
    %c0_108 = arith.constant 0 : index
    %c0_109 = arith.constant 0 : index
    %171 = vector.load %arg14[%c4_107, %c0_108, %c0_109] : memref<8x8x1xf32, #tpu.memory_space<vmem>>, vector<1x8x1xf32>
    %172 = vector.shape_cast %171 : vector<1x8x1xf32> to vector<8x1xf32>
    %173 = arith.mulf %167, %172 : vector<8x1xf32>
    %cst_110 = arith.constant dense<0.000000e+00> : vector<8xf32>
    %174 = vector.multi_reduction <add>, %170, %cst_110 [1] : vector<8x8xf32> to vector<8xf32>
    %175 = vector.shape_cast %174 : vector<8xf32> to vector<8x1xf32>
    %176 = arith.addf %173, %175 : vector<8x1xf32>
    %c4_111 = arith.constant 4 : index
    %c0_112 = arith.constant 0 : index
    %c0_113 = arith.constant 0 : index
    %177 = vector.load %arg14[%c4_111, %c0_112, %c0_113] : memref<8x8x1xf32, #tpu.memory_space<vmem>>, vector<1x8x1xf32>
    %178 = vector.shape_cast %177 : vector<1x8x1xf32> to vector<8x1xf32>
    %179 = vector.shape_cast %176 : vector<8x1xf32> to vector<1x8x1xf32>
    tpu.vector_store %arg14[%c4_111, %c0_112, %c0_113], %179 {strides = array<i32>} : memref<8x8x1xf32, #tpu.memory_space<vmem>>, vector<1x8x1xf32>,
    %c4_114 = arith.constant 4 : index
    %c0_115 = arith.constant 0 : index
    %c0_116 = arith.constant 0 : index
    %180 = vector.load %arg15[%c4_114, %c0_115, %c0_116] : memref<8x8x4xf32, #tpu.memory_space<vmem>>, vector<1x8x4xf32>
    %181 = vector.shape_cast %180 : vector<1x8x4xf32> to vector<8x4xf32>
    %182 = vector.broadcast %167 : vector<8x1xf32> to vector<8x4xf32>
    %183 = arith.mulf %182, %181 : vector<8x4xf32>
    %184 = arith.truncf %170 : vector<8x8xf32> to vector<8x8xbf16>
    %cst_117 = arith.constant dense<0.000000e+00> : vector<8x4xf32>
    %185 = tpu.matmul %184, %159, %cst_117 {dimension_numbers = #tpu.dot_dimension_numbers<[1], [0], [0], [1], [0, 0, 1, 1], [], []>} : vector<8x8xbf16>, vector<8x4xbf16>, vector<8x4xf32> -> vector<8x4xf32>
    %186 = arith.addf %183, %185 : vector<8x4xf32>
    %c4_118 = arith.constant 4 : index
    %c0_119 = arith.constant 0 : index
    %c0_120 = arith.constant 0 : index
    %187 = vector.load %arg15[%c4_118, %c0_119, %c0_120] : memref<8x8x4xf32, #tpu.memory_space<vmem>>, vector<1x8x4xf32>
    %188 = vector.shape_cast %187 : vector<1x8x4xf32> to vector<8x4xf32>
    %189 = vector.shape_cast %186 : vector<8x4xf32> to vector<1x8x4xf32>
    tpu.vector_store %arg15[%c4_118, %c0_119, %c0_120], %189 {strides = array<i32>} : memref<8x8x4xf32, #tpu.memory_space<vmem>>, vector<1x8x4xf32>,
    %c4_121 = arith.constant 4 : index
    %c0_122 = arith.constant 0 : index
    %c0_123 = arith.constant 0 : index
    %190 = vector.load %arg13[%c4_121, %c0_122, %c0_123] : memref<8x8x1xf32, #tpu.memory_space<vmem>>, vector<1x8x1xf32>
    %191 = vector.shape_cast %190 : vector<1x8x1xf32> to vector<8x1xf32>
    %192 = vector.shape_cast %165 : vector<8x1xf32> to vector<1x8x1xf32>
    tpu.vector_store %arg13[%c4_121, %c0_122, %c0_123], %192 {strides = array<i32>} : memref<8x8x1xf32, #tpu.memory_space<vmem>>, vector<1x8x1xf32>,
    %c0_124 = arith.constant 0 : index
    %c20 = arith.constant 20 : index
    %193 = vector.load %arg11[%c0_124, %c20] : memref<8x32xbf16, #tpu.memory_space<vmem>>, vector<8x4xbf16>
    %194 = vector.extract_strided_slice %7 {offsets = [0, 20], sizes = [8, 4], strides = [1, 1]} : vector<8x32xbf16> to vector<8x4xbf16>
    %195 = vector.extract_strided_slice %12 {offsets = [0, 20], sizes = [8, 4], strides = [1, 1]} : vector<8x32xbf16> to vector<8x4xbf16>
    %cst_125 = arith.constant dense<0.000000e+00> : vector<8x8xf32>
    %196 = tpu.matmul %193, %194, %cst_125 {dimension_numbers = #tpu.dot_dimension_numbers<[1], [1], [0], [0], [0, 0, 1, 0], [], []>} : vector<8x4xbf16>, vector<8x4xbf16>, vector<8x8xf32> -> vector<8x8xf32>
    %c5 = arith.constant 5 : index
    %c0_126 = arith.constant 0 : index
    %c0_127 = arith.constant 0 : index
    %197 = vector.load %arg13[%c5, %c0_126, %c0_127] : memref<8x8x1xf32, #tpu.memory_space<vmem>>, vector<1x8x1xf32>
    %198 = vector.shape_cast %197 : vector<1x8x1xf32> to vector<8x1xf32>
    %cst_128 = arith.constant dense<0xFF800000> : vector<8xf32>
    %199 = vector.multi_reduction <maximumf>, %196, %cst_128 [1] : vector<8x8xf32> to vector<8xf32>
    %200 = vector.shape_cast %199 : vector<8xf32> to vector<8x1xf32>
    %201 = arith.maximumf %198, %200 : vector<8x1xf32>
    %202 = arith.subf %198, %201 : vector<8x1xf32>
    %203 = math.exp %202 : vector<8x1xf32>
    %204 = vector.broadcast %201 : vector<8x1xf32> to vector<8x8xf32>
    %205 = arith.subf %196, %204 : vector<8x8xf32>
    %206 = math.exp %205 : vector<8x8xf32>
    %c5_129 = arith.constant 5 : index
    %c0_130 = arith.constant 0 : index
    %c0_131 = arith.constant 0 : index
    %207 = vector.load %arg14[%c5_129, %c0_130, %c0_131] : memref<8x8x1xf32, #tpu.memory_space<vmem>>, vector<1x8x1xf32>
    %208 = vector.shape_cast %207 : vector<1x8x1xf32> to vector<8x1xf32>
    %209 = arith.mulf %203, %208 : vector<8x1xf32>
    %cst_132 = arith.constant dense<0.000000e+00> : vector<8xf32>
    %210 = vector.multi_reduction <add>, %206, %cst_132 [1] : vector<8x8xf32> to vector<8xf32>
    %211 = vector.shape_cast %210 : vector<8xf32> to vector<8x1xf32>
    %212 = arith.addf %209, %211 : vector<8x1xf32>
    %c5_133 = arith.constant 5 : index
    %c0_134 = arith.constant 0 : index
    %c0_135 = arith.constant 0 : index
    %213 = vector.load %arg14[%c5_133, %c0_134, %c0_135] : memref<8x8x1xf32, #tpu.memory_space<vmem>>, vector<1x8x1xf32>
    %214 = vector.shape_cast %213 : vector<1x8x1xf32> to vector<8x1xf32>
    %215 = vector.shape_cast %212 : vector<8x1xf32> to vector<1x8x1xf32>
    tpu.vector_store %arg14[%c5_133, %c0_134, %c0_135], %215 {strides = array<i32>} : memref<8x8x1xf32, #tpu.memory_space<vmem>>, vector<1x8x1xf32>,
    %c5_136 = arith.constant 5 : index
    %c0_137 = arith.constant 0 : index
    %c0_138 = arith.constant 0 : index
    %216 = vector.load %arg15[%c5_136, %c0_137, %c0_138] : memref<8x8x4xf32, #tpu.memory_space<vmem>>, vector<1x8x4xf32>
    %217 = vector.shape_cast %216 : vector<1x8x4xf32> to vector<8x4xf32>
    %218 = vector.broadcast %203 : vector<8x1xf32> to vector<8x4xf32>
    %219 = arith.mulf %218, %217 : vector<8x4xf32>
    %220 = arith.truncf %206 : vector<8x8xf32> to vector<8x8xbf16>
    %cst_139 = arith.constant dense<0.000000e+00> : vector<8x4xf32>
    %221 = tpu.matmul %220, %195, %cst_139 {dimension_numbers = #tpu.dot_dimension_numbers<[1], [0], [0], [1], [0, 0, 1, 1], [], []>} : vector<8x8xbf16>, vector<8x4xbf16>, vector<8x4xf32> -> vector<8x4xf32>
    %222 = arith.addf %219, %221 : vector<8x4xf32>
    %c5_140 = arith.constant 5 : index
    %c0_141 = arith.constant 0 : index
    %c0_142 = arith.constant 0 : index
    %223 = vector.load %arg15[%c5_140, %c0_141, %c0_142] : memref<8x8x4xf32, #tpu.memory_space<vmem>>, vector<1x8x4xf32>
    %224 = vector.shape_cast %223 : vector<1x8x4xf32> to vector<8x4xf32>
    %225 = vector.shape_cast %222 : vector<8x4xf32> to vector<1x8x4xf32>
    tpu.vector_store %arg15[%c5_140, %c0_141, %c0_142], %225 {strides = array<i32>} : memref<8x8x4xf32, #tpu.memory_space<vmem>>, vector<1x8x4xf32>,
    %c5_143 = arith.constant 5 : index
    %c0_144 = arith.constant 0 : index
    %c0_145 = arith.constant 0 : index
    %226 = vector.load %arg13[%c5_143, %c0_144, %c0_145] : memref<8x8x1xf32, #tpu.memory_space<vmem>>, vector<1x8x1xf32>
    %227 = vector.shape_cast %226 : vector<1x8x1xf32> to vector<8x1xf32>
    %228 = vector.shape_cast %201 : vector<8x1xf32> to vector<1x8x1xf32>
    tpu.vector_store %arg13[%c5_143, %c0_144, %c0_145], %228 {strides = array<i32>} : memref<8x8x1xf32, #tpu.memory_space<vmem>>, vector<1x8x1xf32>,
    %c0_146 = arith.constant 0 : index
    %c24 = arith.constant 24 : index
    %229 = vector.load %arg11[%c0_146, %c24] : memref<8x32xbf16, #tpu.memory_space<vmem>>, vector<8x4xbf16>
    %230 = vector.extract_strided_slice %7 {offsets = [0, 24], sizes = [8, 4], strides = [1, 1]} : vector<8x32xbf16> to vector<8x4xbf16>
    %231 = vector.extract_strided_slice %12 {offsets = [0, 24], sizes = [8, 4], strides = [1, 1]} : vector<8x32xbf16> to vector<8x4xbf16>
    %cst_147 = arith.constant dense<0.000000e+00> : vector<8x8xf32>
    %232 = tpu.matmul %229, %230, %cst_147 {dimension_numbers = #tpu.dot_dimension_numbers<[1], [1], [0], [0], [0, 0, 1, 0], [], []>} : vector<8x4xbf16>, vector<8x4xbf16>, vector<8x8xf32> -> vector<8x8xf32>
    %c6 = arith.constant 6 : index
    %c0_148 = arith.constant 0 : index
    %c0_149 = arith.constant 0 : index
    %233 = vector.load %arg13[%c6, %c0_148, %c0_149] : memref<8x8x1xf32, #tpu.memory_space<vmem>>, vector<1x8x1xf32>
    %234 = vector.shape_cast %233 : vector<1x8x1xf32> to vector<8x1xf32>
    %cst_150 = arith.constant dense<0xFF800000> : vector<8xf32>
    %235 = vector.multi_reduction <maximumf>, %232, %cst_150 [1] : vector<8x8xf32> to vector<8xf32>
    %236 = vector.shape_cast %235 : vector<8xf32> to vector<8x1xf32>
    %237 = arith.maximumf %234, %236 : vector<8x1xf32>
    %238 = arith.subf %234, %237 : vector<8x1xf32>
    %239 = math.exp %238 : vector<8x1xf32>
    %240 = vector.broadcast %237 : vector<8x1xf32> to vector<8x8xf32>
    %241 = arith.subf %232, %240 : vector<8x8xf32>
    %242 = math.exp %241 : vector<8x8xf32>
    %c6_151 = arith.constant 6 : index
    %c0_152 = arith.constant 0 : index
    %c0_153 = arith.constant 0 : index
    %243 = vector.load %arg14[%c6_151, %c0_152, %c0_153] : memref<8x8x1xf32, #tpu.memory_space<vmem>>, vector<1x8x1xf32>
    %244 = vector.shape_cast %243 : vector<1x8x1xf32> to vector<8x1xf32>
    %245 = arith.mulf %239, %244 : vector<8x1xf32>
    %cst_154 = arith.constant dense<0.000000e+00> : vector<8xf32>
    %246 = vector.multi_reduction <add>, %242, %cst_154 [1] : vector<8x8xf32> to vector<8xf32>
    %247 = vector.shape_cast %246 : vector<8xf32> to vector<8x1xf32>
    %248 = arith.addf %245, %247 : vector<8x1xf32>
    %c6_155 = arith.constant 6 : index
    %c0_156 = arith.constant 0 : index
    %c0_157 = arith.constant 0 : index
    %249 = vector.load %arg14[%c6_155, %c0_156, %c0_157] : memref<8x8x1xf32, #tpu.memory_space<vmem>>, vector<1x8x1xf32>
    %250 = vector.shape_cast %249 : vector<1x8x1xf32> to vector<8x1xf32>
    %251 = vector.shape_cast %248 : vector<8x1xf32> to vector<1x8x1xf32>
    tpu.vector_store %arg14[%c6_155, %c0_156, %c0_157], %251 {strides = array<i32>} : memref<8x8x1xf32, #tpu.memory_space<vmem>>, vector<1x8x1xf32>,
    %c6_158 = arith.constant 6 : index
    %c0_159 = arith.constant 0 : index
    %c0_160 = arith.constant 0 : index
    %252 = vector.load %arg15[%c6_158, %c0_159, %c0_160] : memref<8x8x4xf32, #tpu.memory_space<vmem>>, vector<1x8x4xf32>
    %253 = vector.shape_cast %252 : vector<1x8x4xf32> to vector<8x4xf32>
    %254 = vector.broadcast %239 : vector<8x1xf32> to vector<8x4xf32>
    %255 = arith.mulf %254, %253 : vector<8x4xf32>
    %256 = arith.truncf %242 : vector<8x8xf32> to vector<8x8xbf16>
    %cst_161 = arith.constant dense<0.000000e+00> : vector<8x4xf32>
    %257 = tpu.matmul %256, %231, %cst_161 {dimension_numbers = #tpu.dot_dimension_numbers<[1], [0], [0], [1], [0, 0, 1, 1], [], []>} : vector<8x8xbf16>, vector<8x4xbf16>, vector<8x4xf32> -> vector<8x4xf32>
    %258 = arith.addf %255, %257 : vector<8x4xf32>
    %c6_162 = arith.constant 6 : index
    %c0_163 = arith.constant 0 : index
    %c0_164 = arith.constant 0 : index
    %259 = vector.load %arg15[%c6_162, %c0_163, %c0_164] : memref<8x8x4xf32, #tpu.memory_space<vmem>>, vector<1x8x4xf32>
    %260 = vector.shape_cast %259 : vector<1x8x4xf32> to vector<8x4xf32>
    %261 = vector.shape_cast %258 : vector<8x4xf32> to vector<1x8x4xf32>
    tpu.vector_store %arg15[%c6_162, %c0_163, %c0_164], %261 {strides = array<i32>} : memref<8x8x4xf32, #tpu.memory_space<vmem>>, vector<1x8x4xf32>,
    %c6_165 = arith.constant 6 : index
    %c0_166 = arith.constant 0 : index
    %c0_167 = arith.constant 0 : index
    %262 = vector.load %arg13[%c6_165, %c0_166, %c0_167] : memref<8x8x1xf32, #tpu.memory_space<vmem>>, vector<1x8x1xf32>
    %263 = vector.shape_cast %262 : vector<1x8x1xf32> to vector<8x1xf32>
    %264 = vector.shape_cast %237 : vector<8x1xf32> to vector<1x8x1xf32>
    tpu.vector_store %arg13[%c6_165, %c0_166, %c0_167], %264 {strides = array<i32>} : memref<8x8x1xf32, #tpu.memory_space<vmem>>, vector<1x8x1xf32>,
    %c0_168 = arith.constant 0 : index
    %c28 = arith.constant 28 : index
    %265 = vector.load %arg11[%c0_168, %c28] : memref<8x32xbf16, #tpu.memory_space<vmem>>, vector<8x4xbf16>
    %266 = vector.extract_strided_slice %7 {offsets = [0, 28], sizes = [8, 4], strides = [1, 1]} : vector<8x32xbf16> to vector<8x4xbf16>
    %267 = vector.extract_strided_slice %12 {offsets = [0, 28], sizes = [8, 4], strides = [1, 1]} : vector<8x32xbf16> to vector<8x4xbf16>
    %cst_169 = arith.constant dense<0.000000e+00> : vector<8x8xf32>
    %268 = tpu.matmul %265, %266, %cst_169 {dimension_numbers = #tpu.dot_dimension_numbers<[1], [1], [0], [0], [0, 0, 1, 0], [], []>} : vector<8x4xbf16>, vector<8x4xbf16>, vector<8x8xf32> -> vector<8x8xf32>
    %c7 = arith.constant 7 : index
    %c0_170 = arith.constant 0 : index
    %c0_171 = arith.constant 0 : index
    %269 = vector.load %arg13[%c7, %c0_170, %c0_171] : memref<8x8x1xf32, #tpu.memory_space<vmem>>, vector<1x8x1xf32>
    %270 = vector.shape_cast %269 : vector<1x8x1xf32> to vector<8x1xf32>
    %cst_172 = arith.constant dense<0xFF800000> : vector<8xf32>
    %271 = vector.multi_reduction <maximumf>, %268, %cst_172 [1] : vector<8x8xf32> to vector<8xf32>
    %272 = vector.shape_cast %271 : vector<8xf32> to vector<8x1xf32>
    %273 = arith.maximumf %270, %272 : vector<8x1xf32>
    %274 = arith.subf %270, %273 : vector<8x1xf32>
    %275 = math.exp %274 : vector<8x1xf32>
    %276 = vector.broadcast %273 : vector<8x1xf32> to vector<8x8xf32>
    %277 = arith.subf %268, %276 : vector<8x8xf32>
    %278 = math.exp %277 : vector<8x8xf32>
    %c7_173 = arith.constant 7 : index
    %c0_174 = arith.constant 0 : index
    %c0_175 = arith.constant 0 : index
    %279 = vector.load %arg14[%c7_173, %c0_174, %c0_175] : memref<8x8x1xf32, #tpu.memory_space<vmem>>, vector<1x8x1xf32>
    %280 = vector.shape_cast %279 : vector<1x8x1xf32> to vector<8x1xf32>
    %281 = arith.mulf %275, %280 : vector<8x1xf32>
    %cst_176 = arith.constant dense<0.000000e+00> : vector<8xf32>
    %282 = vector.multi_reduction <add>, %278, %cst_176 [1] : vector<8x8xf32> to vector<8xf32>
    %283 = vector.shape_cast %282 : vector<8xf32> to vector<8x1xf32>
    %284 = arith.addf %281, %283 : vector<8x1xf32>
    %c7_177 = arith.constant 7 : index
    %c0_178 = arith.constant 0 : index
    %c0_179 = arith.constant 0 : index
    %285 = vector.load %arg14[%c7_177, %c0_178, %c0_179] : memref<8x8x1xf32, #tpu.memory_space<vmem>>, vector<1x8x1xf32>
    %286 = vector.shape_cast %285 : vector<1x8x1xf32> to vector<8x1xf32>
    %287 = vector.shape_cast %284 : vector<8x1xf32> to vector<1x8x1xf32>
    tpu.vector_store %arg14[%c7_177, %c0_178, %c0_179], %287 {strides = array<i32>} : memref<8x8x1xf32, #tpu.memory_space<vmem>>, vector<1x8x1xf32>,
    %c7_180 = arith.constant 7 : index
    %c0_181 = arith.constant 0 : index
    %c0_182 = arith.constant 0 : index
    %288 = vector.load %arg15[%c7_180, %c0_181, %c0_182] : memref<8x8x4xf32, #tpu.memory_space<vmem>>, vector<1x8x4xf32>
    %289 = vector.shape_cast %288 : vector<1x8x4xf32> to vector<8x4xf32>
    %290 = vector.broadcast %275 : vector<8x1xf32> to vector<8x4xf32>
    %291 = arith.mulf %290, %289 : vector<8x4xf32>
    %292 = arith.truncf %278 : vector<8x8xf32> to vector<8x8xbf16>
    %cst_183 = arith.constant dense<0.000000e+00> : vector<8x4xf32>
    %293 = tpu.matmul %292, %267, %cst_183 {dimension_numbers = #tpu.dot_dimension_numbers<[1], [0], [0], [1], [0, 0, 1, 1], [], []>} : vector<8x8xbf16>, vector<8x4xbf16>, vector<8x4xf32> -> vector<8x4xf32>
    %294 = arith.addf %291, %293 : vector<8x4xf32>
    %c7_184 = arith.constant 7 : index
    %c0_185 = arith.constant 0 : index
    %c0_186 = arith.constant 0 : index
    %295 = vector.load %arg15[%c7_184, %c0_185, %c0_186] : memref<8x8x4xf32, #tpu.memory_space<vmem>>, vector<1x8x4xf32>
    %296 = vector.shape_cast %295 : vector<1x8x4xf32> to vector<8x4xf32>
    %297 = vector.shape_cast %294 : vector<8x4xf32> to vector<1x8x4xf32>
    tpu.vector_store %arg15[%c7_184, %c0_185, %c0_186], %297 {strides = array<i32>} : memref<8x8x4xf32, #tpu.memory_space<vmem>>, vector<1x8x4xf32>,
    %c7_187 = arith.constant 7 : index
    %c0_188 = arith.constant 0 : index
    %c0_189 = arith.constant 0 : index
    %298 = vector.load %arg13[%c7_187, %c0_188, %c0_189] : memref<8x8x1xf32, #tpu.memory_space<vmem>>, vector<1x8x1xf32>
    %299 = vector.shape_cast %298 : vector<1x8x1xf32> to vector<8x1xf32>
    %300 = vector.shape_cast %273 : vector<8x1xf32> to vector<1x8x1xf32>
    tpu.vector_store %arg13[%c7_187, %c0_188, %c0_189], %300 {strides = array<i32>} : memref<8x8x1xf32, #tpu.memory_space<vmem>>, vector<1x8x1xf32>,
    %c0_i32_190 = arith.constant 0 : i32
    %301 = arith.cmpi eq, %arg2, %c0_i32_190 : i32
    %302 = arith.extui %301 : i1 to i32
    %c0_i32_191 = arith.constant 0 : i32
    %303 = arith.cmpi ne, %302, %c0_i32_191 : i32
    scf.if %303 {
      %c0_192 = arith.constant 0 : index
      %c0_193 = arith.constant 0 : index
      %c0_194 = arith.constant 0 : index
      %304 = vector.load %arg15[%c0_192, %c0_193, %c0_194] : memref<8x8x4xf32, #tpu.memory_space<vmem>>, vector<1x8x4xf32>
      %305 = vector.shape_cast %304 : vector<1x8x4xf32> to vector<8x4xf32>
      %c0_195 = arith.constant 0 : index
      %c0_196 = arith.constant 0 : index
      %c0_197 = arith.constant 0 : index
      %306 = vector.load %arg14[%c0_195, %c0_196, %c0_197] : memref<8x8x1xf32, #tpu.memory_space<vmem>>, vector<1x8x1xf32>
      %307 = vector.shape_cast %306 : vector<1x8x1xf32> to vector<8x1xf32>
      %308 = tpu.reciprocal %307 : vector<8x1xf32> -> vector<8x1xf32>
      %309 = vector.broadcast %308 : vector<8x1xf32> to vector<8x4xf32>
      %310 = arith.mulf %305, %309 : vector<8x4xf32>
      %311 = arith.truncf %310 : vector<8x4xf32> to vector<8x4xbf16>
      %c0_198 = arith.constant 0 : index
      %c0_199 = arith.constant 0 : index
      %312 = vector.load %arg12[%c0_198, %c0_199] : memref<8x32xbf16, #tpu.memory_space<vmem>>, vector<8x4xbf16>
      tpu.vector_store %arg12[%c0_198, %c0_199], %311 {strides = array<i32>} : memref<8x32xbf16, #tpu.memory_space<vmem>>, vector<8x4xbf16>,
      %c1_200 = arith.constant 1 : index
      %c0_201 = arith.constant 0 : index
      %c0_202 = arith.constant 0 : index
      %313 = vector.load %arg15[%c1_200, %c0_201, %c0_202] : memref<8x8x4xf32, #tpu.memory_space<vmem>>, vector<1x8x4xf32>
      %314 = vector.shape_cast %313 : vector<1x8x4xf32> to vector<8x4xf32>
      %c1_203 = arith.constant 1 : index
      %c0_204 = arith.constant 0 : index
      %c0_205 = arith.constant 0 : index
      %315 = vector.load %arg14[%c1_203, %c0_204, %c0_205] : memref<8x8x1xf32, #tpu.memory_space<vmem>>, vector<1x8x1xf32>
      %316 = vector.shape_cast %315 : vector<1x8x1xf32> to vector<8x1xf32>
      %317 = tpu.reciprocal %316 : vector<8x1xf32> -> vector<8x1xf32>
      %318 = vector.broadcast %317 : vector<8x1xf32> to vector<8x4xf32>
      %319 = arith.mulf %314, %318 : vector<8x4xf32>
      %320 = arith.truncf %319 : vector<8x4xf32> to vector<8x4xbf16>
      %c0_206 = arith.constant 0 : index
      %c4_207 = arith.constant 4 : index
      %321 = vector.load %arg12[%c0_206, %c4_207] : memref<8x32xbf16, #tpu.memory_space<vmem>>, vector<8x4xbf16>
      tpu.vector_store %arg12[%c0_206, %c4_207], %320 {strides = array<i32>} : memref<8x32xbf16, #tpu.memory_space<vmem>>, vector<8x4xbf16>,
      %c2_208 = arith.constant 2 : index
      %c0_209 = arith.constant 0 : index
      %c0_210 = arith.constant 0 : index
      %322 = vector.load %arg15[%c2_208, %c0_209, %c0_210] : memref<8x8x4xf32, #tpu.memory_space<vmem>>, vector<1x8x4xf32>
      %323 = vector.shape_cast %322 : vector<1x8x4xf32> to vector<8x4xf32>
      %c2_211 = arith.constant 2 : index
      %c0_212 = arith.constant 0 : index
      %c0_213 = arith.constant 0 : index
      %324 = vector.load %arg14[%c2_211, %c0_212, %c0_213] : memref<8x8x1xf32, #tpu.memory_space<vmem>>, vector<1x8x1xf32>
      %325 = vector.shape_cast %324 : vector<1x8x1xf32> to vector<8x1xf32>
      %326 = tpu.reciprocal %325 : vector<8x1xf32> -> vector<8x1xf32>
      %327 = vector.broadcast %326 : vector<8x1xf32> to vector<8x4xf32>
      %328 = arith.mulf %323, %327 : vector<8x4xf32>
      %329 = arith.truncf %328 : vector<8x4xf32> to vector<8x4xbf16>
      %c0_214 = arith.constant 0 : index
      %c8_215 = arith.constant 8 : index
      %330 = vector.load %arg12[%c0_214, %c8_215] : memref<8x32xbf16, #tpu.memory_space<vmem>>, vector<8x4xbf16>
      tpu.vector_store %arg12[%c0_214, %c8_215], %329 {strides = array<i32>} : memref<8x32xbf16, #tpu.memory_space<vmem>>, vector<8x4xbf16>,
      %c3_216 = arith.constant 3 : index
      %c0_217 = arith.constant 0 : index
      %c0_218 = arith.constant 0 : index
      %331 = vector.load %arg15[%c3_216, %c0_217, %c0_218] : memref<8x8x4xf32, #tpu.memory_space<vmem>>, vector<1x8x4xf32>
      %332 = vector.shape_cast %331 : vector<1x8x4xf32> to vector<8x4xf32>
      %c3_219 = arith.constant 3 : index
      %c0_220 = arith.constant 0 : index
      %c0_221 = arith.constant 0 : index
      %333 = vector.load %arg14[%c3_219, %c0_220, %c0_221] : memref<8x8x1xf32, #tpu.memory_space<vmem>>, vector<1x8x1xf32>
      %334 = vector.shape_cast %333 : vector<1x8x1xf32> to vector<8x1xf32>
      %335 = tpu.reciprocal %334 : vector<8x1xf32> -> vector<8x1xf32>
      %336 = vector.broadcast %335 : vector<8x1xf32> to vector<8x4xf32>
      %337 = arith.mulf %332, %336 : vector<8x4xf32>
      %338 = arith.truncf %337 : vector<8x4xf32> to vector<8x4xbf16>
      %c0_222 = arith.constant 0 : index
      %c12_223 = arith.constant 12 : index
      %339 = vector.load %arg12[%c0_222, %c12_223] : memref<8x32xbf16, #tpu.memory_space<vmem>>, vector<8x4xbf16>
      tpu.vector_store %arg12[%c0_222, %c12_223], %338 {strides = array<i32>} : memref<8x32xbf16, #tpu.memory_space<vmem>>, vector<8x4xbf16>,
      %c4_224 = arith.constant 4 : index
      %c0_225 = arith.constant 0 : index
      %c0_226 = arith.constant 0 : index
      %340 = vector.load %arg15[%c4_224, %c0_225, %c0_226] : memref<8x8x4xf32, #tpu.memory_space<vmem>>, vector<1x8x4xf32>
      %341 = vector.shape_cast %340 : vector<1x8x4xf32> to vector<8x4xf32>
      %c4_227 = arith.constant 4 : index
      %c0_228 = arith.constant 0 : index
      %c0_229 = arith.constant 0 : index
      %342 = vector.load %arg14[%c4_227, %c0_228, %c0_229] : memref<8x8x1xf32, #tpu.memory_space<vmem>>, vector<1x8x1xf32>
      %343 = vector.shape_cast %342 : vector<1x8x1xf32> to vector<8x1xf32>
      %344 = tpu.reciprocal %343 : vector<8x1xf32> -> vector<8x1xf32>
      %345 = vector.broadcast %344 : vector<8x1xf32> to vector<8x4xf32>
      %346 = arith.mulf %341, %345 : vector<8x4xf32>
      %347 = arith.truncf %346 : vector<8x4xf32> to vector<8x4xbf16>
      %c0_230 = arith.constant 0 : index
      %c16_231 = arith.constant 16 : index
      %348 = vector.load %arg12[%c0_230, %c16_231] : memref<8x32xbf16, #tpu.memory_space<vmem>>, vector<8x4xbf16>
      tpu.vector_store %arg12[%c0_230, %c16_231], %347 {strides = array<i32>} : memref<8x32xbf16, #tpu.memory_space<vmem>>, vector<8x4xbf16>,
      %c5_232 = arith.constant 5 : index
      %c0_233 = arith.constant 0 : index
      %c0_234 = arith.constant 0 : index
      %349 = vector.load %arg15[%c5_232, %c0_233, %c0_234] : memref<8x8x4xf32, #tpu.memory_space<vmem>>, vector<1x8x4xf32>
      %350 = vector.shape_cast %349 : vector<1x8x4xf32> to vector<8x4xf32>
      %c5_235 = arith.constant 5 : index
      %c0_236 = arith.constant 0 : index
      %c0_237 = arith.constant 0 : index
      %351 = vector.load %arg14[%c5_235, %c0_236, %c0_237] : memref<8x8x1xf32, #tpu.memory_space<vmem>>, vector<1x8x1xf32>
      %352 = vector.shape_cast %351 : vector<1x8x1xf32> to vector<8x1xf32>
      %353 = tpu.reciprocal %352 : vector<8x1xf32> -> vector<8x1xf32>
      %354 = vector.broadcast %353 : vector<8x1xf32> to vector<8x4xf32>
      %355 = arith.mulf %350, %354 : vector<8x4xf32>
      %356 = arith.truncf %355 : vector<8x4xf32> to vector<8x4xbf16>
      %c0_238 = arith.constant 0 : index
      %c20_239 = arith.constant 20 : index
      %357 = vector.load %arg12[%c0_238, %c20_239] : memref<8x32xbf16, #tpu.memory_space<vmem>>, vector<8x4xbf16>
      tpu.vector_store %arg12[%c0_238, %c20_239], %356 {strides = array<i32>} : memref<8x32xbf16, #tpu.memory_space<vmem>>, vector<8x4xbf16>,
      %c6_240 = arith.constant 6 : index
      %c0_241 = arith.constant 0 : index
      %c0_242 = arith.constant 0 : index
      %358 = vector.load %arg15[%c6_240, %c0_241, %c0_242] : memref<8x8x4xf32, #tpu.memory_space<vmem>>, vector<1x8x4xf32>
      %359 = vector.shape_cast %358 : vector<1x8x4xf32> to vector<8x4xf32>
      %c6_243 = arith.constant 6 : index
      %c0_244 = arith.constant 0 : index
      %c0_245 = arith.constant 0 : index
      %360 = vector.load %arg14[%c6_243, %c0_244, %c0_245] : memref<8x8x1xf32, #tpu.memory_space<vmem>>, vector<1x8x1xf32>
      %361 = vector.shape_cast %360 : vector<1x8x1xf32> to vector<8x1xf32>
      %362 = tpu.reciprocal %361 : vector<8x1xf32> -> vector<8x1xf32>
      %363 = vector.broadcast %362 : vector<8x1xf32> to vector<8x4xf32>
      %364 = arith.mulf %359, %363 : vector<8x4xf32>
      %365 = arith.truncf %364 : vector<8x4xf32> to vector<8x4xbf16>
      %c0_246 = arith.constant 0 : index
      %c24_247 = arith.constant 24 : index
      %366 = vector.load %arg12[%c0_246, %c24_247] : memref<8x32xbf16, #tpu.memory_space<vmem>>, vector<8x4xbf16>
      tpu.vector_store %arg12[%c0_246, %c24_247], %365 {strides = array<i32>} : memref<8x32xbf16, #tpu.memory_space<vmem>>, vector<8x4xbf16>,
      %c7_248 = arith.constant 7 : index
      %c0_249 = arith.constant 0 : index
      %c0_250 = arith.constant 0 : index
      %367 = vector.load %arg15[%c7_248, %c0_249, %c0_250] : memref<8x8x4xf32, #tpu.memory_space<vmem>>, vector<1x8x4xf32>
      %368 = vector.shape_cast %367 : vector<1x8x4xf32> to vector<8x4xf32>
      %c7_251 = arith.constant 7 : index
      %c0_252 = arith.constant 0 : index
      %c0_253 = arith.constant 0 : index
      %369 = vector.load %arg14[%c7_251, %c0_252, %c0_253] : memref<8x8x1xf32, #tpu.memory_space<vmem>>, vector<1x8x1xf32>
      %370 = vector.shape_cast %369 : vector<1x8x1xf32> to vector<8x1xf32>
      %371 = tpu.reciprocal %370 : vector<8x1xf32> -> vector<8x1xf32>
      %372 = vector.broadcast %371 : vector<8x1xf32> to vector<8x4xf32>
      %373 = arith.mulf %368, %372 : vector<8x4xf32>
      %374 = arith.truncf %373 : vector<8x4xf32> to vector<8x4xbf16>
      %c0_254 = arith.constant 0 : index
      %c28_255 = arith.constant 28 : index
      %375 = vector.load %arg12[%c0_254, %c28_255] : memref<8x32xbf16, #tpu.memory_space<vmem>>, vector<8x4xbf16>
      tpu.vector_store %arg12[%c0_254, %c28_255], %374 {strides = array<i32>} : memref<8x32xbf16, #tpu.memory_space<vmem>>, vector<8x4xbf16>,
      %c0_256 = arith.constant 0 : index
      %c0_257 = arith.constant 0 : index
      %376 = vector.load %arg12[%c0_256, %c0_257] : memref<8x32xbf16, #tpu.memory_space<vmem>>, vector<8x32xbf16>
      %c0_258 = arith.constant 0 : index
      %c0_259 = arith.constant 0 : index
      %377 = vector.load %arg8[%c0_258, %c0_259] : memref<32x32xbf16, #tpu.memory_space<vmem>>, vector<32x32xbf16>
      %cst_260 = arith.constant dense<0.000000e+00> : vector<8x32xf32>
      %378 = tpu.matmul %376, %377, %cst_260 {dimension_numbers = #tpu.dot_dimension_numbers<[1], [0], [0], [1], [0, 0, 1, 1], [], []>} : vector<8x32xbf16>, vector<32x32xbf16>, vector<8x32xf32> -> vector<8x32xf32>
      %c0_261 = arith.constant 0 : index
      %c0_262 = arith.constant 0 : index
      %379 = vector.load %arg9[%c0_261, %c0_262] : memref<1x32xf32, #tpu.memory_space<vmem>>, vector<1x32xf32>
      %380 = vector.broadcast %379 : vector<1x32xf32> to vector<8x32xf32>
      %381 = arith.addf %378, %380 : vector<8x32xf32>
      %c0_263 = arith.constant 0 : index
      %c0_264 = arith.constant 0 : index
      %c0_265 = arith.constant 0 : index
      %382 = vector.load %arg10[%c0_263, %c0_264, %c0_265] : memref<1x8x32xf32, #tpu.memory_space<vmem>>, vector<1x8x32xf32>
      %383 = vector.shape_cast %382 : vector<1x8x32xf32> to vector<8x32xf32>
      %384 = vector.shape_cast %381 : vector<8x32xf32> to vector<1x8x32xf32>
      tpu.vector_store %arg10[%c0_263, %c0_264, %c0_265], %384 {strides = array<i32>} : memref<1x8x32xf32, #tpu.memory_space<vmem>>, vector<1x8x32xf32>,
    } else {
    }
    return
  }
  func.func @transform_0(%arg0: i32, %arg1: i32, %arg2: i32) -> (i32, i32, i32) {
    %c0_i32 = arith.constant 0 : i32
    %c0_i32_0 = arith.constant 0 : i32
    return %arg0, %arg1, %c0_i32 : i32, i32, i32
  }
  func.func @transform_1(%arg0: i32, %arg1: i32, %arg2: i32) -> (i32, i32, i32) {
    %c0_i32 = arith.constant 0 : i32
    %c0_i32_0 = arith.constant 0 : i32
    return %arg0, %arg2, %c0_i32 : i32, i32, i32
  }
  func.func @transform_2(%arg0: i32, %arg1: i32, %arg2: i32) -> (i32, i32) {
    %c0_i32 = arith.constant 0 : i32
    %c0_i32_0 = arith.constant 0 : i32
    %c0_i32_1 = arith.constant 0 : i32
    return %c0_i32, %c0_i32_0 : i32, i32
  }
  func.func @transform_3(%arg0: i32, %arg1: i32, %arg2: i32) -> (i32, i32) {
    %c0_i32 = arith.constant 0 : i32
    %c0_i32_0 = arith.constant 0 : i32
    %c0_i32_1 = arith.constant 0 : i32
    return %c0_i32, %c0_i32_0 : i32, i32
  }
  func.func @transform_4(%arg0: i32, %arg1: i32, %arg2: i32) -> (i32, i32) {
    %c0_i32 = arith.constant 0 : i32
    %c0_i32_0 = arith.constant 0 : i32
    %c0_i32_1 = arith.constant 0 : i32
    return %c0_i32, %c0_i32_0 : i32, i32
  }
  func.func @transform_5(%arg0: i32, %arg1: i32, %arg2: i32) -> (i32, i32) {
    %c0_i32 = arith.constant 0 : i32
    %c0_i32_0 = arith.constant 0 : i32
    %c0_i32_1 = arith.constant 0 : i32
    return %c0_i32, %c0_i32_0 : i32, i32
  }
  func.func @transform_6(%arg0: i32, %arg1: i32, %arg2: i32) -> (i32, i32) {
    %c0_i32 = arith.constant 0 : i32
    %c0_i32_0 = arith.constant 0 : i32
    %c0_i32_1 = arith.constant 0 : i32
    return %c0_i32, %c0_i32_0 : i32, i32
  }
  func.func @transform_7(%arg0: i32, %arg1: i32, %arg2: i32) -> (i32, i32, i32) {
    %c0_i32 = arith.constant 0 : i32
    %c0_i32_0 = arith.constant 0 : i32
    return %arg0, %arg1, %c0_i32 : i32, i32, i32
  }
}

</mosaic_0001>

<llo_original>
// kernel: tpu_custom_call.1
$region0: #{tpu_custom_call.1}
  #allocation0 [shape = 'u32[]', space=smem, size = 0x4, offset = 0x4, fixed_abs, tag = 'smem constant byte address 0x4 - core index']
  #allocation1 [shape = 'u32[144,128]{1,0:T(1,128)}', space=vmem, size = 0x12000, scoped, tag = 'internal scratch']
  #allocation2 [shape = 'bf16[8,32]{1,0:T(8,128)(2,1)}', space=vmem, size = 0x800, scoped, tag = 'scratch operand']
  #allocation3 [shape = 'bf16[8,32]{1,0:T(8,128)(2,1)}', space=vmem, size = 0x800, scoped, tag = 'scratch operand']
  #allocation4 [shape = 'f32[8,8,1]{2,1,0:T(8,128)}', space=vmem, size = 0x8000, scoped, tag = 'scratch operand']
  #allocation5 [shape = 'f32[8,8,1]{2,1,0:T(8,128)}', space=vmem, size = 0x8000, scoped, tag = 'scratch operand']
  #allocation6 [shape = 'f32[8,8,4]{2,1,0:T(8,128)}', space=vmem, size = 0x8000, scoped, tag = 'scratch operand']
  %s0 = inlined_call_operand.hbm [shape: bf16[2,8,32], index: 0, kind: input, shape index: {}]
  %s1 = inlined_call_operand.hbm [shape: bf16[2,8,32], index: 1, kind: input, shape index: {}]
  %s2 = inlined_call_operand.hbm [shape: bf16[32,32], index: 2, kind: input, shape index: {}]
  %s3 = inlined_call_operand.hbm [shape: bf16[32,32], index: 3, kind: input, shape index: {}]
  %s4 = inlined_call_operand.hbm [shape: bf16[32,32], index: 4, kind: input, shape index: {}]
  %s5 = inlined_call_operand.vmem [shape: bf16[32,32], index: 5, kind: input, shape index: {}]
  %s6 = inlined_call_operand.vmem [shape: f32[1,32], index: 6, kind: input, shape index: {}]
  %s7 = inlined_call_operand.hbm [shape: f32[2,8,32], index: 7, kind: output, shape index: {}]
  %s8 = sld [smem:[#allocation0]]
  $region89: #{tpu_custom_call.1} parent=0
    _
  %s10 = ssub.s32 1, %s8
  %s11 = scalar_select 0, %s10, %s8
  $region1: #{tpu_custom_call.1} parent=0
    #allocation7 [shape = 'u8[4096]{0}', space=vmem, size = 0x1000, scoped, tag = 'input window, operand 0']
    #allocation8 [shape = 's32[2]{0}', space=sflag, size = 0x8, scoped, tag = 'scoped memory for tpu_custom_call.1']
    #allocation9 [shape = 's32[2]{0}', space=sflag, size = 0x8, scoped, tag = 'scoped memory for tpu_custom_call.1']
    #allocation10 [shape = 'u8[4096]{0}', space=vmem, size = 0x1000, scoped, tag = 'input window, operand 1']
    #allocation11 [shape = 's32[2]{0}', space=sflag, size = 0x8, scoped, tag = 'scoped memory for tpu_custom_call.1']
    #allocation12 [shape = 'u8[8192]{0}', space=vmem, size = 0x2000, scoped, tag = 'input window, operand 2, single buffered']
    #allocation13 [shape = 'u8[8192]{0}', space=vmem, size = 0x2000, scoped, tag = 'input window, operand 3, single buffered']
    #allocation14 [shape = 's32[1]{0}', space=sflag, size = 0x4, scoped, tag = 'scoped memory for tpu_custom_call.1']
    #allocation15 [shape = 'u8[8192]{0}', space=vmem, size = 0x2000, scoped, tag = 'input window, operand 4, single buffered']
    #allocation16 [shape = 'u8[8192]{0}', space=vmem, size = 0x2000, scoped, tag = 'output window, operand 0']
    %12 = vsyncpa [#allocation8], 0
    %s13 = scalar_lea.sflag [#allocation8], 1
    %14 = vsyncpa %s13, 0
    %15 = vsyncpa [#allocation11], 0
    %s16 = scalar_lea.sflag [#allocation11], 1
    %17 = vsyncpa %s16, 0
    %18 = vsyncpa [#allocation14], 0
    %19 = vsyncpa [#allocation9], 0
    %s20 = scalar_lea.sflag [#allocation9], 1
    %21 = vsyncpa %s20, 0
    loop: start=0, step=1, limit=4
    $region2: #{tpu_custom_call.1} parent=1 // loop_pre_header
      _
    $region3: #{tpu_custom_call.1} parent=1 // loop_header
      %s23 = sphi 0, %s27
      %p24 = scmp.ge.s32.totalorder %s23, 4
      %s30 = sphi 0, %s49
      %s31 = sphi 0, %s45
      %s32 = sphi 0, %s41
      %s33 = sphi 0, %s30
      %s34 = sphi 0, %s31
      %s35 = sphi 0, %s32
      %s36 = sphi 0, %s33
      %s37 = sphi 0, %s34
      %s38 = sphi 0, %s35
      %s54 = sphi 0, %s56
      %s57 = sphi 0, %s54
      %s58 = sphi 0, %s57
      %s74 = sphi 0, %s58
      %s82 = sphi 0, %s84
      %s85 = sphi 0, %s82
      %s86 = sphi 0, %s85
      %s102 = sphi 0, %s86
      %s106 = sphi 0, %s106
      %s108 = sphi 0, %s106
      %s109 = sphi 0, %s108
      %s123 = sphi 0, %s109
      %s127 = sphi 0, %s127
      %s129 = sphi 0, %s127
      %s130 = sphi 0, %s129
      %s144 = sphi 0, %s130
      %s148 = sphi 0, %s148
      %s150 = sphi 0, %s148
      %s151 = sphi 0, %s150
      %s165 = sphi 0, %s151
      %s169 = sphi 0, %s169
      %s171 = sphi 0, %s169
      %s172 = sphi 0, %s171
      %s186 = sphi 0, %s172
      %s190 = sphi 0, %s190
      %s192 = sphi 0, %s190
      %s193 = sphi 0, %s192
      %s207 = sphi 0, %s193
      %s215 = sphi 0, %s217
      %s218 = sphi 0, %s215
      %s219 = sphi 0, %s218
      %s235 = sphi 0, %s219
    $region4: #{tpu_custom_call.1} parent=1 // loop_header_branch
      %26 = sbr.rel (%p24) target = $region8
    $region5: #{tpu_custom_call.1} parent=1 // loop_body
      %s28 = ssub.s32 %s23, 1
      %s29 = ssub.s32 %s23, 2
      %s39 = sadd.s32 1, %s32
      %p40 = scmp.ge.s32.totalorder %s39, 1
      %s41 = scalar_select %p40, 0, %s39
      %s42 = sadd.s32 1, %s31
      %s43 = scalar_select %p40, %s42, %s31
      %p44 = scmp.ge.s32.totalorder %s43, 1
      %s45 = scalar_select %p44, 0, %s43
      %s46 = sadd.s32 1, %s30
      %s47 = scalar_select %p44, %s46, %s30
      %p48 = scmp.ge.s32.totalorder %s47, 2
      %s49 = scalar_select %p48, 0, %s47
      %s50 = ssub.s32 %s30, %s49
      %s51 = ssub.s32 %s31, %s45
      %s52 = sor.u32 %s50, %s51
      %p53 = scmp.eq.s32.totalorder %s52, 0
      %s55 = sadd.s32 %s54, 1
      %s56 = scalar_select %p53, %s54, %s55
      %p59 = pneg %p53
      %p60 = scmp.eq.s32.totalorder %s23, 1
      %p61 = por %p59, %p60
      %p62 = scmp.ne.s32.totalorder %s54, %s57
      %p63 = scmp.eq.s32.totalorder %s23, 0
      %p64 = por %p62, %p63
      %p65 = scmp.ne.s32.totalorder %s54, %s57
      %p66 = scmp.eq.s32.totalorder %s28, 1
      %p67 = por %p65, %p66
      %p68 = scmp.ne.s32.totalorder %s57, %s58
      %p69 = scmp.eq.s32.totalorder %s28, 0
      %p70 = por %p68, %p69
      %p71 = scmp.ne.s32.totalorder %s57, %s58
      %p72 = scmp.eq.s32.totalorder %s29, 1
      %p73 = por %p71, %p72
      %p75 = scmp.ne.s32.totalorder %s58, %s74
      %p76 = scmp.eq.s32.totalorder %s29, 0
      %p77 = por %p75, %p76
      %s78 = ssub.s32 %s30, %s49
      %s79 = ssub.s32 %s32, %s41
      %s80 = sor.u32 %s78, %s79
      %p81 = scmp.eq.s32.totalorder %s80, 0
      %s83 = sadd.s32 %s82, 1
      %s84 = scalar_select %p81, %s82, %s83
      %p87 = pneg %p81
      %p88 = scmp.eq.s32.totalorder %s23, 1
      %p89 = por %p87, %p88
      %p90 = scmp.ne.s32.totalorder %s82, %s85
      %p91 = scmp.eq.s32.totalorder %s23, 0
      %p92 = por %p90, %p91
      %p93 = scmp.ne.s32.totalorder %s82, %s85
      %p94 = scmp.eq.s32.totalorder %s28, 1
      %p95 = por %p93, %p94
      %p96 = scmp.ne.s32.totalorder %s85, %s86
      %p97 = scmp.eq.s32.totalorder %s28, 0
      %p98 = por %p96, %p97
      %p99 = scmp.ne.s32.totalorder %s85, %s86
      %p100 = scmp.eq.s32.totalorder %s29, 1
      %p101 = por %p99, %p100
      %p103 = scmp.ne.s32.totalorder %s86, %s102
      %p104 = scmp.eq.s32.totalorder %s29, 0
      %p105 = por %p103, %p104
      %s107 = sadd.s32 %s106, 1
      %p110 = scmp.eq.s32.totalorder %s23, 1
      %p111 = scmp.ne.s32.totalorder %s106, %s108
      %p112 = scmp.eq.s32.totalorder %s23, 0
      %p113 = por %p111, %p112
      %p114 = scmp.ne.s32.totalorder %s106, %s108
      %p115 = scmp.eq.s32.totalorder %s28, 1
      %p116 = por %p114, %p115
      %p117 = scmp.ne.s32.totalorder %s108, %s109
      %p118 = scmp.eq.s32.totalorder %s28, 0
      %p119 = por %p117, %p118
      %p120 = scmp.ne.s32.totalorder %s108, %s109
      %p121 = scmp.eq.s32.totalorder %s29, 1
      %p122 = por %p120, %p121
      %p124 = scmp.ne.s32.totalorder %s109, %s123
      %p125 = scmp.eq.s32.totalorder %s29, 0
      %p126 = por %p124, %p125
      %s128 = sadd.s32 %s127, 1
      %p131 = scmp.eq.s32.totalorder %s23, 1
      %p132 = scmp.ne.s32.totalorder %s127, %s129
      %p133 = scmp.eq.s32.totalorder %s23, 0
      %p134 = por %p132, %p133
      %p135 = scmp.ne.s32.totalorder %s127, %s129
      %p136 = scmp.eq.s32.totalorder %s28, 1
      %p137 = por %p135, %p136
      %p138 = scmp.ne.s32.totalorder %s129, %s130
      %p139 = scmp.eq.s32.totalorder %s28, 0
      %p140 = por %p138, %p139
      %p141 = scmp.ne.s32.totalorder %s129, %s130
      %p142 = scmp.eq.s32.totalorder %s29, 1
      %p143 = por %p141, %p142
      %p145 = scmp.ne.s32.totalorder %s130, %s144
      %p146 = scmp.eq.s32.totalorder %s29, 0
      %p147 = por %p145, %p146
      %s149 = sadd.s32 %s148, 1
      %p152 = scmp.eq.s32.totalorder %s23, 1
      %p153 = scmp.ne.s32.totalorder %s148, %s150
      %p154 = scmp.eq.s32.totalorder %s23, 0
      %p155 = por %p153, %p154
      %p156 = scmp.ne.s32.totalorder %s148, %s150
      %p157 = scmp.eq.s32.totalorder %s28, 1
      %p158 = por %p156, %p157
      %p159 = scmp.ne.s32.totalorder %s150, %s151
      %p160 = scmp.eq.s32.totalorder %s28, 0
      %p161 = por %p159, %p160
      %p162 = scmp.ne.s32.totalorder %s150, %s151
      %p163 = scmp.eq.s32.totalorder %s29, 1
      %p164 = por %p162, %p163
      %p166 = scmp.ne.s32.totalorder %s151, %s165
      %p167 = scmp.eq.s32.totalorder %s29, 0
      %p168 = por %p166, %p167
      %s170 = sadd.s32 %s169, 1
      %p173 = scmp.eq.s32.totalorder %s23, 1
      %p174 = scmp.ne.s32.totalorder %s169, %s171
      %p175 = scmp.eq.s32.totalorder %s23, 0
      %p176 = por %p174, %p175
      %p177 = scmp.ne.s32.totalorder %s169, %s171
      %p178 = scmp.eq.s32.totalorder %s28, 1
      %p179 = por %p177, %p178
      %p180 = scmp.ne.s32.totalorder %s171, %s172
      %p181 = scmp.eq.s32.totalorder %s28, 0
      %p182 = por %p180, %p181
      %p183 = scmp.ne.s32.totalorder %s171, %s172
      %p184 = scmp.eq.s32.totalorder %s29, 1
      %p185 = por %p183, %p184
      %p187 = scmp.ne.s32.totalorder %s172, %s186
      %p188 = scmp.eq.s32.totalorder %s29, 0
      %p189 = por %p187, %p188
      %s191 = sadd.s32 %s190, 1
      %p194 = scmp.eq.s32.totalorder %s23, 1
      %p195 = scmp.ne.s32.totalorder %s190, %s192
      %p196 = scmp.eq.s32.totalorder %s23, 0
      %p197 = por %p195, %p196
      %p198 = scmp.ne.s32.totalorder %s190, %s192
      %p199 = scmp.eq.s32.totalorder %s28, 1
      %p200 = por %p198, %p199
      %p201 = scmp.ne.s32.totalorder %s192, %s193
      %p202 = scmp.eq.s32.totalorder %s28, 0
      %p203 = por %p201, %p202
      %p204 = scmp.ne.s32.totalorder %s192, %s193
      %p205 = scmp.eq.s32.totalorder %s29, 1
      %p206 = por %p204, %p205
      %p208 = scmp.ne.s32.totalorder %s193, %s207
      %p209 = scmp.eq.s32.totalorder %s29, 0
      %p210 = por %p208, %p209
      %s211 = ssub.s32 %s30, %s49
      %s212 = ssub.s32 %s31, %s45
      %s213 = sor.u32 %s211, %s212
      %p214 = scmp.eq.s32.totalorder %s213, 0
      %s216 = sadd.s32 %s215, 1
      %s217 = scalar_select %p214, %s215, %s216
      %p220 = pneg %p214
      %p221 = scmp.eq.s32.totalorder %s23, 1
      %p222 = por %p220, %p221
      %p223 = scmp.ne.s32.totalorder %s215, %s218
      %p224 = scmp.eq.s32.totalorder %s23, 0
      %p225 = por %p223, %p224
      %p226 = scmp.ne.s32.totalorder %s215, %s218
      %p227 = scmp.eq.s32.totalorder %s28, 1
      %p228 = por %p226, %p227
      %p229 = scmp.ne.s32.totalorder %s218, %s219
      %p230 = scmp.eq.s32.totalorder %s28, 0
      %p231 = por %p229, %p230
      %p232 = scmp.ne.s32.totalorder %s218, %s219
      %p233 = scmp.eq.s32.totalorder %s29, 1
      %p234 = por %p232, %p233
      %p236 = scmp.ne.s32.totalorder %s219, %s235
      %p237 = scmp.eq.s32.totalorder %s29, 0
      %p238 = por %p236, %p237
      %p239 = scmp.le.s32.totalorder 1, %s23
      %p240 = scmp.lt.s32.totalorder %s23, 3
      %p241 = pnand %p239, %p240
      %p242 = pneg %p241
      // Predicated region
      $region9: #{tpu_custom_call.1} parent=5 // pred_check
        _
      $region10: #{tpu_custom_call.1} parent=5 // pred_check_branch
        %244 = sbr.rel (%p241) target = $region12
      $region11: #{tpu_custom_call.1} parent=5 // pred_region
        %s245 = ssub.s32 %s23, 1
        // Predicated region
        $region13: #{tpu_custom_call.1} parent=11 // pred_check
          %p246 = pneg %p119
        $region14: #{tpu_custom_call.1} parent=11 // pred_check_branch
          %248 = sbr.rel (%p246) target = $region16
        $region15: #{tpu_custom_call.1} parent=11 // pred_region
          %s250 = ssub.s32 256, 256
          %251 = vsyncadd [#allocation11], %s250
          %s252 = sshll.u32 [#allocation12], 4
          %s253 = int_to_ptr.vmem [resolvable:$true] %s252
          %258 = dma.hbm_to_vmem [thread:$0]  %s2, 256, %s253, [#allocation11], 64, 64, 4
        $region16: #{tpu_custom_call.1} parent=11 // pred_fallthru
          _
        // Predicated region
        $region17: #{tpu_custom_call.1} parent=11 // pred_check
          %p259 = pneg %p140
        $region18: #{tpu_custom_call.1} parent=11 // pred_check_branch
          %261 = sbr.rel (%p259) target = $region20
        $region19: #{tpu_custom_call.1} parent=11 // pred_region
          %s263 = ssub.s32 256, 256
          %264 = vsyncadd [#allocation14], %s263
          %s265 = sshll.u32 [#allocation13], 4
          %s266 = int_to_ptr.vmem [resolvable:$true] %s265
          %271 = dma.hbm_to_vmem [thread:$0]  %s3, 256, %s266, [#allocation14], 64, 64, 4
        $region20: #{tpu_custom_call.1} parent=11 // pred_fallthru
          _
        // Predicated region
        $region21: #{tpu_custom_call.1} parent=11 // pred_check
          %p272 = pneg %p161
        $region22: #{tpu_custom_call.1} parent=11 // pred_check_branch
          %274 = sbr.rel (%p272) target = $region24
        $region23: #{tpu_custom_call.1} parent=11 // pred_region
          %s276 = ssub.s32 256, 256
          %277 = vsyncadd [#allocation14], %s276
          %s278 = sshll.u32 [#allocation15], 4
          %s279 = int_to_ptr.vmem [resolvable:$true] %s278
          %284 = dma.hbm_to_vmem [thread:$0]  %s4, 256, %s279, [#allocation14], 64, 64, 4
        $region24: #{tpu_custom_call.1} parent=11 // pred_fallthru
          _
        // Predicated region
        $region25: #{tpu_custom_call.1} parent=11 // pred_check
          %p285 = pneg %p182
        $region26: #{tpu_custom_call.1} parent=11 // pred_check_branch
          %287 = sbr.rel (%p285) target = $region28
        $region27: #{tpu_custom_call.1} parent=11 // pred_region
          _
        $region28: #{tpu_custom_call.1} parent=11 // pred_fallthru
          _
        // Predicated region
        $region29: #{tpu_custom_call.1} parent=11 // pred_check
          %p288 = pneg %p203
        $region30: #{tpu_custom_call.1} parent=11 // pred_check_branch
          %290 = sbr.rel (%p288) target = $region32
        $region31: #{tpu_custom_call.1} parent=11 // pred_region
          _
        $region32: #{tpu_custom_call.1} parent=11 // pred_fallthru
          _
      $region12: #{tpu_custom_call.1} parent=5 // pred_fallthru
        _
      %p291 = scmp.lt.s32.totalorder %s23, 2
      // Predicated region
      $region33: #{tpu_custom_call.1} parent=5 // pred_check
        %p292 = pneg %p291
      $region34: #{tpu_custom_call.1} parent=5 // pred_check_branch
        %294 = sbr.rel (%p292) target = $region36
      $region35: #{tpu_custom_call.1} parent=5 // pred_region
        // Predicated region
        $region37: #{tpu_custom_call.1} parent=35 // pred_check
          %p295 = pneg %p64
        $region38: #{tpu_custom_call.1} parent=35 // pred_check_branch
          %297 = sbr.rel (%p295) target = $region40
        $region39: #{tpu_custom_call.1} parent=35 // pred_region
          %s298 = sand.u32 %s54, 1
          %s299 = scalar_lea.sflag [#allocation8], %s298
          %s300 = sand.u32 %s54, 1
          %s301 = smul.addr %s300, 4
          %s302 = scalar_lea.vmem [#allocation7], %s301
          %s304 = ssub.s32 64, 64
          %305 = vsyncadd %s299, %s304
          %s306 = sadd.s32 %s31, %s30
          %s307 = smul.addr %s306, 64
          %s308 = scalar_lea.hbm %s0, %s307
          %s310 = sshll.u32 %s302, 4
          %s311 = int_to_ptr.vmem [resolvable:$true] %s310
          %313 = dma.hbm_to_vmem [thread:$0]  %s308, 64, %s311, %s299
        $region40: #{tpu_custom_call.1} parent=35 // pred_fallthru
          _
        // Predicated region
        $region41: #{tpu_custom_call.1} parent=35 // pred_check
          %p314 = pneg %p92
        $region42: #{tpu_custom_call.1} parent=35 // pred_check_branch
          %316 = sbr.rel (%p314) target = $region44
        $region43: #{tpu_custom_call.1} parent=35 // pred_region
          %s317 = sand.u32 %s23, 1
          %s318 = scalar_lea.sflag [#allocation11], %s317
          %s319 = sand.u32 %s82, 1
          %s320 = smul.addr %s319, 4
          %s321 = scalar_lea.vmem [#allocation10], %s320
          %s323 = ssub.s32 64, 64
          %324 = vsyncadd %s318, %s323
          %s325 = sadd.s32 %s32, %s30
          %s326 = smul.addr %s325, 64
          %s327 = scalar_lea.hbm %s1, %s326
          %s329 = sshll.u32 %s321, 4
          %s330 = int_to_ptr.vmem [resolvable:$true] %s329
          %332 = dma.hbm_to_vmem [thread:$0]  %s327, 64, %s330, %s318
        $region44: #{tpu_custom_call.1} parent=35 // pred_fallthru
          _
      $region36: #{tpu_custom_call.1} parent=5 // pred_fallthru
        _
      %p333 = scmp.le.s32.totalorder 1, %s23
      %p334 = scmp.lt.s32.totalorder %s23, 3
      %p335 = pnand %p333, %p334
      %p336 = pneg %p335
      // Predicated region
      $region45: #{tpu_custom_call.1} parent=5 // pred_check
        _
      $region46: #{tpu_custom_call.1} parent=5 // pred_check_branch
        %338 = sbr.rel (%p335) target = $region48
      $region47: #{tpu_custom_call.1} parent=5 // pred_region
        %s339 = ssub.s32 %s23, 1
        %s340 = sand.u32 %s57, 1
        %s341 = scalar_lea.sflag [#allocation8], %s340
        %s342 = sand.u32 %s57, 1
        %s343 = smul.addr %s342, 4
        %s344 = scalar_lea.vmem [#allocation7], %s343
        // Predicated region
        $region49: #{tpu_custom_call.1} parent=47 // pred_check
          %p345 = pneg %p70
        $region50: #{tpu_custom_call.1} parent=47 // pred_check_branch
          %347 = sbr.rel (%p345) target = $region52
        $region51: #{tpu_custom_call.1} parent=47 // pred_region
          %348 = dma.done %s341, 64
        $region52: #{tpu_custom_call.1} parent=47 // pred_fallthru
          _
        %s349 = sand.u32 %s28, 1
        %s350 = scalar_lea.sflag [#allocation11], %s349
        %s351 = sand.u32 %s85, 1
        %s352 = smul.addr %s351, 4
        %s353 = scalar_lea.vmem [#allocation10], %s352
        // Predicated region
        $region53: #{tpu_custom_call.1} parent=47 // pred_check
          %p354 = pneg %p98
        $region54: #{tpu_custom_call.1} parent=47 // pred_check_branch
          %356 = sbr.rel (%p354) target = $region56
        $region55: #{tpu_custom_call.1} parent=47 // pred_region
          %357 = dma.done %s350, 64
        $region56: #{tpu_custom_call.1} parent=47 // pred_fallthru
          _
        // Predicated region
        $region57: #{tpu_custom_call.1} parent=47 // pred_check
          %p358 = pneg %p119
        $region58: #{tpu_custom_call.1} parent=47 // pred_check_branch
          %360 = sbr.rel (%p358) target = $region60
        $region59: #{tpu_custom_call.1} parent=47 // pred_region
          %361 = dma.done [#allocation11], 256
        $region60: #{tpu_custom_call.1} parent=47 // pred_fallthru
          _
        // Predicated region
        $region61: #{tpu_custom_call.1} parent=47 // pred_check
          %p362 = pneg %p140
        $region62: #{tpu_custom_call.1} parent=47 // pred_check_branch
          %364 = sbr.rel (%p362) target = $region64
        $region63: #{tpu_custom_call.1} parent=47 // pred_region
          %365 = dma.done [#allocation14], 256
        $region64: #{tpu_custom_call.1} parent=47 // pred_fallthru
          _
        // Predicated region
        $region65: #{tpu_custom_call.1} parent=47 // pred_check
          %p366 = pneg %p161
        $region66: #{tpu_custom_call.1} parent=47 // pred_check_branch
          %368 = sbr.rel (%p366) target = $region68
        $region67: #{tpu_custom_call.1} parent=47 // pred_region
          %369 = dma.done [#allocation14], 256
        $region68: #{tpu_custom_call.1} parent=47 // pred_fallthru
          _
        %s370 = sand.u32 %s57, 1
        %s371 = scalar_lea.sflag [#allocation8], %s370
        %s372 = sand.u32 %s57, 1
        %s373 = smul.addr %s372, 4
        %s374 = scalar_lea.vmem [#allocation7], %s373
        %p375 = pneg %p70
        %p376 = pneg %p67
        %s377 = sand.u32 %s28, 1
        %s378 = scalar_lea.sflag [#allocation11], %s377
        %s379 = sand.u32 %s85, 1
        %s380 = smul.addr %s379, 4
        %s381 = scalar_lea.vmem [#allocation10], %s380
        %p382 = pneg %p98
        %p383 = pneg %p95
        %p384 = pneg %p119
        %p385 = pneg %p116
        %p386 = pneg %p140
        %p387 = pneg %p137
        %p388 = pneg %p161
        %p389 = pneg %p158
        %p390 = pneg %p182
        %p391 = pneg %p179
        %p392 = pneg %p203
        %p393 = pneg %p200
        %p394 = pneg %p231
        %p395 = pneg %p228
        %s396 = sand.u32 %s218, 1
        %s397 = scalar_lea.sflag [#allocation9], %s396
        %s398 = sand.u32 %s218, 1
        %s399 = smul.addr %s398, 8
        %s400 = scalar_lea.vmem [#allocation16], %s399
        %p402 = scmp.eq.s32.totalorder %s35, 0
        // Predicated region
        $region69: #{tpu_custom_call.1} parent=47 // pred_check
          %p403 = pneg %p402
        $region70: #{tpu_custom_call.1} parent=47 // pred_check_branch
          %405 = sbr.rel (%p403) target = $region72
        $region71: #{tpu_custom_call.1} parent=47 // pred_region
          %v406 = vld [vmem:[%s344] sm:$0xf]
          %v407 = vld [vmem:[#allocation12] sm:$0xf]
          %v408 = vld [vmem:[#allocation12 + $0x4] sm:$0xf]
          %v409 = vld [vmem:[#allocation12 + $0x8] sm:$0xf]
          %v410 = vld [vmem:[#allocation12 + $0xc] sm:$0xf]
          %v415 = vunpack.c.l.b16 %v407
          %v416 = vunpack.c.l.b16 %v408
          %v417 = vunpack.c.l.b16 %v409
          %v418 = vunpack.c.l.b16 %v410
          %v419 = vpack.c.b16 %v416, %v415
          %v420 = vpack.c.b16 %v418, %v417
          %vm423 = vcmask 261120
          %v425 = vsel %vm423, %v406, 0
          %427 = vmatprep.subr.bf16.mxu0 0
          %428 = vmatpush1.bf16.msra.mxu0 %v419
          %429 = vmatprep.subr.bf16.mxu0 0
          %430 = vmatpush1.bf16.msra.mxu0 %v420
          %431 = vmatprep.subr.bf16.mxu0 0
          %432 = vmatpush1.bf16.msra.mxu0 0
          %433 = vmatprep.subr.bf16.mxu0 0
          %434 = vmatpush1.bf16.msra.mxu0 0
          %435 = vmatprep.subr.bf16.mxu0 0
          %436 = vmatpush1.bf16.msra.mxu0 0
          %437 = vmatprep.subr.bf16.mxu0 0
          %438 = vmatpush1.bf16.msra.mxu0 0
          %439 = vmatprep.subr.bf16.mxu0 0
          %440 = vmatpush1.bf16.msra.mxu0 0
          %441 = vmatprep.subr.bf16.mxu0 0
          %442 = vmatpush1.bf16.msra.mxu0 0
          %443 = vmatprep.subr.bf16.mxu0 0
          %444 = vmatpush1.bf16.msra.mxu0 0
          %445 = vmatprep.subr.bf16.mxu0 0
          %446 = vmatpush1.bf16.msra.mxu0 0
          %447 = vmatprep.subr.bf16.mxu0 0
          %448 = vmatpush1.bf16.msra.mxu0 0
          %449 = vmatprep.subr.bf16.mxu0 0
          %450 = vmatpush1.bf16.msra.mxu0 0
          %451 = vmatprep.subr.bf16.mxu0 0
          %452 = vmatpush1.bf16.msra.mxu0 0
          %453 = vmatprep.subr.bf16.mxu0 0
          %454 = vmatpush1.bf16.msra.mxu0 0
          %455 = vmatprep.subr.bf16.mxu0 0
          %456 = vmatpush1.bf16.msra.mxu0 0
          %457 = vmatprep.subr.bf16.mxu0 0
          %458 = vmatpush1.bf16.msra.mxu0 0
          %459 = vmatprep.mubr.bf16.mxu0 0
          %460 = vmatmul.mubr.bf16.gmra.mrb[0].mxu0 %v425
          %v461 = vpop.f32.mrb[0].mxu0
          %v462 = vadd.f32 0.0, %v461
          %v463 = vpop.f32.mrb[0].mxu0
          %v464 = vpop.f32.mrb[0].mxu0
          %v465 = vpop.f32.mrb[0].mxu0
          %466 = vdwg.mxu0
          %v467 = vpack.c.bf16 %v462, %v462
          %vm468 = vcmask 257024
          %469 = vst.msk [vmem:[#allocation2] sm:$0xf] %vm468, %v467
          %vm470 = vcmask 7168
          %471 = vst.msk [vmem:[#allocation4] sm:$0xff] %vm470, -inf
          %472 = vst.msk [vmem:[#allocation4 + $0x8] sm:$0xff] %vm470, -inf
          %473 = vst.msk [vmem:[#allocation4 + $0x10] sm:$0xff] %vm470, -inf
          %474 = vst.msk [vmem:[#allocation4 + $0x18] sm:$0xff] %vm470, -inf
          %475 = vst.msk [vmem:[#allocation4 + $0x20] sm:$0xff] %vm470, -inf
          %476 = vst.msk [vmem:[#allocation4 + $0x28] sm:$0xff] %vm470, -inf
          %477 = vst.msk [vmem:[#allocation4 + $0x30] sm:$0xff] %vm470, -inf
          %478 = vst.msk [vmem:[#allocation4 + $0x38] sm:$0xff] %vm470, -inf
          %479 = vst.msk [vmem:[#allocation5] sm:$0xff] %vm470, 0.0
          %480 = vst.msk [vmem:[#allocation5 + $0x8] sm:$0xff] %vm470, 0.0
          %481 = vst.msk [vmem:[#allocation5 + $0x10] sm:$0xff] %vm470, 0.0
          %482 = vst.msk [vmem:[#allocation5 + $0x18] sm:$0xff] %vm470, 0.0
          %483 = vst.msk [vmem:[#allocation5 + $0x20] sm:$0xff] %vm470, 0.0
          %484 = vst.msk [vmem:[#allocation5 + $0x28] sm:$0xff] %vm470, 0.0
          %485 = vst.msk [vmem:[#allocation5 + $0x30] sm:$0xff] %vm470, 0.0
          %486 = vst.msk [vmem:[#allocation5 + $0x38] sm:$0xff] %vm470, 0.0
          %vm487 = vcmask 31744
          %488 = vst.msk [vmem:[#allocation6] sm:$0xff] %vm487, 0.0
          %489 = vst.msk [vmem:[#allocation6 + $0x8] sm:$0xff] %vm487, 0.0
          %490 = vst.msk [vmem:[#allocation6 + $0x10] sm:$0xff] %vm487, 0.0
          %491 = vst.msk [vmem:[#allocation6 + $0x18] sm:$0xff] %vm487, 0.0
          %492 = vst.msk [vmem:[#allocation6 + $0x20] sm:$0xff] %vm487, 0.0
          %493 = vst.msk [vmem:[#allocation6 + $0x28] sm:$0xff] %vm487, 0.0
          %494 = vst.msk [vmem:[#allocation6 + $0x30] sm:$0xff] %vm487, 0.0
          %495 = vst.msk [vmem:[#allocation6 + $0x38] sm:$0xff] %vm487, 0.0
        $region72: #{tpu_custom_call.1} parent=47 // pred_fallthru
          _
        %v496 = vld [vmem:[%s353] sm:$0xf]
        %v497 = vld [vmem:[#allocation13] sm:$0xf]
        %v498 = vld [vmem:[#allocation13 + $0x4] sm:$0xf]
        %v499 = vld [vmem:[#allocation13 + $0x8] sm:$0xf]
        %v500 = vld [vmem:[#allocation13 + $0xc] sm:$0xf]
        %v505 = vunpack.c.l.b16 %v497
        %v506 = vunpack.c.l.b16 %v498
        %v507 = vunpack.c.l.b16 %v499
        %v508 = vunpack.c.l.b16 %v500
        %v509 = vpack.c.b16 %v506, %v505
        %v510 = vpack.c.b16 %v508, %v507
        %vm513 = vcmask 261120
        %v515 = vsel %vm513, %v496, 0
        %517 = vmatprep.subr.bf16.mxu0 0
        %518 = vmatpush1.bf16.msra.mxu0 %v509
        %519 = vmatprep.subr.bf16.mxu0 0
        %520 = vmatpush1.bf16.msra.mxu0 %v510
        %521 = vmatprep.subr.bf16.mxu0 0
        %522 = vmatpush1.bf16.msra.mxu0 0
        %523 = vmatprep.subr.bf16.mxu0 0
        %524 = vmatpush1.bf16.msra.mxu0 0
        %525 = vmatprep.subr.bf16.mxu0 0
        %526 = vmatpush1.bf16.msra.mxu0 0
        %527 = vmatprep.subr.bf16.mxu0 0
        %528 = vmatpush1.bf16.msra.mxu0 0
        %529 = vmatprep.subr.bf16.mxu0 0
        %530 = vmatpush1.bf16.msra.mxu0 0
        %531 = vmatprep.subr.bf16.mxu0 0
        %532 = vmatpush1.bf16.msra.mxu0 0
        %533 = vmatprep.subr.bf16.mxu0 0
        %534 = vmatpush1.bf16.msra.mxu0 0
        %535 = vmatprep.subr.bf16.mxu0 0
        %536 = vmatpush1.bf16.msra.mxu0 0
        %537 = vmatprep.subr.bf16.mxu0 0
        %538 = vmatpush1.bf16.msra.mxu0 0
        %539 = vmatprep.subr.bf16.mxu0 0
        %540 = vmatpush1.bf16.msra.mxu0 0
        %541 = vmatprep.subr.bf16.mxu0 0
        %542 = vmatpush1.bf16.msra.mxu0 0
        %543 = vmatprep.subr.bf16.mxu0 0
        %544 = vmatpush1.bf16.msra.mxu0 0
        %545 = vmatprep.subr.bf16.mxu0 0
        %546 = vmatpush1.bf16.msra.mxu0 0
        %547 = vmatprep.subr.bf16.mxu0 0
        %548 = vmatpush1.bf16.msra.mxu0 0
        %549 = vmatprep.mubr.bf16.mxu0 0
        %550 = vmatmul.mubr.bf16.gmra.mrb[0].mxu0 %v515
        %v551 = vpop.f32.mrb[0].mxu0
        %v552 = vadd.f32 0.0, %v551
        %v553 = vpop.f32.mrb[0].mxu0
        %v554 = vpop.f32.mrb[0].mxu0
        %v555 = vpop.f32.mrb[0].mxu0
        %556 = vdwg.mxu0
        %v557 = vpack.c.bf16 %v552, %v552
        %v558 = vld [vmem:[#allocation15] sm:$0xf]
        %v559 = vld [vmem:[#allocation15 + $0x4] sm:$0xf]
        %v560 = vld [vmem:[#allocation15 + $0x8] sm:$0xf]
        %v561 = vld [vmem:[#allocation15 + $0xc] sm:$0xf]
        %v566 = vunpack.c.l.b16 %v558
        %v567 = vunpack.c.l.b16 %v559
        %v568 = vunpack.c.l.b16 %v560
        %v569 = vunpack.c.l.b16 %v561
        %v570 = vpack.c.b16 %v567, %v566
        %v571 = vpack.c.b16 %v569, %v568
        %574 = vmatprep.subr.bf16.mxu0 0
        %575 = vmatpush1.bf16.msra.mxu0 %v570
        %576 = vmatprep.subr.bf16.mxu0 0
        %577 = vmatpush1.bf16.msra.mxu0 %v571
        %578 = vmatprep.subr.bf16.mxu0 0
        %579 = vmatpush1.bf16.msra.mxu0 0
        %580 = vmatprep.subr.bf16.mxu0 0
        %581 = vmatpush1.bf16.msra.mxu0 0
        %582 = vmatprep.subr.bf16.mxu0 0
        %583 = vmatpush1.bf16.msra.mxu0 0
        %584 = vmatprep.subr.bf16.mxu0 0
        %585 = vmatpush1.bf16.msra.mxu0 0
        %586 = vmatprep.subr.bf16.mxu0 0
        %587 = vmatpush1.bf16.msra.mxu0 0
        %588 = vmatprep.subr.bf16.mxu0 0
        %589 = vmatpush1.bf16.msra.mxu0 0
        %590 = vmatprep.subr.bf16.mxu0 0
        %591 = vmatpush1.bf16.msra.mxu0 0
        %592 = vmatprep.subr.bf16.mxu0 0
        %593 = vmatpush1.bf16.msra.mxu0 0
        %594 = vmatprep.subr.bf16.mxu0 0
        %595 = vmatpush1.bf16.msra.mxu0 0
        %596 = vmatprep.subr.bf16.mxu0 0
        %597 = vmatpush1.bf16.msra.mxu0 0
        %598 = vmatprep.subr.bf16.mxu0 0
        %599 = vmatpush1.bf16.msra.mxu0 0
        %600 = vmatprep.subr.bf16.mxu0 0
        %601 = vmatpush1.bf16.msra.mxu0 0
        %602 = vmatprep.subr.bf16.mxu0 0
        %603 = vmatpush1.bf16.msra.mxu0 0
        %604 = vmatprep.subr.bf16.mxu0 0
        %605 = vmatpush1.bf16.msra.mxu0 0
        %606 = vmatprep.mubr.bf16.mxu0 0
        %607 = vmatmul.mubr.bf16.gmra.mrb[0].mxu0 %v515
        %v608 = vpop.f32.mrb[0].mxu0
        %v609 = vadd.f32 0.0, %v608
        %v610 = vpop.f32.mrb[0].mxu0
        %v611 = vpop.f32.mrb[0].mxu0
        %v612 = vpop.f32.mrb[0].mxu0
        %613 = vdwg.mxu0
        %v614 = vpack.c.bf16 %v609, %v609
        %v615 = vld [vmem:[#allocation2] sm:$0xf]
        %vm616 = vcmask 31744
        %v618 = vsel %vm616, %v615, 0
        %v621 = vsel %vm616, %v557, 0
        %623 = vmatprep.subr.bf16.mxu0 0
        %624 = vmatpush1.bf16.xpose.msra.mxu0 %v621
        %625 = vmatprep.subr.bf16.mxu0 0
        %626 = vmatpush1.bf16.xpose.msra.mxu0 0
        %627 = vmatprep.subr.bf16.mxu0 0
        %628 = vmatpush1.bf16.xpose.msra.mxu0 0
        %629 = vmatprep.subr.bf16.mxu0 0
        %630 = vmatpush1.bf16.xpose.msra.mxu0 0
        %631 = vmatprep.subr.bf16.mxu0 0
        %632 = vmatpush1.bf16.xpose.msra.mxu0 0
        %633 = vmatprep.subr.bf16.mxu0 0
        %634 = vmatpush1.bf16.xpose.msra.mxu0 0
        %635 = vmatprep.subr.bf16.mxu0 0
        %636 = vmatpush1.bf16.xpose.msra.mxu0 0
        %637 = vmatprep.subr.bf16.mxu0 0
        %638 = vmatpush1.bf16.xpose.msra.mxu0 0
        %639 = vmatprep.subr.bf16.mxu0 0
        %640 = vmatpush1.bf16.xpose.msra.mxu0 0
        %641 = vmatprep.subr.bf16.mxu0 0
        %642 = vmatpush1.bf16.xpose.msra.mxu0 0
        %643 = vmatprep.subr.bf16.mxu0 0
        %644 = vmatpush1.bf16.xpose.msra.mxu0 0
        %645 = vmatprep.subr.bf16.mxu0 0
        %646 = vmatpush1.bf16.xpose.msra.mxu0 0
        %647 = vmatprep.subr.bf16.mxu0 0
        %648 = vmatpush1.bf16.xpose.msra.mxu0 0
        %649 = vmatprep.subr.bf16.mxu0 0
        %650 = vmatpush1.bf16.xpose.msra.mxu0 0
        %651 = vmatprep.subr.bf16.mxu0 0
        %652 = vmatpush1.bf16.xpose.msra.mxu0 0
        %653 = vmatprep.subr.bf16.mxu0 0
        %654 = vmatpush1.bf16.xpose.msra.mxu0 0
        %655 = vmatprep.mubr.bf16.mxu0 0
        %656 = vmatmul.mubr.bf16.gmra.mrb[0].mxu0 %v618
        %v657 = vpop.f32.mrb[0].mxu0
        %v658 = vadd.f32 0.0, %v657
        %v659 = vpop.f32.mrb[0].mxu0
        %v660 = vpop.f32.mrb[0].mxu0
        %v661 = vpop.f32.mrb[0].mxu0
        %662 = vdwg.mxu0
        %v663 = vld [vmem:[#allocation4] sm:$0xff]
        %vm664 = vcmask 64512
        %v665 = vsel %vm664, %v658, -inf
        %666 = vmax.xlane.f32.xlu0 %v665
        %v667 = vpop.xlane.xlu0 %666
        %v668 = vmax.f32 %v663, %v667
        %v669 = vsub.f32 %v663, %v668
        %v670 = vmul.f32 %v669, 1.442695
        %v671 = vpow.pop %v670
        %673 = vset.pattern.permute.xlu0 0
        %674 = vperm.xlu0 %673, %v668
        %v675 = vpop.permute.xlu0 %674
        %v677 = vsub.f32 %v658, %v675
        %v678 = vmul.f32 %v677, 1.442695
        %v679 = vpow.pop %v678
        %v680 = vld [vmem:[#allocation5] sm:$0xff]
        %v681 = vmul.f32 %v671, %v680
        %v682 = vsel %vm664, %v679, 0.0
        %683 = vadd.xlane.f32.xlu0 %v682
        %v684 = vpop.xlane.xlu0 %683
        %v685 = vadd.f32 %v681, %v684
        %vm686 = vcmask 7168
        %687 = vst.msk [vmem:[#allocation5] sm:$0xff] %vm686, %v685
        %v688 = vld [vmem:[#allocation6] sm:$0xff]
        %690 = vset.pattern.permute.xlu0 0
        %691 = vperm.xlu0 %690, %v671
        %v692 = vpop.permute.xlu0 %691
        %v694 = vmul.f32 %v692, %v688
        %v695 = vpack.c.bf16 %v679, %v679
        %v697 = vsel %vm664, %v695, 0
        %vm699 = vcmask 1043456
        %v701 = vsel %vm699, %v614, 0
        %703 = vmatprep.subr.bf16.mxu0 0
        %704 = vmatpush1.bf16.msra.mxu0 %v701
        %705 = vmatprep.subr.bf16.mxu0 0
        %706 = vmatpush1.bf16.msra.mxu0 0
        %707 = vmatprep.subr.bf16.mxu0 0
        %708 = vmatpush1.bf16.msra.mxu0 0
        %709 = vmatprep.subr.bf16.mxu0 0
        %710 = vmatpush1.bf16.msra.mxu0 0
        %711 = vmatprep.subr.bf16.mxu0 0
        %712 = vmatpush1.bf16.msra.mxu0 0
        %713 = vmatprep.subr.bf16.mxu0 0
        %714 = vmatpush1.bf16.msra.mxu0 0
        %715 = vmatprep.subr.bf16.mxu0 0
        %716 = vmatpush1.bf16.msra.mxu0 0
        %717 = vmatprep.subr.bf16.mxu0 0
        %718 = vmatpush1.bf16.msra.mxu0 0
        %719 = vmatprep.subr.bf16.mxu0 0
        %720 = vmatpush1.bf16.msra.mxu0 0
        %721 = vmatprep.subr.bf16.mxu0 0
        %722 = vmatpush1.bf16.msra.mxu0 0
        %723 = vmatprep.subr.bf16.mxu0 0
        %724 = vmatpush1.bf16.msra.mxu0 0
        %725 = vmatprep.subr.bf16.mxu0 0
        %726 = vmatpush1.bf16.msra.mxu0 0
        %727 = vmatprep.subr.bf16.mxu0 0
        %728 = vmatpush1.bf16.msra.mxu0 0
        %729 = vmatprep.subr.bf16.mxu0 0
        %730 = vmatpush1.bf16.msra.mxu0 0
        %731 = vmatprep.subr.bf16.mxu0 0
        %732 = vmatpush1.bf16.msra.mxu0 0
        %733 = vmatprep.subr.bf16.mxu0 0
        %734 = vmatpush1.bf16.msra.mxu0 0
        %735 = vmatprep.mubr.bf16.mxu0 0
        %736 = vmatmul.mubr.bf16.gmra.mrb[0].mxu0 %v697
        %v737 = vpop.f32.mrb[0].mxu0
        %v738 = vadd.f32 0.0, %v737
        %v739 = vpop.f32.mrb[0].mxu0
        %v740 = vpop.f32.mrb[0].mxu0
        %v741 = vpop.f32.mrb[0].mxu0
        %742 = vdwg.mxu0
        %v743 = vadd.f32 %v694, %v738
        %744 = vst.msk [vmem:[#allocation6] sm:$0xff] %vm616, %v743
        %745 = vst.msk [vmem:[#allocation4] sm:$0xff] %vm686, %v668
        %v746 = vld [vmem:[#allocation2] sm:$0xf]
        %v748 = vunpack.c.l.b16 %v746
        %v749 = vpack.c.b16 %v748, %v748
        %750 = vrot.lane.b32.xlu0 %v749, 124
        %v751 = vpop.permute.xlu0 %750
        %753 = vrot.lane.b32.xlu0 %v557, 124
        %v754 = vpop.permute.xlu0 %753
        %v756 = vsel %vm616, %v751, 0
        %v759 = vsel %vm616, %v754, 0
        %761 = vmatprep.subr.bf16.mxu0 0
        %762 = vmatpush1.bf16.xpose.msra.mxu0 %v759
        %763 = vmatprep.subr.bf16.mxu0 0
        %764 = vmatpush1.bf16.xpose.msra.mxu0 0
        %765 = vmatprep.subr.bf16.mxu0 0
        %766 = vmatpush1.bf16.xpose.msra.mxu0 0
        %767 = vmatprep.subr.bf16.mxu0 0
        %768 = vmatpush1.bf16.xpose.msra.mxu0 0
        %769 = vmatprep.subr.bf16.mxu0 0
        %770 = vmatpush1.bf16.xpose.msra.mxu0 0
        %771 = vmatprep.subr.bf16.mxu0 0
        %772 = vmatpush1.bf16.xpose.msra.mxu0 0
        %773 = vmatprep.subr.bf16.mxu0 0
        %774 = vmatpush1.bf16.xpose.msra.mxu0 0
        %775 = vmatprep.subr.bf16.mxu0 0
        %776 = vmatpush1.bf16.xpose.msra.mxu0 0
        %777 = vmatprep.subr.bf16.mxu0 0
        %778 = vmatpush1.bf16.xpose.msra.mxu0 0
        %779 = vmatprep.subr.bf16.mxu0 0
        %780 = vmatpush1.bf16.xpose.msra.mxu0 0
        %781 = vmatprep.subr.bf16.mxu0 0
        %782 = vmatpush1.bf16.xpose.msra.mxu0 0
        %783 = vmatprep.subr.bf16.mxu0 0
        %784 = vmatpush1.bf16.xpose.msra.mxu0 0
        %785 = vmatprep.subr.bf16.mxu0 0
        %786 = vmatpush1.bf16.xpose.msra.mxu0 0
        %787 = vmatprep.subr.bf16.mxu0 0
        %788 = vmatpush1.bf16.xpose.msra.mxu0 0
        %789 = vmatprep.subr.bf16.mxu0 0
        %790 = vmatpush1.bf16.xpose.msra.mxu0 0
        %791 = vmatprep.subr.bf16.mxu0 0
        %792 = vmatpush1.bf16.xpose.msra.mxu0 0
        %793 = vmatprep.mubr.bf16.mxu0 0
        %794 = vmatmul.mubr.bf16.gmra.mrb[0].mxu0 %v756
        %v795 = vpop.f32.mrb[0].mxu0
        %v796 = vadd.f32 0.0, %v795
        %v797 = vpop.f32.mrb[0].mxu0
        %v798 = vpop.f32.mrb[0].mxu0
        %v799 = vpop.f32.mrb[0].mxu0
        %800 = vdwg.mxu0
        %s801 = scalar_lea.vmem [#allocation4], 8
        %v802 = vld [vmem:[%s801] sm:$0xff]
        %v803 = vsel %vm664, %v796, -inf
        %804 = vmax.xlane.f32.xlu0 %v803
        %v805 = vpop.xlane.xlu0 %804
        %v806 = vmax.f32 %v802, %v805
        %v807 = vsub.f32 %v802, %v806
        %v808 = vmul.f32 %v807, 1.442695
        %v809 = vpow.pop %v808
        %811 = vset.pattern.permute.xlu0 0
        %812 = vperm.xlu0 %811, %v806
        %v813 = vpop.permute.xlu0 %812
        %v815 = vsub.f32 %v796, %v813
        %v816 = vmul.f32 %v815, 1.442695
        %v817 = vpow.pop %v816
        %s818 = scalar_lea.vmem [#allocation5], 8
        %v819 = vld [vmem:[%s818] sm:$0xff]
        %v820 = vmul.f32 %v809, %v819
        %v821 = vsel %vm664, %v817, 0.0
        %822 = vadd.xlane.f32.xlu0 %v821
        %v823 = vpop.xlane.xlu0 %822
        %v824 = vadd.f32 %v820, %v823
        %825 = vst.msk [vmem:[%s818] sm:$0xff] %vm686, %v824
        %s826 = scalar_lea.vmem [#allocation6], 8
        %v827 = vld [vmem:[%s826] sm:$0xff]
        %829 = vset.pattern.permute.xlu0 0
        %830 = vperm.xlu0 %829, %v809
        %v831 = vpop.permute.xlu0 %830
        %v833 = vmul.f32 %v831, %v827
        %v834 = vpack.c.bf16 %v817, %v817
        %836 = vrot.lane.b32.xlu0 %v614, 124
        %v837 = vpop.permute.xlu0 %836
        %v839 = vsel %vm664, %v834, 0
        %v842 = vsel %vm699, %v837, 0
        %844 = vmatprep.subr.bf16.mxu0 0
        %845 = vmatpush1.bf16.msra.mxu0 %v842
        %846 = vmatprep.subr.bf16.mxu0 0
        %847 = vmatpush1.bf16.msra.mxu0 0
        %848 = vmatprep.subr.bf16.mxu0 0
        %849 = vmatpush1.bf16.msra.mxu0 0
        %850 = vmatprep.subr.bf16.mxu0 0
        %851 = vmatpush1.bf16.msra.mxu0 0
        %852 = vmatprep.subr.bf16.mxu0 0
        %853 = vmatpush1.bf16.msra.mxu0 0
        %854 = vmatprep.subr.bf16.mxu0 0
        %855 = vmatpush1.bf16.msra.mxu0 0
        %856 = vmatprep.subr.bf16.mxu0 0
        %857 = vmatpush1.bf16.msra.mxu0 0
        %858 = vmatprep.subr.bf16.mxu0 0
        %859 = vmatpush1.bf16.msra.mxu0 0
        %860 = vmatprep.subr.bf16.mxu0 0
        %861 = vmatpush1.bf16.msra.mxu0 0
        %862 = vmatprep.subr.bf16.mxu0 0
        %863 = vmatpush1.bf16.msra.mxu0 0
        %864 = vmatprep.subr.bf16.mxu0 0
        %865 = vmatpush1.bf16.msra.mxu0 0
        %866 = vmatprep.subr.bf16.mxu0 0
        %867 = vmatpush1.bf16.msra.mxu0 0
        %868 = vmatprep.subr.bf16.mxu0 0
        %869 = vmatpush1.bf16.msra.mxu0 0
        %870 = vmatprep.subr.bf16.mxu0 0
        %871 = vmatpush1.bf16.msra.mxu0 0
        %872 = vmatprep.subr.bf16.mxu0 0
        %873 = vmatpush1.bf16.msra.mxu0 0
        %874 = vmatprep.subr.bf16.mxu0 0
        %875 = vmatpush1.bf16.msra.mxu0 0
        %876 = vmatprep.mubr.bf16.mxu0 0
        %877 = vmatmul.mubr.bf16.gmra.mrb[0].mxu0 %v839
        %v878 = vpop.f32.mrb[0].mxu0
        %v879 = vadd.f32 0.0, %v878
        %v880 = vpop.f32.mrb[0].mxu0
        %v881 = vpop.f32.mrb[0].mxu0
        %v882 = vpop.f32.mrb[0].mxu0
        %883 = vdwg.mxu0
        %v884 = vadd.f32 %v833, %v879
        %885 = vst.msk [vmem:[%s826] sm:$0xff] %vm616, %v884
        %886 = vst.msk [vmem:[%s801] sm:$0xff] %vm686, %v806
        %v887 = vld [vmem:[#allocation2] sm:$0xf]
        %v889 = vunpack.c.l.b16 %v887
        %v890 = vpack.c.b16 %v889, %v889
        %891 = vrot.lane.b32.xlu0 %v890, 120
        %v892 = vpop.permute.xlu0 %891
        %893 = vrot.lane.b32.xlu0 %v557, 120
        %v894 = vpop.permute.xlu0 %893
        %v896 = vsel %vm616, %v892, 0
        %v899 = vsel %vm616, %v894, 0
        %901 = vmatprep.subr.bf16.mxu0 0
        %902 = vmatpush1.bf16.xpose.msra.mxu0 %v899
        %903 = vmatprep.subr.bf16.mxu0 0
        %904 = vmatpush1.bf16.xpose.msra.mxu0 0
        %905 = vmatprep.subr.bf16.mxu0 0
        %906 = vmatpush1.bf16.xpose.msra.mxu0 0
        %907 = vmatprep.subr.bf16.mxu0 0
        %908 = vmatpush1.bf16.xpose.msra.mxu0 0
        %909 = vmatprep.subr.bf16.mxu0 0
        %910 = vmatpush1.bf16.xpose.msra.mxu0 0
        %911 = vmatprep.subr.bf16.mxu0 0
        %912 = vmatpush1.bf16.xpose.msra.mxu0 0
        %913 = vmatprep.subr.bf16.mxu0 0
        %914 = vmatpush1.bf16.xpose.msra.mxu0 0
        %915 = vmatprep.subr.bf16.mxu0 0
        %916 = vmatpush1.bf16.xpose.msra.mxu0 0
        %917 = vmatprep.subr.bf16.mxu0 0
        %918 = vmatpush1.bf16.xpose.msra.mxu0 0
        %919 = vmatprep.subr.bf16.mxu0 0
        %920 = vmatpush1.bf16.xpose.msra.mxu0 0
        %921 = vmatprep.subr.bf16.mxu0 0
        %922 = vmatpush1.bf16.xpose.msra.mxu0 0
        %923 = vmatprep.subr.bf16.mxu0 0
        %924 = vmatpush1.bf16.xpose.msra.mxu0 0
        %925 = vmatprep.subr.bf16.mxu0 0
        %926 = vmatpush1.bf16.xpose.msra.mxu0 0
        %927 = vmatprep.subr.bf16.mxu0 0
        %928 = vmatpush1.bf16.xpose.msra.mxu0 0
        %929 = vmatprep.subr.bf16.mxu0 0
        %930 = vmatpush1.bf16.xpose.msra.mxu0 0
        %931 = vmatprep.subr.bf16.mxu0 0
        %932 = vmatpush1.bf16.xpose.msra.mxu0 0
        %933 = vmatprep.mubr.bf16.mxu0 0
        %934 = vmatmul.mubr.bf16.gmra.mrb[0].mxu0 %v896
        %v935 = vpop.f32.mrb[0].mxu0
        %v936 = vadd.f32 0.0, %v935
        %v937 = vpop.f32.mrb[0].mxu0
        %v938 = vpop.f32.mrb[0].mxu0
        %v939 = vpop.f32.mrb[0].mxu0
        %940 = vdwg.mxu0
        %s941 = scalar_lea.vmem [#allocation4], 16
        %v942 = vld [vmem:[%s941] sm:$0xff]
        %v943 = vsel %vm664, %v936, -inf
        %944 = vmax.xlane.f32.xlu0 %v943
        %v945 = vpop.xlane.xlu0 %944
        %v946 = vmax.f32 %v942, %v945
        %v947 = vsub.f32 %v942, %v946
        %v948 = vmul.f32 %v947, 1.442695
        %v949 = vpow.pop %v948
        %951 = vset.pattern.permute.xlu0 0
        %952 = vperm.xlu0 %951, %v946
        %v953 = vpop.permute.xlu0 %952
        %v955 = vsub.f32 %v936, %v953
        %v956 = vmul.f32 %v955, 1.442695
        %v957 = vpow.pop %v956
        %s958 = scalar_lea.vmem [#allocation5], 16
        %v959 = vld [vmem:[%s958] sm:$0xff]
        %v960 = vmul.f32 %v949, %v959
        %v961 = vsel %vm664, %v957, 0.0
        %962 = vadd.xlane.f32.xlu0 %v961
        %v963 = vpop.xlane.xlu0 %962
        %v964 = vadd.f32 %v960, %v963
        %965 = vst.msk [vmem:[%s958] sm:$0xff] %vm686, %v964
        %s966 = scalar_lea.vmem [#allocation6], 16
        %v967 = vld [vmem:[%s966] sm:$0xff]
        %969 = vset.pattern.permute.xlu0 0
        %970 = vperm.xlu0 %969, %v949
        %v971 = vpop.permute.xlu0 %970
        %v973 = vmul.f32 %v971, %v967
        %v974 = vpack.c.bf16 %v957, %v957
        %975 = vrot.lane.b32.xlu0 %v614, 120
        %v976 = vpop.permute.xlu0 %975
        %v978 = vsel %vm664, %v974, 0
        %v981 = vsel %vm699, %v976, 0
        %983 = vmatprep.subr.bf16.mxu0 0
        %984 = vmatpush1.bf16.msra.mxu0 %v981
        %985 = vmatprep.subr.bf16.mxu0 0
        %986 = vmatpush1.bf16.msra.mxu0 0
        %987 = vmatprep.subr.bf16.mxu0 0
        %988 = vmatpush1.bf16.msra.mxu0 0
        %989 = vmatprep.subr.bf16.mxu0 0
        %990 = vmatpush1.bf16.msra.mxu0 0
        %991 = vmatprep.subr.bf16.mxu0 0
        %992 = vmatpush1.bf16.msra.mxu0 0
        %993 = vmatprep.subr.bf16.mxu0 0
        %994 = vmatpush1.bf16.msra.mxu0 0
        %995 = vmatprep.subr.bf16.mxu0 0
        %996 = vmatpush1.bf16.msra.mxu0 0
        %997 = vmatprep.subr.bf16.mxu0 0
        %998 = vmatpush1.bf16.msra.mxu0 0
        %999 = vmatprep.subr.bf16.mxu0 0
        %1000 = vmatpush1.bf16.msra.mxu0 0
        %1001 = vmatprep.subr.bf16.mxu0 0
        %1002 = vmatpush1.bf16.msra.mxu0 0
        %1003 = vmatprep.subr.bf16.mxu0 0
        %1004 = vmatpush1.bf16.msra.mxu0 0
        %1005 = vmatprep.subr.bf16.mxu0 0
        %1006 = vmatpush1.bf16.msra.mxu0 0
        %1007 = vmatprep.subr.bf16.mxu0 0
        %1008 = vmatpush1.bf16.msra.mxu0 0
        %1009 = vmatprep.subr.bf16.mxu0 0
        %1010 = vmatpush1.bf16.msra.mxu0 0
        %1011 = vmatprep.subr.bf16.mxu0 0
        %1012 = vmatpush1.bf16.msra.mxu0 0
        %1013 = vmatprep.subr.bf16.mxu0 0
        %1014 = vmatpush1.bf16.msra.mxu0 0
        %1015 = vmatprep.mubr.bf16.mxu0 0
        %1016 = vmatmul.mubr.bf16.gmra.mrb[0].mxu0 %v978
        %v1017 = vpop.f32.mrb[0].mxu0
        %v1018 = vadd.f32 0.0, %v1017
        %v1019 = vpop.f32.mrb[0].mxu0
        %v1020 = vpop.f32.mrb[0].mxu0
        %v1021 = vpop.f32.mrb[0].mxu0
        %1022 = vdwg.mxu0
        %v1023 = vadd.f32 %v973, %v1018
        %1024 = vst.msk [vmem:[%s966] sm:$0xff] %vm616, %v1023
        %1025 = vst.msk [vmem:[%s941] sm:$0xff] %vm686, %v946
        %v1026 = vld [vmem:[#allocation2] sm:$0xf]
        %v1028 = vunpack.c.l.b16 %v1026
        %v1029 = vpack.c.b16 %v1028, %v1028
        %1030 = vrot.lane.b32.xlu0 %v1029, 116
        %v1031 = vpop.permute.xlu0 %1030
        %1032 = vrot.lane.b32.xlu0 %v557, 116
        %v1033 = vpop.permute.xlu0 %1032
        %v1035 = vsel %vm616, %v1031, 0
        %v1038 = vsel %vm616, %v1033, 0
        %1040 = vmatprep.subr.bf16.mxu0 0
        %1041 = vmatpush1.bf16.xpose.msra.mxu0 %v1038
        %1042 = vmatprep.subr.bf16.mxu0 0
        %1043 = vmatpush1.bf16.xpose.msra.mxu0 0
        %1044 = vmatprep.subr.bf16.mxu0 0
        %1045 = vmatpush1.bf16.xpose.msra.mxu0 0
        %1046 = vmatprep.subr.bf16.mxu0 0
        %1047 = vmatpush1.bf16.xpose.msra.mxu0 0
        %1048 = vmatprep.subr.bf16.mxu0 0
        %1049 = vmatpush1.bf16.xpose.msra.mxu0 0
        %1050 = vmatprep.subr.bf16.mxu0 0
        %1051 = vmatpush1.bf16.xpose.msra.mxu0 0
        %1052 = vmatprep.subr.bf16.mxu0 0
        %1053 = vmatpush1.bf16.xpose.msra.mxu0 0
        %1054 = vmatprep.subr.bf16.mxu0 0
        %1055 = vmatpush1.bf16.xpose.msra.mxu0 0
        %1056 = vmatprep.subr.bf16.mxu0 0
        %1057 = vmatpush1.bf16.xpose.msra.mxu0 0
        %1058 = vmatprep.subr.bf16.mxu0 0
        %1059 = vmatpush1.bf16.xpose.msra.mxu0 0
        %1060 = vmatprep.subr.bf16.mxu0 0
        %1061 = vmatpush1.bf16.xpose.msra.mxu0 0
        %1062 = vmatprep.subr.bf16.mxu0 0
        %1063 = vmatpush1.bf16.xpose.msra.mxu0 0
        %1064 = vmatprep.subr.bf16.mxu0 0
        %1065 = vmatpush1.bf16.xpose.msra.mxu0 0
        %1066 = vmatprep.subr.bf16.mxu0 0
        %1067 = vmatpush1.bf16.xpose.msra.mxu0 0
        %1068 = vmatprep.subr.bf16.mxu0 0
        %1069 = vmatpush1.bf16.xpose.msra.mxu0 0
        %1070 = vmatprep.subr.bf16.mxu0 0
        %1071 = vmatpush1.bf16.xpose.msra.mxu0 0
        %1072 = vmatprep.mubr.bf16.mxu0 0
        %1073 = vmatmul.mubr.bf16.gmra.mrb[0].mxu0 %v1035
        %v1074 = vpop.f32.mrb[0].mxu0
        %v1075 = vadd.f32 0.0, %v1074
        %v1076 = vpop.f32.mrb[0].mxu0
        %v1077 = vpop.f32.mrb[0].mxu0
        %v1078 = vpop.f32.mrb[0].mxu0
        %1079 = vdwg.mxu0
        %s1080 = scalar_lea.vmem [#allocation4], 24
        %v1081 = vld [vmem:[%s1080] sm:$0xff]
        %v1082 = vsel %vm664, %v1075, -inf
        %1083 = vmax.xlane.f32.xlu0 %v1082
        %v1084 = vpop.xlane.xlu0 %1083
        %v1085 = vmax.f32 %v1081, %v1084
        %v1086 = vsub.f32 %v1081, %v1085
        %v1087 = vmul.f32 %v1086, 1.442695
        %v1088 = vpow.pop %v1087
        %1090 = vset.pattern.permute.xlu0 0
        %1091 = vperm.xlu0 %1090, %v1085
        %v1092 = vpop.permute.xlu0 %1091
        %v1094 = vsub.f32 %v1075, %v1092
        %v1095 = vmul.f32 %v1094, 1.442695
        %v1096 = vpow.pop %v1095
        %s1097 = scalar_lea.vmem [#allocation5], 24
        %v1098 = vld [vmem:[%s1097] sm:$0xff]
        %v1099 = vmul.f32 %v1088, %v1098
        %v1100 = vsel %vm664, %v1096, 0.0
        %1101 = vadd.xlane.f32.xlu0 %v1100
        %v1102 = vpop.xlane.xlu0 %1101
        %v1103 = vadd.f32 %v1099, %v1102
        %1104 = vst.msk [vmem:[%s1097] sm:$0xff] %vm686, %v1103
        %s1105 = scalar_lea.vmem [#allocation6], 24
        %v1106 = vld [vmem:[%s1105] sm:$0xff]
        %1108 = vset.pattern.permute.xlu0 0
        %1109 = vperm.xlu0 %1108, %v1088
        %v1110 = vpop.permute.xlu0 %1109
        %v1112 = vmul.f32 %v1110, %v1106
        %v1113 = vpack.c.bf16 %v1096, %v1096
        %1114 = vrot.lane.b32.xlu0 %v614, 116
        %v1115 = vpop.permute.xlu0 %1114
        %v1117 = vsel %vm664, %v1113, 0
        %v1120 = vsel %vm699, %v1115, 0
        %1122 = vmatprep.subr.bf16.mxu0 0
        %1123 = vmatpush1.bf16.msra.mxu0 %v1120
        %1124 = vmatprep.subr.bf16.mxu0 0
        %1125 = vmatpush1.bf16.msra.mxu0 0
        %1126 = vmatprep.subr.bf16.mxu0 0
        %1127 = vmatpush1.bf16.msra.mxu0 0
        %1128 = vmatprep.subr.bf16.mxu0 0
        %1129 = vmatpush1.bf16.msra.mxu0 0
        %1130 = vmatprep.subr.bf16.mxu0 0
        %1131 = vmatpush1.bf16.msra.mxu0 0
        %1132 = vmatprep.subr.bf16.mxu0 0
        %1133 = vmatpush1.bf16.msra.mxu0 0
        %1134 = vmatprep.subr.bf16.mxu0 0
        %1135 = vmatpush1.bf16.msra.mxu0 0
        %1136 = vmatprep.subr.bf16.mxu0 0
        %1137 = vmatpush1.bf16.msra.mxu0 0
        %1138 = vmatprep.subr.bf16.mxu0 0
        %1139 = vmatpush1.bf16.msra.mxu0 0
        %1140 = vmatprep.subr.bf16.mxu0 0
        %1141 = vmatpush1.bf16.msra.mxu0 0
        %1142 = vmatprep.subr.bf16.mxu0 0
        %1143 = vmatpush1.bf16.msra.mxu0 0
        %1144 = vmatprep.subr.bf16.mxu0 0
        %1145 = vmatpush1.bf16.msra.mxu0 0
        %1146 = vmatprep.subr.bf16.mxu0 0
        %1147 = vmatpush1.bf16.msra.mxu0 0
        %1148 = vmatprep.subr.bf16.mxu0 0
        %1149 = vmatpush1.bf16.msra.mxu0 0
        %1150 = vmatprep.subr.bf16.mxu0 0
        %1151 = vmatpush1.bf16.msra.mxu0 0
        %1152 = vmatprep.subr.bf16.mxu0 0
        %1153 = vmatpush1.bf16.msra.mxu0 0
        %1154 = vmatprep.mubr.bf16.mxu0 0
        %1155 = vmatmul.mubr.bf16.gmra.mrb[0].mxu0 %v1117
        %v1156 = vpop.f32.mrb[0].mxu0
        %v1157 = vadd.f32 0.0, %v1156
        %v1158 = vpop.f32.mrb[0].mxu0
        %v1159 = vpop.f32.mrb[0].mxu0
        %v1160 = vpop.f32.mrb[0].mxu0
        %1161 = vdwg.mxu0
        %v1162 = vadd.f32 %v1112, %v1157
        %1163 = vst.msk [vmem:[%s1105] sm:$0xff] %vm616, %v1162
        %1164 = vst.msk [vmem:[%s1080] sm:$0xff] %vm686, %v1085
        %v1165 = vld [vmem:[#allocation2] sm:$0xf]
        %v1167 = vunpack.c.l.b16 %v1165
        %v1168 = vpack.c.b16 %v1167, %v1167
        %1169 = vrot.lane.b32.xlu0 %v1168, 112
        %v1170 = vpop.permute.xlu0 %1169
        %1171 = vrot.lane.b32.xlu0 %v557, 112
        %v1172 = vpop.permute.xlu0 %1171
        %v1174 = vsel %vm616, %v1170, 0
        %v1177 = vsel %vm616, %v1172, 0
        %1179 = vmatprep.subr.bf16.mxu0 0
        %1180 = vmatpush1.bf16.xpose.msra.mxu0 %v1177
        %1181 = vmatprep.subr.bf16.mxu0 0
        %1182 = vmatpush1.bf16.xpose.msra.mxu0 0
        %1183 = vmatprep.subr.bf16.mxu0 0
        %1184 = vmatpush1.bf16.xpose.msra.mxu0 0
        %1185 = vmatprep.subr.bf16.mxu0 0
        %1186 = vmatpush1.bf16.xpose.msra.mxu0 0
        %1187 = vmatprep.subr.bf16.mxu0 0
        %1188 = vmatpush1.bf16.xpose.msra.mxu0 0
        %1189 = vmatprep.subr.bf16.mxu0 0
        %1190 = vmatpush1.bf16.xpose.msra.mxu0 0
        %1191 = vmatprep.subr.bf16.mxu0 0
        %1192 = vmatpush1.bf16.xpose.msra.mxu0 0
        %1193 = vmatprep.subr.bf16.mxu0 0
        %1194 = vmatpush1.bf16.xpose.msra.mxu0 0
        %1195 = vmatprep.subr.bf16.mxu0 0
        %1196 = vmatpush1.bf16.xpose.msra.mxu0 0
        %1197 = vmatprep.subr.bf16.mxu0 0
        %1198 = vmatpush1.bf16.xpose.msra.mxu0 0
        %1199 = vmatprep.subr.bf16.mxu0 0
        %1200 = vmatpush1.bf16.xpose.msra.mxu0 0
        %1201 = vmatprep.subr.bf16.mxu0 0
        %1202 = vmatpush1.bf16.xpose.msra.mxu0 0
        %1203 = vmatprep.subr.bf16.mxu0 0
        %1204 = vmatpush1.bf16.xpose.msra.mxu0 0
        %1205 = vmatprep.subr.bf16.mxu0 0
        %1206 = vmatpush1.bf16.xpose.msra.mxu0 0
        %1207 = vmatprep.subr.bf16.mxu0 0
        %1208 = vmatpush1.bf16.xpose.msra.mxu0 0
        %1209 = vmatprep.subr.bf16.mxu0 0
        %1210 = vmatpush1.bf16.xpose.msra.mxu0 0
        %1211 = vmatprep.mubr.bf16.mxu0 0
        %1212 = vmatmul.mubr.bf16.gmra.mrb[0].mxu0 %v1174
        %v1213 = vpop.f32.mrb[0].mxu0
        %v1214 = vadd.f32 0.0, %v1213
        %v1215 = vpop.f32.mrb[0].mxu0
        %v1216 = vpop.f32.mrb[0].mxu0
        %v1217 = vpop.f32.mrb[0].mxu0
        %1218 = vdwg.mxu0
        %s1219 = scalar_lea.vmem [#allocation4], 32
        %v1220 = vld [vmem:[%s1219] sm:$0xff]
        %v1221 = vsel %vm664, %v1214, -inf
        %1222 = vmax.xlane.f32.xlu0 %v1221
        %v1223 = vpop.xlane.xlu0 %1222
        %v1224 = vmax.f32 %v1220, %v1223
        %v1225 = vsub.f32 %v1220, %v1224
        %v1226 = vmul.f32 %v1225, 1.442695
        %v1227 = vpow.pop %v1226
        %1229 = vset.pattern.permute.xlu0 0
        %1230 = vperm.xlu0 %1229, %v1224
        %v1231 = vpop.permute.xlu0 %1230
        %v1233 = vsub.f32 %v1214, %v1231
        %v1234 = vmul.f32 %v1233, 1.442695
        %v1235 = vpow.pop %v1234
        %s1236 = scalar_lea.vmem [#allocation5], 32
        %v1237 = vld [vmem:[%s1236] sm:$0xff]
        %v1238 = vmul.f32 %v1227, %v1237
        %v1239 = vsel %vm664, %v1235, 0.0
        %1240 = vadd.xlane.f32.xlu0 %v1239
        %v1241 = vpop.xlane.xlu0 %1240
        %v1242 = vadd.f32 %v1238, %v1241
        %1243 = vst.msk [vmem:[%s1236] sm:$0xff] %vm686, %v1242
        %s1244 = scalar_lea.vmem [#allocation6], 32
        %v1245 = vld [vmem:[%s1244] sm:$0xff]
        %1247 = vset.pattern.permute.xlu0 0
        %1248 = vperm.xlu0 %1247, %v1227
        %v1249 = vpop.permute.xlu0 %1248
        %v1251 = vmul.f32 %v1249, %v1245
        %v1252 = vpack.c.bf16 %v1235, %v1235
        %1253 = vrot.lane.b32.xlu0 %v614, 112
        %v1254 = vpop.permute.xlu0 %1253
        %v1256 = vsel %vm664, %v1252, 0
        %v1259 = vsel %vm699, %v1254, 0
        %1261 = vmatprep.subr.bf16.mxu0 0
        %1262 = vmatpush1.bf16.msra.mxu0 %v1259
        %1263 = vmatprep.subr.bf16.mxu0 0
        %1264 = vmatpush1.bf16.msra.mxu0 0
        %1265 = vmatprep.subr.bf16.mxu0 0
        %1266 = vmatpush1.bf16.msra.mxu0 0
        %1267 = vmatprep.subr.bf16.mxu0 0
        %1268 = vmatpush1.bf16.msra.mxu0 0
        %1269 = vmatprep.subr.bf16.mxu0 0
        %1270 = vmatpush1.bf16.msra.mxu0 0
        %1271 = vmatprep.subr.bf16.mxu0 0
        %1272 = vmatpush1.bf16.msra.mxu0 0
        %1273 = vmatprep.subr.bf16.mxu0 0
        %1274 = vmatpush1.bf16.msra.mxu0 0
        %1275 = vmatprep.subr.bf16.mxu0 0
        %1276 = vmatpush1.bf16.msra.mxu0 0
        %1277 = vmatprep.subr.bf16.mxu0 0
        %1278 = vmatpush1.bf16.msra.mxu0 0
        %1279 = vmatprep.subr.bf16.mxu0 0
        %1280 = vmatpush1.bf16.msra.mxu0 0
        %1281 = vmatprep.subr.bf16.mxu0 0
        %1282 = vmatpush1.bf16.msra.mxu0 0
        %1283 = vmatprep.subr.bf16.mxu0 0
        %1284 = vmatpush1.bf16.msra.mxu0 0
        %1285 = vmatprep.subr.bf16.mxu0 0
        %1286 = vmatpush1.bf16.msra.mxu0 0
        %1287 = vmatprep.subr.bf16.mxu0 0
        %1288 = vmatpush1.bf16.msra.mxu0 0
        %1289 = vmatprep.subr.bf16.mxu0 0
        %1290 = vmatpush1.bf16.msra.mxu0 0
        %1291 = vmatprep.subr.bf16.mxu0 0
        %1292 = vmatpush1.bf16.msra.mxu0 0
        %1293 = vmatprep.mubr.bf16.mxu0 0
        %1294 = vmatmul.mubr.bf16.gmra.mrb[0].mxu0 %v1256
        %v1295 = vpop.f32.mrb[0].mxu0
        %v1296 = vadd.f32 0.0, %v1295
        %v1297 = vpop.f32.mrb[0].mxu0
        %v1298 = vpop.f32.mrb[0].mxu0
        %v1299 = vpop.f32.mrb[0].mxu0
        %1300 = vdwg.mxu0
        %v1301 = vadd.f32 %v1251, %v1296
        %1302 = vst.msk [vmem:[%s1244] sm:$0xff] %vm616, %v1301
        %1303 = vst.msk [vmem:[%s1219] sm:$0xff] %vm686, %v1224
        %v1304 = vld [vmem:[#allocation2] sm:$0xf]
        %v1306 = vunpack.c.l.b16 %v1304
        %v1307 = vpack.c.b16 %v1306, %v1306
        %1308 = vrot.lane.b32.xlu0 %v1307, 108
        %v1309 = vpop.permute.xlu0 %1308
        %1310 = vrot.lane.b32.xlu0 %v557, 108
        %v1311 = vpop.permute.xlu0 %1310
        %v1313 = vsel %vm616, %v1309, 0
        %v1316 = vsel %vm616, %v1311, 0
        %1318 = vmatprep.subr.bf16.mxu0 0
        %1319 = vmatpush1.bf16.xpose.msra.mxu0 %v1316
        %1320 = vmatprep.subr.bf16.mxu0 0
        %1321 = vmatpush1.bf16.xpose.msra.mxu0 0
        %1322 = vmatprep.subr.bf16.mxu0 0
        %1323 = vmatpush1.bf16.xpose.msra.mxu0 0
        %1324 = vmatprep.subr.bf16.mxu0 0
        %1325 = vmatpush1.bf16.xpose.msra.mxu0 0
        %1326 = vmatprep.subr.bf16.mxu0 0
        %1327 = vmatpush1.bf16.xpose.msra.mxu0 0
        %1328 = vmatprep.subr.bf16.mxu0 0
        %1329 = vmatpush1.bf16.xpose.msra.mxu0 0
        %1330 = vmatprep.subr.bf16.mxu0 0
        %1331 = vmatpush1.bf16.xpose.msra.mxu0 0
        %1332 = vmatprep.subr.bf16.mxu0 0
        %1333 = vmatpush1.bf16.xpose.msra.mxu0 0
        %1334 = vmatprep.subr.bf16.mxu0 0
        %1335 = vmatpush1.bf16.xpose.msra.mxu0 0
        %1336 = vmatprep.subr.bf16.mxu0 0
        %1337 = vmatpush1.bf16.xpose.msra.mxu0 0
        %1338 = vmatprep.subr.bf16.mxu0 0
        %1339 = vmatpush1.bf16.xpose.msra.mxu0 0
        %1340 = vmatprep.subr.bf16.mxu0 0
        %1341 = vmatpush1.bf16.xpose.msra.mxu0 0
        %1342 = vmatprep.subr.bf16.mxu0 0
        %1343 = vmatpush1.bf16.xpose.msra.mxu0 0
        %1344 = vmatprep.subr.bf16.mxu0 0
        %1345 = vmatpush1.bf16.xpose.msra.mxu0 0
        %1346 = vmatprep.subr.bf16.mxu0 0
        %1347 = vmatpush1.bf16.xpose.msra.mxu0 0
        %1348 = vmatprep.subr.bf16.mxu0 0
        %1349 = vmatpush1.bf16.xpose.msra.mxu0 0
        %1350 = vmatprep.mubr.bf16.mxu0 0
        %1351 = vmatmul.mubr.bf16.gmra.mrb[0].mxu0 %v1313
        %v1352 = vpop.f32.mrb[0].mxu0
        %v1353 = vadd.f32 0.0, %v1352
        %v1354 = vpop.f32.mrb[0].mxu0
        %v1355 = vpop.f32.mrb[0].mxu0
        %v1356 = vpop.f32.mrb[0].mxu0
        %1357 = vdwg.mxu0
        %s1358 = scalar_lea.vmem [#allocation4], 40
        %v1359 = vld [vmem:[%s1358] sm:$0xff]
        %v1360 = vsel %vm664, %v1353, -inf
        %1361 = vmax.xlane.f32.xlu0 %v1360
        %v1362 = vpop.xlane.xlu0 %1361
        %v1363 = vmax.f32 %v1359, %v1362
        %v1364 = vsub.f32 %v1359, %v1363
        %v1365 = vmul.f32 %v1364, 1.442695
        %v1366 = vpow.pop %v1365
        %1368 = vset.pattern.permute.xlu0 0
        %1369 = vperm.xlu0 %1368, %v1363
        %v1370 = vpop.permute.xlu0 %1369
        %v1372 = vsub.f32 %v1353, %v1370
        %v1373 = vmul.f32 %v1372, 1.442695
        %v1374 = vpow.pop %v1373
        %s1375 = scalar_lea.vmem [#allocation5], 40
        %v1376 = vld [vmem:[%s1375] sm:$0xff]
        %v1377 = vmul.f32 %v1366, %v1376
        %v1378 = vsel %vm664, %v1374, 0.0
        %1379 = vadd.xlane.f32.xlu0 %v1378
        %v1380 = vpop.xlane.xlu0 %1379
        %v1381 = vadd.f32 %v1377, %v1380
        %1382 = vst.msk [vmem:[%s1375] sm:$0xff] %vm686, %v1381
        %s1383 = scalar_lea.vmem [#allocation6], 40
        %v1384 = vld [vmem:[%s1383] sm:$0xff]
        %1386 = vset.pattern.permute.xlu0 0
        %1387 = vperm.xlu0 %1386, %v1366
        %v1388 = vpop.permute.xlu0 %1387
        %v1390 = vmul.f32 %v1388, %v1384
        %v1391 = vpack.c.bf16 %v1374, %v1374
        %1392 = vrot.lane.b32.xlu0 %v614, 108
        %v1393 = vpop.permute.xlu0 %1392
        %v1395 = vsel %vm664, %v1391, 0
        %v1398 = vsel %vm699, %v1393, 0
        %1400 = vmatprep.subr.bf16.mxu0 0
        %1401 = vmatpush1.bf16.msra.mxu0 %v1398
        %1402 = vmatprep.subr.bf16.mxu0 0
        %1403 = vmatpush1.bf16.msra.mxu0 0
        %1404 = vmatprep.subr.bf16.mxu0 0
        %1405 = vmatpush1.bf16.msra.mxu0 0
        %1406 = vmatprep.subr.bf16.mxu0 0
        %1407 = vmatpush1.bf16.msra.mxu0 0
        %1408 = vmatprep.subr.bf16.mxu0 0
        %1409 = vmatpush1.bf16.msra.mxu0 0
        %1410 = vmatprep.subr.bf16.mxu0 0
        %1411 = vmatpush1.bf16.msra.mxu0 0
        %1412 = vmatprep.subr.bf16.mxu0 0
        %1413 = vmatpush1.bf16.msra.mxu0 0
        %1414 = vmatprep.subr.bf16.mxu0 0
        %1415 = vmatpush1.bf16.msra.mxu0 0
        %1416 = vmatprep.subr.bf16.mxu0 0
        %1417 = vmatpush1.bf16.msra.mxu0 0
        %1418 = vmatprep.subr.bf16.mxu0 0
        %1419 = vmatpush1.bf16.msra.mxu0 0
        %1420 = vmatprep.subr.bf16.mxu0 0
        %1421 = vmatpush1.bf16.msra.mxu0 0
        %1422 = vmatprep.subr.bf16.mxu0 0
        %1423 = vmatpush1.bf16.msra.mxu0 0
        %1424 = vmatprep.subr.bf16.mxu0 0
        %1425 = vmatpush1.bf16.msra.mxu0 0
        %1426 = vmatprep.subr.bf16.mxu0 0
        %1427 = vmatpush1.bf16.msra.mxu0 0
        %1428 = vmatprep.subr.bf16.mxu0 0
        %1429 = vmatpush1.bf16.msra.mxu0 0
        %1430 = vmatprep.subr.bf16.mxu0 0
        %1431 = vmatpush1.bf16.msra.mxu0 0
        %1432 = vmatprep.mubr.bf16.mxu0 0
        %1433 = vmatmul.mubr.bf16.gmra.mrb[0].mxu0 %v1395
        %v1434 = vpop.f32.mrb[0].mxu0
        %v1435 = vadd.f32 0.0, %v1434
        %v1436 = vpop.f32.mrb[0].mxu0
        %v1437 = vpop.f32.mrb[0].mxu0
        %v1438 = vpop.f32.mrb[0].mxu0
        %1439 = vdwg.mxu0
        %v1440 = vadd.f32 %v1390, %v1435
        %1441 = vst.msk [vmem:[%s1383] sm:$0xff] %vm616, %v1440
        %1442 = vst.msk [vmem:[%s1358] sm:$0xff] %vm686, %v1363
        %v1443 = vld [vmem:[#allocation2] sm:$0xf]
        %v1445 = vunpack.c.l.b16 %v1443
        %v1446 = vpack.c.b16 %v1445, %v1445
        %1447 = vrot.lane.b32.xlu0 %v1446, 104
        %v1448 = vpop.permute.xlu0 %1447
        %1449 = vrot.lane.b32.xlu0 %v557, 104
        %v1450 = vpop.permute.xlu0 %1449
        %v1452 = vsel %vm616, %v1448, 0
        %v1455 = vsel %vm616, %v1450, 0
        %1457 = vmatprep.subr.bf16.mxu0 0
        %1458 = vmatpush1.bf16.xpose.msra.mxu0 %v1455
        %1459 = vmatprep.subr.bf16.mxu0 0
        %1460 = vmatpush1.bf16.xpose.msra.mxu0 0
        %1461 = vmatprep.subr.bf16.mxu0 0
        %1462 = vmatpush1.bf16.xpose.msra.mxu0 0
        %1463 = vmatprep.subr.bf16.mxu0 0
        %1464 = vmatpush1.bf16.xpose.msra.mxu0 0
        %1465 = vmatprep.subr.bf16.mxu0 0
        %1466 = vmatpush1.bf16.xpose.msra.mxu0 0
        %1467 = vmatprep.subr.bf16.mxu0 0
        %1468 = vmatpush1.bf16.xpose.msra.mxu0 0
        %1469 = vmatprep.subr.bf16.mxu0 0
        %1470 = vmatpush1.bf16.xpose.msra.mxu0 0
        %1471 = vmatprep.subr.bf16.mxu0 0
        %1472 = vmatpush1.bf16.xpose.msra.mxu0 0
        %1473 = vmatprep.subr.bf16.mxu0 0
        %1474 = vmatpush1.bf16.xpose.msra.mxu0 0
        %1475 = vmatprep.subr.bf16.mxu0 0
        %1476 = vmatpush1.bf16.xpose.msra.mxu0 0
        %1477 = vmatprep.subr.bf16.mxu0 0
        %1478 = vmatpush1.bf16.xpose.msra.mxu0 0
        %1479 = vmatprep.subr.bf16.mxu0 0
        %1480 = vmatpush1.bf16.xpose.msra.mxu0 0
        %1481 = vmatprep.subr.bf16.mxu0 0
        %1482 = vmatpush1.bf16.xpose.msra.mxu0 0
        %1483 = vmatprep.subr.bf16.mxu0 0
        %1484 = vmatpush1.bf16.xpose.msra.mxu0 0
        %1485 = vmatprep.subr.bf16.mxu0 0
        %1486 = vmatpush1.bf16.xpose.msra.mxu0 0
        %1487 = vmatprep.subr.bf16.mxu0 0
        %1488 = vmatpush1.bf16.xpose.msra.mxu0 0
        %1489 = vmatprep.mubr.bf16.mxu0 0
        %1490 = vmatmul.mubr.bf16.gmra.mrb[0].mxu0 %v1452
        %v1491 = vpop.f32.mrb[0].mxu0
        %v1492 = vadd.f32 0.0, %v1491
        %v1493 = vpop.f32.mrb[0].mxu0
        %v1494 = vpop.f32.mrb[0].mxu0
        %v1495 = vpop.f32.mrb[0].mxu0
        %1496 = vdwg.mxu0
        %s1497 = scalar_lea.vmem [#allocation4], 48
        %v1498 = vld [vmem:[%s1497] sm:$0xff]
        %v1499 = vsel %vm664, %v1492, -inf
        %1500 = vmax.xlane.f32.xlu0 %v1499
        %v1501 = vpop.xlane.xlu0 %1500
        %v1502 = vmax.f32 %v1498, %v1501
        %v1503 = vsub.f32 %v1498, %v1502
        %v1504 = vmul.f32 %v1503, 1.442695
        %v1505 = vpow.pop %v1504
        %1507 = vset.pattern.permute.xlu0 0
        %1508 = vperm.xlu0 %1507, %v1502
        %v1509 = vpop.permute.xlu0 %1508
        %v1511 = vsub.f32 %v1492, %v1509
        %v1512 = vmul.f32 %v1511, 1.442695
        %v1513 = vpow.pop %v1512
        %s1514 = scalar_lea.vmem [#allocation5], 48
        %v1515 = vld [vmem:[%s1514] sm:$0xff]
        %v1516 = vmul.f32 %v1505, %v1515
        %v1517 = vsel %vm664, %v1513, 0.0
        %1518 = vadd.xlane.f32.xlu0 %v1517
        %v1519 = vpop.xlane.xlu0 %1518
        %v1520 = vadd.f32 %v1516, %v1519
        %1521 = vst.msk [vmem:[%s1514] sm:$0xff] %vm686, %v1520
        %s1522 = scalar_lea.vmem [#allocation6], 48
        %v1523 = vld [vmem:[%s1522] sm:$0xff]
        %1525 = vset.pattern.permute.xlu0 0
        %1526 = vperm.xlu0 %1525, %v1505
        %v1527 = vpop.permute.xlu0 %1526
        %v1529 = vmul.f32 %v1527, %v1523
        %v1530 = vpack.c.bf16 %v1513, %v1513
        %1531 = vrot.lane.b32.xlu0 %v614, 104
        %v1532 = vpop.permute.xlu0 %1531
        %v1534 = vsel %vm664, %v1530, 0
        %v1537 = vsel %vm699, %v1532, 0
        %1539 = vmatprep.subr.bf16.mxu0 0
        %1540 = vmatpush1.bf16.msra.mxu0 %v1537
        %1541 = vmatprep.subr.bf16.mxu0 0
        %1542 = vmatpush1.bf16.msra.mxu0 0
        %1543 = vmatprep.subr.bf16.mxu0 0
        %1544 = vmatpush1.bf16.msra.mxu0 0
        %1545 = vmatprep.subr.bf16.mxu0 0
        %1546 = vmatpush1.bf16.msra.mxu0 0
        %1547 = vmatprep.subr.bf16.mxu0 0
        %1548 = vmatpush1.bf16.msra.mxu0 0
        %1549 = vmatprep.subr.bf16.mxu0 0
        %1550 = vmatpush1.bf16.msra.mxu0 0
        %1551 = vmatprep.subr.bf16.mxu0 0
        %1552 = vmatpush1.bf16.msra.mxu0 0
        %1553 = vmatprep.subr.bf16.mxu0 0
        %1554 = vmatpush1.bf16.msra.mxu0 0
        %1555 = vmatprep.subr.bf16.mxu0 0
        %1556 = vmatpush1.bf16.msra.mxu0 0
        %1557 = vmatprep.subr.bf16.mxu0 0
        %1558 = vmatpush1.bf16.msra.mxu0 0
        %1559 = vmatprep.subr.bf16.mxu0 0
        %1560 = vmatpush1.bf16.msra.mxu0 0
        %1561 = vmatprep.subr.bf16.mxu0 0
        %1562 = vmatpush1.bf16.msra.mxu0 0
        %1563 = vmatprep.subr.bf16.mxu0 0
        %1564 = vmatpush1.bf16.msra.mxu0 0
        %1565 = vmatprep.subr.bf16.mxu0 0
        %1566 = vmatpush1.bf16.msra.mxu0 0
        %1567 = vmatprep.subr.bf16.mxu0 0
        %1568 = vmatpush1.bf16.msra.mxu0 0
        %1569 = vmatprep.subr.bf16.mxu0 0
        %1570 = vmatpush1.bf16.msra.mxu0 0
        %1571 = vmatprep.mubr.bf16.mxu0 0
        %1572 = vmatmul.mubr.bf16.gmra.mrb[0].mxu0 %v1534
        %v1573 = vpop.f32.mrb[0].mxu0
        %v1574 = vadd.f32 0.0, %v1573
        %v1575 = vpop.f32.mrb[0].mxu0
        %v1576 = vpop.f32.mrb[0].mxu0
        %v1577 = vpop.f32.mrb[0].mxu0
        %1578 = vdwg.mxu0
        %v1579 = vadd.f32 %v1529, %v1574
        %1580 = vst.msk [vmem:[%s1522] sm:$0xff] %vm616, %v1579
        %1581 = vst.msk [vmem:[%s1497] sm:$0xff] %vm686, %v1502
        %v1582 = vld [vmem:[#allocation2] sm:$0xf]
        %v1584 = vunpack.c.l.b16 %v1582
        %v1585 = vpack.c.b16 %v1584, %v1584
        %1586 = vrot.lane.b32.xlu0 %v1585, 100
        %v1587 = vpop.permute.xlu0 %1586
        %1588 = vrot.lane.b32.xlu0 %v557, 100
        %v1589 = vpop.permute.xlu0 %1588
        %v1591 = vsel %vm616, %v1587, 0
        %v1594 = vsel %vm616, %v1589, 0
        %1596 = vmatprep.subr.bf16.mxu0 0
        %1597 = vmatpush1.bf16.xpose.msra.mxu0 %v1594
        %1598 = vmatprep.subr.bf16.mxu0 0
        %1599 = vmatpush1.bf16.xpose.msra.mxu0 0
        %1600 = vmatprep.subr.bf16.mxu0 0
        %1601 = vmatpush1.bf16.xpose.msra.mxu0 0
        %1602 = vmatprep.subr.bf16.mxu0 0
        %1603 = vmatpush1.bf16.xpose.msra.mxu0 0
        %1604 = vmatprep.subr.bf16.mxu0 0
        %1605 = vmatpush1.bf16.xpose.msra.mxu0 0
        %1606 = vmatprep.subr.bf16.mxu0 0
        %1607 = vmatpush1.bf16.xpose.msra.mxu0 0
        %1608 = vmatprep.subr.bf16.mxu0 0
        %1609 = vmatpush1.bf16.xpose.msra.mxu0 0
        %1610 = vmatprep.subr.bf16.mxu0 0
        %1611 = vmatpush1.bf16.xpose.msra.mxu0 0
        %1612 = vmatprep.subr.bf16.mxu0 0
        %1613 = vmatpush1.bf16.xpose.msra.mxu0 0
        %1614 = vmatprep.subr.bf16.mxu0 0
        %1615 = vmatpush1.bf16.xpose.msra.mxu0 0
        %1616 = vmatprep.subr.bf16.mxu0 0
        %1617 = vmatpush1.bf16.xpose.msra.mxu0 0
        %1618 = vmatprep.subr.bf16.mxu0 0
        %1619 = vmatpush1.bf16.xpose.msra.mxu0 0
        %1620 = vmatprep.subr.bf16.mxu0 0
        %1621 = vmatpush1.bf16.xpose.msra.mxu0 0
        %1622 = vmatprep.subr.bf16.mxu0 0
        %1623 = vmatpush1.bf16.xpose.msra.mxu0 0
        %1624 = vmatprep.subr.bf16.mxu0 0
        %1625 = vmatpush1.bf16.xpose.msra.mxu0 0
        %1626 = vmatprep.subr.bf16.mxu0 0
        %1627 = vmatpush1.bf16.xpose.msra.mxu0 0
        %1628 = vmatprep.mubr.bf16.mxu0 0
        %1629 = vmatmul.mubr.bf16.gmra.mrb[0].mxu0 %v1591
        %v1630 = vpop.f32.mrb[0].mxu0
        %v1631 = vadd.f32 0.0, %v1630
        %v1632 = vpop.f32.mrb[0].mxu0
        %v1633 = vpop.f32.mrb[0].mxu0
        %v1634 = vpop.f32.mrb[0].mxu0
        %1635 = vdwg.mxu0
        %s1636 = scalar_lea.vmem [#allocation4], 56
        %v1637 = vld [vmem:[%s1636] sm:$0xff]
        %v1638 = vsel %vm664, %v1631, -inf
        %1639 = vmax.xlane.f32.xlu0 %v1638
        %v1640 = vpop.xlane.xlu0 %1639
        %v1641 = vmax.f32 %v1637, %v1640
        %v1642 = vsub.f32 %v1637, %v1641
        %v1643 = vmul.f32 %v1642, 1.442695
        %v1644 = vpow.pop %v1643
        %1646 = vset.pattern.permute.xlu0 0
        %1647 = vperm.xlu0 %1646, %v1641
        %v1648 = vpop.permute.xlu0 %1647
        %v1650 = vsub.f32 %v1631, %v1648
        %v1651 = vmul.f32 %v1650, 1.442695
        %v1652 = vpow.pop %v1651
        %s1653 = scalar_lea.vmem [#allocation5], 56
        %v1654 = vld [vmem:[%s1653] sm:$0xff]
        %v1655 = vmul.f32 %v1644, %v1654
        %v1656 = vsel %vm664, %v1652, 0.0
        %1657 = vadd.xlane.f32.xlu0 %v1656
        %v1658 = vpop.xlane.xlu0 %1657
        %v1659 = vadd.f32 %v1655, %v1658
        %1660 = vst.msk [vmem:[%s1653] sm:$0xff] %vm686, %v1659
        %s1661 = scalar_lea.vmem [#allocation6], 56
        %v1662 = vld [vmem:[%s1661] sm:$0xff]
        %1664 = vset.pattern.permute.xlu0 0
        %1665 = vperm.xlu0 %1664, %v1644
        %v1666 = vpop.permute.xlu0 %1665
        %v1668 = vmul.f32 %v1666, %v1662
        %v1669 = vpack.c.bf16 %v1652, %v1652
        %1670 = vrot.lane.b32.xlu0 %v614, 100
        %v1671 = vpop.permute.xlu0 %1670
        %v1673 = vsel %vm664, %v1669, 0
        %v1676 = vsel %vm699, %v1671, 0
        %1678 = vmatprep.subr.bf16.mxu0 0
        %1679 = vmatpush1.bf16.msra.mxu0 %v1676
        %1680 = vmatprep.subr.bf16.mxu0 0
        %1681 = vmatpush1.bf16.msra.mxu0 0
        %1682 = vmatprep.subr.bf16.mxu0 0
        %1683 = vmatpush1.bf16.msra.mxu0 0
        %1684 = vmatprep.subr.bf16.mxu0 0
        %1685 = vmatpush1.bf16.msra.mxu0 0
        %1686 = vmatprep.subr.bf16.mxu0 0
        %1687 = vmatpush1.bf16.msra.mxu0 0
        %1688 = vmatprep.subr.bf16.mxu0 0
        %1689 = vmatpush1.bf16.msra.mxu0 0
        %1690 = vmatprep.subr.bf16.mxu0 0
        %1691 = vmatpush1.bf16.msra.mxu0 0
        %1692 = vmatprep.subr.bf16.mxu0 0
        %1693 = vmatpush1.bf16.msra.mxu0 0
        %1694 = vmatprep.subr.bf16.mxu0 0
        %1695 = vmatpush1.bf16.msra.mxu0 0
        %1696 = vmatprep.subr.bf16.mxu0 0
        %1697 = vmatpush1.bf16.msra.mxu0 0
        %1698 = vmatprep.subr.bf16.mxu0 0
        %1699 = vmatpush1.bf16.msra.mxu0 0
        %1700 = vmatprep.subr.bf16.mxu0 0
        %1701 = vmatpush1.bf16.msra.mxu0 0
        %1702 = vmatprep.subr.bf16.mxu0 0
        %1703 = vmatpush1.bf16.msra.mxu0 0
        %1704 = vmatprep.subr.bf16.mxu0 0
        %1705 = vmatpush1.bf16.msra.mxu0 0
        %1706 = vmatprep.subr.bf16.mxu0 0
        %1707 = vmatpush1.bf16.msra.mxu0 0
        %1708 = vmatprep.subr.bf16.mxu0 0
        %1709 = vmatpush1.bf16.msra.mxu0 0
        %1710 = vmatprep.mubr.bf16.mxu0 0
        %1711 = vmatmul.mubr.bf16.gmra.mrb[0].mxu0 %v1673
        %v1712 = vpop.f32.mrb[0].mxu0
        %v1713 = vadd.f32 0.0, %v1712
        %v1714 = vpop.f32.mrb[0].mxu0
        %v1715 = vpop.f32.mrb[0].mxu0
        %v1716 = vpop.f32.mrb[0].mxu0
        %1717 = vdwg.mxu0
        %v1718 = vadd.f32 %v1668, %v1713
        %1719 = vst.msk [vmem:[%s1661] sm:$0xff] %vm616, %v1718
        %1720 = vst.msk [vmem:[%s1636] sm:$0xff] %vm686, %v1641
        // Predicated region
        $region73: #{tpu_custom_call.1} parent=47 // pred_check
          %p1721 = pneg %p402
        $region74: #{tpu_custom_call.1} parent=47 // pred_check_branch
          %1723 = sbr.rel (%p1721) target = $region76
        $region75: #{tpu_custom_call.1} parent=47 // pred_region
          %v1724 = vld [vmem:[#allocation6] sm:$0xff]
          %v1725 = vld [vmem:[#allocation5] sm:$0xff]
          %v1726 = vrcp.pop %v1725
          %1728 = vset.pattern.permute.xlu0 0
          %1729 = vperm.xlu0 %1728, %v1726
          %v1730 = vpop.permute.xlu0 %1729
          %v1732 = vmul.f32 %v1724, %v1730
          %v1733 = vpack.c.bf16 %v1732, %v1732
          %vm1734 = vcmask 27648
          %1735 = vst.msk [vmem:[#allocation3] sm:$0xf] %vm1734, %v1733
          %v1736 = vld [vmem:[%s826] sm:$0xff]
          %v1737 = vld [vmem:[%s818] sm:$0xff]
          %v1738 = vrcp.pop %v1737
          %1740 = vset.pattern.permute.xlu0 0
          %1741 = vperm.xlu0 %1740, %v1738
          %v1742 = vpop.permute.xlu0 %1741
          %v1744 = vmul.f32 %v1736, %v1742
          %v1745 = vpack.c.bf16 %v1744, %v1744
          %v1747 = vunpack.c.l.b16 %v1745
          %v1748 = vpack.c.b16 %v1747, %v1747
          %1749 = vrot.lane.b32.xlu0 %v1748, 4
          %v1750 = vpop.permute.xlu0 %1749
          %vm1752 = vcmask 60448
          %1753 = vst.msk [vmem:[#allocation3] sm:$0xf] %vm1752, %v1750
          %v1754 = vld [vmem:[%s966] sm:$0xff]
          %v1755 = vld [vmem:[%s958] sm:$0xff]
          %v1756 = vrcp.pop %v1755
          %1758 = vset.pattern.permute.xlu0 0
          %1759 = vperm.xlu0 %1758, %v1756
          %v1760 = vpop.permute.xlu0 %1759
          %v1762 = vmul.f32 %v1754, %v1760
          %v1763 = vpack.c.bf16 %v1762, %v1762
          %v1765 = vunpack.c.l.b16 %v1763
          %v1766 = vpack.c.b16 %v1765, %v1765
          %1767 = vrot.lane.b32.xlu0 %v1766, 8
          %v1768 = vpop.permute.xlu0 %1767
          %vm1770 = vcmask 93248
          %1771 = vst.msk [vmem:[#allocation3] sm:$0xf] %vm1770, %v1768
          %v1772 = vld [vmem:[%s1105] sm:$0xff]
          %v1773 = vld [vmem:[%s1097] sm:$0xff]
          %v1774 = vrcp.pop %v1773
          %1776 = vset.pattern.permute.xlu0 0
          %1777 = vperm.xlu0 %1776, %v1774
          %v1778 = vpop.permute.xlu0 %1777
          %v1780 = vmul.f32 %v1772, %v1778
          %v1781 = vpack.c.bf16 %v1780, %v1780
          %v1783 = vunpack.c.l.b16 %v1781
          %v1784 = vpack.c.b16 %v1783, %v1783
          %1785 = vrot.lane.b32.xlu0 %v1784, 12
          %v1786 = vpop.permute.xlu0 %1785
          %vm1788 = vcmask 126048
          %1789 = vst.msk [vmem:[#allocation3] sm:$0xf] %vm1788, %v1786
          %v1790 = vld [vmem:[%s1244] sm:$0xff]
          %v1791 = vld [vmem:[%s1236] sm:$0xff]
          %v1792 = vrcp.pop %v1791
          %1794 = vset.pattern.permute.xlu0 0
          %1795 = vperm.xlu0 %1794, %v1792
          %v1796 = vpop.permute.xlu0 %1795
          %v1798 = vmul.f32 %v1790, %v1796
          %v1799 = vpack.c.bf16 %v1798, %v1798
          %v1801 = vunpack.c.l.b16 %v1799
          %v1802 = vpack.c.b16 %v1801, %v1801
          %1803 = vrot.lane.b32.xlu0 %v1802, 16
          %v1804 = vpop.permute.xlu0 %1803
          %vm1806 = vcmask 158848
          %1807 = vst.msk [vmem:[#allocation3] sm:$0xf] %vm1806, %v1804
          %v1808 = vld [vmem:[%s1383] sm:$0xff]
          %v1809 = vld [vmem:[%s1375] sm:$0xff]
          %v1810 = vrcp.pop %v1809
          %1812 = vset.pattern.permute.xlu0 0
          %1813 = vperm.xlu0 %1812, %v1810
          %v1814 = vpop.permute.xlu0 %1813
          %v1816 = vmul.f32 %v1808, %v1814
          %v1817 = vpack.c.bf16 %v1816, %v1816
          %v1819 = vunpack.c.l.b16 %v1817
          %v1820 = vpack.c.b16 %v1819, %v1819
          %1821 = vrot.lane.b32.xlu0 %v1820, 20
          %v1822 = vpop.permute.xlu0 %1821
          %vm1824 = vcmask 191648
          %1825 = vst.msk [vmem:[#allocation3] sm:$0xf] %vm1824, %v1822
          %v1826 = vld [vmem:[%s1522] sm:$0xff]
          %v1827 = vld [vmem:[%s1514] sm:$0xff]
          %v1828 = vrcp.pop %v1827
          %1830 = vset.pattern.permute.xlu0 0
          %1831 = vperm.xlu0 %1830, %v1828
          %v1832 = vpop.permute.xlu0 %1831
          %v1834 = vmul.f32 %v1826, %v1832
          %v1835 = vpack.c.bf16 %v1834, %v1834
          %v1837 = vunpack.c.l.b16 %v1835
          %v1838 = vpack.c.b16 %v1837, %v1837
          %1839 = vrot.lane.b32.xlu0 %v1838, 24
          %v1840 = vpop.permute.xlu0 %1839
          %vm1842 = vcmask 224448
          %1843 = vst.msk [vmem:[#allocation3] sm:$0xf] %vm1842, %v1840
          %v1844 = vld [vmem:[%s1661] sm:$0xff]
          %v1845 = vld [vmem:[%s1653] sm:$0xff]
          %v1846 = vrcp.pop %v1845
          %1848 = vset.pattern.permute.xlu0 0
          %1849 = vperm.xlu0 %1848, %v1846
          %v1850 = vpop.permute.xlu0 %1849
          %v1852 = vmul.f32 %v1844, %v1850
          %v1853 = vpack.c.bf16 %v1852, %v1852
          %v1855 = vunpack.c.l.b16 %v1853
          %v1856 = vpack.c.b16 %v1855, %v1855
          %1857 = vrot.lane.b32.xlu0 %v1856, 28
          %v1858 = vpop.permute.xlu0 %1857
          %vm1860 = vcmask 257248
          %1861 = vst.msk [vmem:[#allocation3] sm:$0xf] %vm1860, %v1858
          %v1862 = vld [vmem:[#allocation3] sm:$0xf]
          %v1863 = vld [vmem:[%s5] sm:$0xf]
          %v1864 = vld [vmem:[%s5 + $0x4] sm:$0xf]
          %v1865 = vld [vmem:[%s5 + $0x8] sm:$0xf]
          %v1866 = vld [vmem:[%s5 + $0xc] sm:$0xf]
          %v1867 = vld [vmem:[%s6] sm:$0x1]
          %v1869 = vlaneseq
          %v1870 = vshrl.u32 %v1869, 7
          %v1871 = vsub.s32 0, %v1870
          %v1872 = vrot.slane %v1867, %v1871
          %v1878 = vunpack.c.l.b16 %v1863
          %v1879 = vunpack.c.l.b16 %v1864
          %v1880 = vunpack.c.l.b16 %v1865
          %v1881 = vunpack.c.l.b16 %v1866
          %v1882 = vpack.c.b16 %v1879, %v1878
          %v1883 = vpack.c.b16 %v1881, %v1880
          %v1887 = vsel %vm513, %v1862, 0
          %1889 = vmatprep.subr.bf16.mxu0 0
          %1890 = vmatpush1.bf16.msra.mxu0 %v1882
          %1891 = vmatprep.subr.bf16.mxu0 0
          %1892 = vmatpush1.bf16.msra.mxu0 %v1883
          %1893 = vmatprep.subr.bf16.mxu0 0
          %1894 = vmatpush1.bf16.msra.mxu0 0
          %1895 = vmatprep.subr.bf16.mxu0 0
          %1896 = vmatpush1.bf16.msra.mxu0 0
          %1897 = vmatprep.subr.bf16.mxu0 0
          %1898 = vmatpush1.bf16.msra.mxu0 0
          %1899 = vmatprep.subr.bf16.mxu0 0
          %1900 = vmatpush1.bf16.msra.mxu0 0
          %1901 = vmatprep.subr.bf16.mxu0 0
          %1902 = vmatpush1.bf16.msra.mxu0 0
          %1903 = vmatprep.subr.bf16.mxu0 0
          %1904 = vmatpush1.bf16.msra.mxu0 0
          %1905 = vmatprep.subr.bf16.mxu0 0
          %1906 = vmatpush1.bf16.msra.mxu0 0
          %1907 = vmatprep.subr.bf16.mxu0 0
          %1908 = vmatpush1.bf16.msra.mxu0 0
          %1909 = vmatprep.subr.bf16.mxu0 0
          %1910 = vmatpush1.bf16.msra.mxu0 0
          %1911 = vmatprep.subr.bf16.mxu0 0
          %1912 = vmatpush1.bf16.msra.mxu0 0
          %1913 = vmatprep.subr.bf16.mxu0 0
          %1914 = vmatpush1.bf16.msra.mxu0 0
          %1915 = vmatprep.subr.bf16.mxu0 0
          %1916 = vmatpush1.bf16.msra.mxu0 0
          %1917 = vmatprep.subr.bf16.mxu0 0
          %1918 = vmatpush1.bf16.msra.mxu0 0
          %1919 = vmatprep.subr.bf16.mxu0 0
          %1920 = vmatpush1.bf16.msra.mxu0 0
          %1921 = vmatprep.mubr.bf16.mxu0 0
          %1922 = vmatmul.mubr.bf16.gmra.mrb[0].mxu0 %v1887
          %v1923 = vpop.f32.mrb[0].mxu0
          %v1924 = vadd.f32 %v1872, %v1923
          %v1925 = vpop.f32.mrb[0].mxu0
          %v1926 = vpop.f32.mrb[0].mxu0
          %v1927 = vpop.f32.mrb[0].mxu0
          %1928 = vdwg.mxu0
          %1929 = vst.msk [vmem:[%s400] sm:$0xff] %vm513, %v1924
        $region76: #{tpu_custom_call.1} parent=47 // pred_fallthru
          _
        %s1930 = sand.u32 %s218, 1
        %s1931 = scalar_lea.sflag [#allocation9], %s1930
        %s1932 = sand.u32 %s218, 1
        %s1933 = smul.addr %s1932, 8
        %s1934 = scalar_lea.vmem [#allocation16], %s1933
        // Predicated region
        $region77: #{tpu_custom_call.1} parent=47 // pred_check
          %p1935 = pneg %p228
        $region78: #{tpu_custom_call.1} parent=47 // pred_check_branch
          %1937 = sbr.rel (%p1935) target = $region80
        $region79: #{tpu_custom_call.1} parent=47 // pred_region
          %s1939 = ssub.s32 128, 128
          %1940 = vsyncadd %s1931, %s1939
          %s1941 = sadd.s32 %s34, %s33
          %s1942 = smul.addr %s1941, 128
          %s1943 = scalar_lea.hbm %s7, %s1942
          %s1945 = sshll.u32 %s1934, 4
          %s1946 = int_to_ptr.vmem [resolvable:$true] %s1945
          %1948 = dma.vmem_to_hbm [thread:$0]  %s1946, 128, %s1943, %s1931
        $region80: #{tpu_custom_call.1} parent=47 // pred_fallthru
          _
      $region48: #{tpu_custom_call.1} parent=5 // pred_fallthru
        _
      %p1949 = scmp.le.s32.totalorder 2, %s23
      // Predicated region
      $region81: #{tpu_custom_call.1} parent=5 // pred_check
        %p1950 = pneg %p1949
      $region82: #{tpu_custom_call.1} parent=5 // pred_check_branch
        %1952 = sbr.rel (%p1950) target = $region84
      $region83: #{tpu_custom_call.1} parent=5 // pred_region
        %s1953 = ssub.s32 %s23, 2
        // Predicated region
        $region85: #{tpu_custom_call.1} parent=83 // pred_check
          %p1954 = pneg %p234
        $region86: #{tpu_custom_call.1} parent=83 // pred_check_branch
          %1956 = sbr.rel (%p1954) target = $region88
        $region87: #{tpu_custom_call.1} parent=83 // pred_region
          %s1957 = sand.u32 %s219, 1
          %s1958 = scalar_lea.sflag [#allocation9], %s1957
          %s1959 = sand.u32 %s219, 1
          %s1960 = smul.addr %s1959, 8
          %s1961 = scalar_lea.vmem [#allocation16], %s1960
          %1962 = dma.done %s1958, 128
        $region88: #{tpu_custom_call.1} parent=83 // pred_fallthru
          _
      $region84: #{tpu_custom_call.1} parent=5 // pred_fallthru
        _
    $region6: #{tpu_custom_call.1} parent=1 // loop_footer
      %s27 = sadd.s32 1, %s23
    $region7: #{tpu_custom_call.1} parent=1 // loop_footer_branch
      %22 = sbr.rel target = $region3
    $region8: #{tpu_custom_call.1} parent=1 // loop_exit
      _
    %1963 = vsyncpa [#allocation8], 1
    %s1964 = scalar_lea.sflag [#allocation8], 1
    %1965 = vsyncpa %s1964, 1
    %1966 = vsyncpa [#allocation11], 1
    %s1967 = scalar_lea.sflag [#allocation11], 1
    %1968 = vsyncpa %s1967, 1
    %1969 = vsyncpa [#allocation14], 1
    %1970 = vsyncpa [#allocation9], 1
    %s1971 = scalar_lea.sflag [#allocation9], 1
    %1972 = vsyncpa %s1971, 1

</llo_original>
